<compile_context>
chip_gen: v7x
topology: tpu7x:2x2x1
jax: 0.10.0
libtpu: 0.0.40
codegen_flags: <defaults>
</compile_context>

<pallas_src>
import functools

import jax
import jax.numpy as jnp
from jax.experimental import pallas as pl
from jax.experimental.pallas import tpu as pltpu

NEG_SLOPE = 0.01  # nn.LeakyReLU default


def _mlp_kernel(x_ref, *refs, num_layers, res_layers, merge_layer, n_param_refs, last_op):
    """refs = (per-layer params..., y_out_ref, geo_out_ref).

    Per-layer params are [W, b] for normal layers and [W_y, W_x, b] for residual layers,
    with W stored (C_out, C_in) in bf16 and b stored (C_out, 1) in f32.
    """
    y_out_ref = refs[n_param_refs]
    geo_out_ref = refs[n_param_refs + 1]

    x = x_ref[0]                       # (C0, TILE_N) bf16 -- "input_ft" for residual layers
    y = x
    p = 0
    for l in range(num_layers):
        if l in res_layers:
            w_y = refs[p][...]; p += 1                     # (C_out, C_l)  bf16
            w_x = refs[p][...]; p += 1                     # (C_out, C0)   bf16
            b = refs[p][...]; p += 1                       # (C_out, 1)    f32
            # Split matmul instead of a sublane concat([y, x]); bf16 operands, f32 acc.
            y = (jnp.dot(w_y, y.astype(w_y.dtype), preferred_element_type=jnp.float32)
                 + jnp.dot(w_x, x, preferred_element_type=jnp.float32) + b)
        else:
            w = refs[p][...]; p += 1                       # (C_out, C_in) bf16
            b = refs[p][...]; p += 1                       # (C_out, 1)    f32
            y = jnp.dot(w, y.astype(w.dtype), preferred_element_type=jnp.float32) + b
        if l < num_layers - 1:                             # activation on all but last layer
            y = jnp.maximum(y, NEG_SLOPE * y)              # LeakyReLU(0.01) as mul+max
        if l == merge_layer:                               # post-activation, pre-last_op
            geo_out_ref[0] = y.astype(geo_out_ref.dtype)
    # TODO(synk): if profiling shows the final C_out=1 matmul's vmatmul exposed, swap it for a
    # VPU multiply + sublane (XLU) reduction; gated on bundle dumps, so not done blindly here.
    if last_op is not None:
        y = last_op(y)
    y_out_ref[0] = y.astype(y_out_ref.dtype)


def surface_classifier_forward(features, weights, biases, *, filter_channels,
                               res_layers=(), merge_layer=-1, last_op=None,
                               tile_n=2048, compute_dtype=jnp.bfloat16,
                               geo_dtype=jnp.bfloat16):
    """features: (B, C0, N) float32 (NCW, same as PyTorch Conv1d).

    weights[l]: (C_out_l, C_in_l) (Conv1d weight with the trailing k=1 dim squeezed);
    biases[l]:  (C_out_l, 1).
    Returns (y, feat_geo): y is (B, C_last, N) f32, feat_geo is (B, C_geo, N) geo_dtype.
    """
    num_layers = len(filter_channels) - 1
    # Same fallback rule as the PyTorch module (merge_layer=0 falls back too).
    merge_layer = merge_layer if merge_layer > 0 else len(filter_channels) // 2 - 1
    res_layers = tuple(res_layers)

    B, C0, N = features.shape
    assert C0 == filter_channels[0]

    # No HBM pad/slice passes: ragged last block handled by Mosaic (masked writeback).
    # Shrink the tile if the grid would be too small to feed both v7x TensorCores / pipeline.
    while tile_n > 512 and B * pl.cdiv(N, tile_n) < 4:
        tile_n //= 2
    grid = (B, pl.cdiv(N, tile_n))

    c_geo = filter_channels[merge_layer + 1]
    c_out = filter_channels[-1]

    # Cast once in the wrapper: bf16 activations/weights streamed, f32 MXU accumulation.
    x_in = features.astype(compute_dtype)

    # Per-layer parameters, each passed as a full (untiled) block with a constant index_map
    # (fetched once, resident across the whole grid).  Residual layers have their weight
    # pre-split along the input dim so the kernel never concatenates on sublanes.
    # TODO(synk): pipeline_mode=pl.Buffered(1) on these constant-index params would drop the
    # unused second buffer; left at the default for broad jax-version compatibility.
    param_args, param_specs = [], []
    for l in range(num_layers):
        w = weights[l].astype(compute_dtype)   # (C_out_l, C_in_l)
        b = biases[l].astype(jnp.float32)      # (C_out_l, 1) -- tiny, kept f32 for accuracy
        c_l = filter_channels[l]
        if l in res_layers:
            pieces = (w[:, :c_l], w[:, c_l:], b)
        else:
            pieces = (w, b)
        for arr in pieces:
            param_args.append(arr)
            param_specs.append(pl.BlockSpec(arr.shape, lambda bi, ni: (0, 0)))

    flops = 2 * B * N * sum(
        (filter_channels[l] + (C0 if l in res_layers else 0)) * filter_channels[l + 1]
        for l in range(num_layers))
    bytes_accessed = (x_in.size * x_in.dtype.itemsize
                      + sum(a.size * a.dtype.itemsize for a in param_args)
                      + B * N * (c_out * 4 + c_geo * jnp.dtype(geo_dtype).itemsize))
    cost = pl.CostEstimate(flops=flops, transcendentals=0, bytes_accessed=bytes_accessed)

    # Rough per-step VMEM working set; only override the chip-dependent scoped default when
    # the tile actually needs it (tile_n=2048 uses only a few MiB -> defaults are fine on
    # v5e/v6e/v7x).
    vmem_est = (2 * C0 * tile_n * jnp.dtype(compute_dtype).itemsize
                + 2 * c_out * tile_n * 4
                + 2 * c_geo * tile_n * jnp.dtype(geo_dtype).itemsize
                + 2 * sum(a.size * a.dtype.itemsize for a in param_args)
                + 3 * max(filter_channels) * tile_n * 4)
    cp_kwargs = dict(dimension_semantics=("parallel", "parallel"))
    if vmem_est > 12 * 1024 * 1024:
        cp_kwargs["vmem_limit_bytes"] = int(vmem_est) + (8 << 20)

    kernel = functools.partial(
        _mlp_kernel, num_layers=num_layers, res_layers=res_layers,
        merge_layer=merge_layer, n_param_refs=len(param_args), last_op=last_op)

    y, feat_geo = pl.pallas_call(
        kernel,
        out_shape=(jax.ShapeDtypeStruct((B, c_out, N), jnp.float32),
                   jax.ShapeDtypeStruct((B, c_geo, N), geo_dtype)),
        grid_spec=pltpu.PrefetchScalarGridSpec(
            num_scalar_prefetch=0,
            grid=grid,
            in_specs=[pl.BlockSpec((1, C0, tile_n), lambda bi, ni: (bi, 0, ni))] + param_specs,
            out_specs=[pl.BlockSpec((1, c_out, tile_n), lambda bi, ni: (bi, 0, ni)),
                       pl.BlockSpec((1, c_geo, tile_n), lambda bi, ni: (bi, 0, ni))],
        ),
        compiler_params=pltpu.CompilerParams(**cp_kwargs),
        cost_estimate=cost,
    )(x_in, *param_args)

    return y, feat_geo


def _reference_forward(features, weights, biases, *, filter_channels,
                       res_layers=(), merge_layer=-1, last_op=None):
    """Plain-JAX f32 reference mirroring the PyTorch forward (for correctness check)."""
    num_layers = len(filter_channels) - 1
    merge_layer = merge_layer if merge_layer > 0 else len(filter_channels) // 2 - 1
    y = features
    input_ft = features
    feat_geo = None
    for l in range(num_layers):
        inp = jnp.concatenate([y, input_ft], axis=1) if l in res_layers else y
        # Conv1d k=1: out[b, co, n] = sum_ci W[co, ci] * inp[b, ci, n] + bias[co]
        y = jnp.einsum('bcn,dc->bdn', inp, weights[l],
                       precision=jax.lax.Precision.HIGHEST) + biases[l][None]
        if l < num_layers - 1:
            y = jnp.maximum(y, NEG_SLOPE * y)
        if l == merge_layer:
            feat_geo = y
    if last_op is not None:
        y = last_op(y)
    return y, feat_geo


if __name__ == "__main__":
    # Module config (SurfaceClassifier defaults plus one residual layer for coverage).
    filter_channels = [16, 64, 64, 32, 1]
    res_layers = (2,)
    merge_layer = -1          # -> len(filter_channels)//2 - 1 == 1
    last_op = None            # module default
    merge_resolved = len(filter_channels) // 2 - 1

    B, N = 2, 4000            # N not a multiple of tile_n -> exercises the ragged last block

    key = jax.random.PRNGKey(0)
    k_x, *k_params = jax.random.split(key, 1 + 2 * (len(filter_channels) - 1))

    features = jax.random.normal(k_x, (B, filter_channels[0], N), dtype=jnp.float32)

    weights, biases = [], []
    for l in range(len(filter_channels) - 1):
        c_in = filter_channels[l] + (filter_channels[0] if l in res_layers else 0)
        c_out = filter_channels[l + 1]
        kw, kb = k_params[2 * l], k_params[2 * l + 1]
        # W stored (C_out, C_in) == squeezed Conv1d weight; deterministic init.
        weights.append(0.1 * jax.random.normal(kw, (c_out, c_in), dtype=jnp.float32))
        biases.append(0.1 * jax.random.normal(kb, (c_out, 1), dtype=jnp.float32))

    y_ref, geo_ref = _reference_forward(
        features, weights, biases,
        filter_channels=filter_channels, res_layers=res_layers,
        merge_layer=merge_layer, last_op=last_op)

    def max_rel_err(a, b):
        a = a.astype(jnp.float32)
        b = b.astype(jnp.float32)
        return float(jnp.max(jnp.abs(a - b)) / (jnp.max(jnp.abs(b)) + 1e-8))

    # Two tilings: default 2048 (grid (2,2), ragged 1952-wide tail) and 512 (grid (2,8)).
    for tn in (2048, 512):
        y, feat_geo = surface_classifier_forward(
            features, weights, biases,
            filter_channels=filter_channels, res_layers=res_layers,
            merge_layer=merge_layer, last_op=last_op, tile_n=tn)
        jax.block_until_ready((y, feat_geo))

        assert y.shape == (B, filter_channels[-1], N)
        assert y.dtype == jnp.float32
        assert feat_geo.shape == (B, filter_channels[merge_resolved + 1], N)

        # bf16-streamed activations/weights vs the f32 PyTorch-style reference: expect ~1e-2
        # relative error (f32 accumulation on the MXU).
        assert max_rel_err(y, y_ref) < 5e-2, max_rel_err(y, y_ref)
        assert max_rel_err(feat_geo, geo_ref) < 5e-2, max_rel_err(feat_geo, geo_ref)

    print("KERNEL_OK")
</pallas_src>

<mosaic_0001>
module attributes {stable_mosaic.version = 11 : i64} {
  func.func @_mlp_kernel(%arg0: i32, %arg1: i32, %arg2: memref<1x16x2048xbf16, #tpu.memory_space<vmem>>, %arg3: memref<64x16xbf16, #tpu.memory_space<vmem>>, %arg4: memref<64x1xf32, #tpu.memory_space<vmem>>, %arg5: memref<64x64xbf16, #tpu.memory_space<vmem>>, %arg6: memref<64x1xf32, #tpu.memory_space<vmem>>, %arg7: memref<32x64xbf16, #tpu.memory_space<vmem>>, %arg8: memref<32x16xbf16, #tpu.memory_space<vmem>>, %arg9: memref<32x1xf32, #tpu.memory_space<vmem>>, %arg10: memref<1x32xbf16, #tpu.memory_space<vmem>>, %arg11: memref<1x1xf32, #tpu.memory_space<vmem>>, %arg12: memref<1x1x2048xf32, #tpu.memory_space<vmem>>, %arg13: memref<1x64x2048xbf16, #tpu.memory_space<vmem>>) attributes {dimension_semantics = [#tpu.dimension_semantics<parallel>, #tpu.dimension_semantics<parallel>], iteration_bounds = array<i64: 2, 2>, scalar_prefetch = 0 : i64, scratch_operands = 0 : i64, tpu.core_type = #tpu.core_type<tc>, window_params = [{transform_indices = @transform_0, window_bounds = array<i64: 1, 16, 2048>}, {pipeline_mode = #tpu.pipeline_mode<synchronous>, transform_indices = @transform_1, window_bounds = array<i64: 64, 16>}, {pipeline_mode = #tpu.pipeline_mode<synchronous>, transform_indices = @transform_2, window_bounds = array<i64: 64, 1>}, {pipeline_mode = #tpu.pipeline_mode<synchronous>, transform_indices = @transform_3, window_bounds = array<i64: 64, 64>}, {pipeline_mode = #tpu.pipeline_mode<synchronous>, transform_indices = @transform_4, window_bounds = array<i64: 64, 1>}, {pipeline_mode = #tpu.pipeline_mode<synchronous>, transform_indices = @transform_5, window_bounds = array<i64: 32, 64>}, {pipeline_mode = #tpu.pipeline_mode<synchronous>, transform_indices = @transform_6, window_bounds = array<i64: 32, 16>}, {pipeline_mode = #tpu.pipeline_mode<synchronous>, transform_indices = @transform_7, window_bounds = array<i64: 32, 1>}, {pipeline_mode = #tpu.pipeline_mode<synchronous>, transform_indices = @transform_8, window_bounds = array<i64: 1, 32>}, {pipeline_mode = #tpu.pipeline_mode<synchronous>, transform_indices = @transform_9, window_bounds = array<i64: 1, 1>}, {transform_indices = @transform_10, window_bounds = array<i64: 1, 1, 2048>}, {transform_indices = @transform_11, window_bounds = array<i64: 1, 64, 2048>}]} {
    %c0 = arith.constant 0 : index
    %c0_0 = arith.constant 0 : index
    %c0_1 = arith.constant 0 : index
    %0 = vector.load %arg2[%c0, %c0_0, %c0_1] : memref<1x16x2048xbf16, #tpu.memory_space<vmem>>, vector<1x16x2048xbf16>
    %1 = vector.shape_cast %0 : vector<1x16x2048xbf16> to vector<16x2048xbf16>
    %c0_2 = arith.constant 0 : index
    %c0_3 = arith.constant 0 : index
    %2 = vector.load %arg3[%c0_2, %c0_3] : memref<64x16xbf16, #tpu.memory_space<vmem>>, vector<64x16xbf16>
    %c0_4 = arith.constant 0 : index
    %c0_5 = arith.constant 0 : index
    %3 = vector.load %arg4[%c0_4, %c0_5] : memref<64x1xf32, #tpu.memory_space<vmem>>, vector<64x1xf32>
    %cst = arith.constant dense<0.000000e+00> : vector<64x2048xf32>
    %4 = tpu.matmul %2, %1, %cst {dimension_numbers = #tpu.dot_dimension_numbers<[1], [0], [0], [1], [0, 0, 1, 1], [], []>} : vector<64x16xbf16>, vector<16x2048xbf16>, vector<64x2048xf32> -> vector<64x2048xf32>
    %5 = vector.broadcast %3 : vector<64x1xf32> to vector<64x2048xf32>
    %6 = arith.addf %4, %5 : vector<64x2048xf32>
    %cst_6 = arith.constant 0.00999999977 : f32
    %7 = vector.broadcast %cst_6 : f32 to vector<64x2048xf32>
    %8 = arith.mulf %7, %6 : vector<64x2048xf32>
    %9 = arith.maximumf %6, %8 : vector<64x2048xf32>
    %c0_7 = arith.constant 0 : index
    %c0_8 = arith.constant 0 : index
    %10 = vector.load %arg5[%c0_7, %c0_8] : memref<64x64xbf16, #tpu.memory_space<vmem>>, vector<64x64xbf16>
    %c0_9 = arith.constant 0 : index
    %c0_10 = arith.constant 0 : index
    %11 = vector.load %arg6[%c0_9, %c0_10] : memref<64x1xf32, #tpu.memory_space<vmem>>, vector<64x1xf32>
    %12 = arith.truncf %9 : vector<64x2048xf32> to vector<64x2048xbf16>
    %cst_11 = arith.constant dense<0.000000e+00> : vector<64x2048xf32>
    %13 = tpu.matmul %10, %12, %cst_11 {dimension_numbers = #tpu.dot_dimension_numbers<[1], [0], [0], [1], [0, 0, 1, 1], [], []>} : vector<64x64xbf16>, vector<64x2048xbf16>, vector<64x2048xf32> -> vector<64x2048xf32>
    %14 = vector.broadcast %11 : vector<64x1xf32> to vector<64x2048xf32>
    %15 = arith.addf %13, %14 : vector<64x2048xf32>
    %cst_12 = arith.constant 0.00999999977 : f32
    %16 = vector.broadcast %cst_12 : f32 to vector<64x2048xf32>
    %17 = arith.mulf %16, %15 : vector<64x2048xf32>
    %18 = arith.maximumf %15, %17 : vector<64x2048xf32>
    %19 = arith.truncf %18 : vector<64x2048xf32> to vector<64x2048xbf16>
    %c0_13 = arith.constant 0 : index
    %c0_14 = arith.constant 0 : index
    %c0_15 = arith.constant 0 : index
    %20 = vector.load %arg13[%c0_13, %c0_14, %c0_15] : memref<1x64x2048xbf16, #tpu.memory_space<vmem>>, vector<1x64x2048xbf16>
    %21 = vector.shape_cast %20 : vector<1x64x2048xbf16> to vector<64x2048xbf16>
    %22 = vector.shape_cast %19 : vector<64x2048xbf16> to vector<1x64x2048xbf16>
    tpu.vector_store %arg13[%c0_13, %c0_14, %c0_15], %22 {strides = array<i32>} : memref<1x64x2048xbf16, #tpu.memory_space<vmem>>, vector<1x64x2048xbf16>,
    %c0_16 = arith.constant 0 : index
    %c0_17 = arith.constant 0 : index
    %23 = vector.load %arg7[%c0_16, %c0_17] : memref<32x64xbf16, #tpu.memory_space<vmem>>, vector<32x64xbf16>
    %c0_18 = arith.constant 0 : index
    %c0_19 = arith.constant 0 : index
    %24 = vector.load %arg8[%c0_18, %c0_19] : memref<32x16xbf16, #tpu.memory_space<vmem>>, vector<32x16xbf16>
    %c0_20 = arith.constant 0 : index
    %c0_21 = arith.constant 0 : index
    %25 = vector.load %arg9[%c0_20, %c0_21] : memref<32x1xf32, #tpu.memory_space<vmem>>, vector<32x1xf32>
    %26 = arith.truncf %18 : vector<64x2048xf32> to vector<64x2048xbf16>
    %cst_22 = arith.constant dense<0.000000e+00> : vector<32x2048xf32>
    %27 = tpu.matmul %23, %26, %cst_22 {dimension_numbers = #tpu.dot_dimension_numbers<[1], [0], [0], [1], [0, 0, 1, 1], [], []>} : vector<32x64xbf16>, vector<64x2048xbf16>, vector<32x2048xf32> -> vector<32x2048xf32>
    %cst_23 = arith.constant dense<0.000000e+00> : vector<32x2048xf32>
    %28 = tpu.matmul %24, %1, %cst_23 {dimension_numbers = #tpu.dot_dimension_numbers<[1], [0], [0], [1], [0, 0, 1, 1], [], []>} : vector<32x16xbf16>, vector<16x2048xbf16>, vector<32x2048xf32> -> vector<32x2048xf32>
    %29 = arith.addf %27, %28 : vector<32x2048xf32>
    %30 = vector.broadcast %25 : vector<32x1xf32> to vector<32x2048xf32>
    %31 = arith.addf %29, %30 : vector<32x2048xf32>
    %cst_24 = arith.constant 0.00999999977 : f32
    %32 = vector.broadcast %cst_24 : f32 to vector<32x2048xf32>
    %33 = arith.mulf %32, %31 : vector<32x2048xf32>
    %34 = arith.maximumf %31, %33 : vector<32x2048xf32>
    %c0_25 = arith.constant 0 : index
    %c0_26 = arith.constant 0 : index
    %35 = vector.load %arg10[%c0_25, %c0_26] : memref<1x32xbf16, #tpu.memory_space<vmem>>, vector<1x32xbf16>
    %c0_27 = arith.constant 0 : index
    %c0_28 = arith.constant 0 : index
    %36 = vector.load %arg11[%c0_27, %c0_28] : memref<1x1xf32, #tpu.memory_space<vmem>>, vector<1x1xf32>
    %37 = arith.truncf %34 : vector<32x2048xf32> to vector<32x2048xbf16>
    %cst_29 = arith.constant dense<0.000000e+00> : vector<1x2048xf32>
    %38 = tpu.matmul %35, %37, %cst_29 {dimension_numbers = #tpu.dot_dimension_numbers<[1], [0], [0], [1], [0, 0, 1, 1], [], []>} : vector<1x32xbf16>, vector<32x2048xbf16>, vector<1x2048xf32> -> vector<1x2048xf32>
    %39 = vector.broadcast %36 : vector<1x1xf32> to vector<1x2048xf32>
    %40 = arith.addf %38, %39 : vector<1x2048xf32>
    %c0_30 = arith.constant 0 : index
    %c0_31 = arith.constant 0 : index
    %c0_32 = arith.constant 0 : index
    %41 = vector.load %arg12[%c0_30, %c0_31, %c0_32] : memref<1x1x2048xf32, #tpu.memory_space<vmem>>, vector<1x1x2048xf32>
    %42 = vector.shape_cast %41 : vector<1x1x2048xf32> to vector<1x2048xf32>
    %43 = vector.shape_cast %40 : vector<1x2048xf32> to vector<1x1x2048xf32>
    tpu.vector_store %arg12[%c0_30, %c0_31, %c0_32], %43 {strides = array<i32>} : memref<1x1x2048xf32, #tpu.memory_space<vmem>>, vector<1x1x2048xf32>,
    return
  }
  func.func @transform_0(%arg0: i32, %arg1: i32) -> (i32, i32, i32) {
    %c0_i32 = arith.constant 0 : i32
    %c0_i32_0 = arith.constant 0 : i32
    return %arg0, %c0_i32, %arg1 : i32, i32, i32
  }
  func.func @transform_1(%arg0: i32, %arg1: i32) -> (i32, i32) {
    %c0_i32 = arith.constant 0 : i32
    %c0_i32_0 = arith.constant 0 : i32
    %c0_i32_1 = arith.constant 0 : i32
    return %c0_i32, %c0_i32_0 : i32, i32
  }
  func.func @transform_2(%arg0: i32, %arg1: i32) -> (i32, i32) {
    %c0_i32 = arith.constant 0 : i32
    %c0_i32_0 = arith.constant 0 : i32
    %c0_i32_1 = arith.constant 0 : i32
    return %c0_i32, %c0_i32_0 : i32, i32
  }
  func.func @transform_3(%arg0: i32, %arg1: i32) -> (i32, i32) {
    %c0_i32 = arith.constant 0 : i32
    %c0_i32_0 = arith.constant 0 : i32
    %c0_i32_1 = arith.constant 0 : i32
    return %c0_i32, %c0_i32_0 : i32, i32
  }
  func.func @transform_4(%arg0: i32, %arg1: i32) -> (i32, i32) {
    %c0_i32 = arith.constant 0 : i32
    %c0_i32_0 = arith.constant 0 : i32
    %c0_i32_1 = arith.constant 0 : i32
    return %c0_i32, %c0_i32_0 : i32, i32
  }
  func.func @transform_5(%arg0: i32, %arg1: i32) -> (i32, i32) {
    %c0_i32 = arith.constant 0 : i32
    %c0_i32_0 = arith.constant 0 : i32
    %c0_i32_1 = arith.constant 0 : i32
    return %c0_i32, %c0_i32_0 : i32, i32
  }
  func.func @transform_6(%arg0: i32, %arg1: i32) -> (i32, i32) {
    %c0_i32 = arith.constant 0 : i32
    %c0_i32_0 = arith.constant 0 : i32
    %c0_i32_1 = arith.constant 0 : i32
    return %c0_i32, %c0_i32_0 : i32, i32
  }
  func.func @transform_7(%arg0: i32, %arg1: i32) -> (i32, i32) {
    %c0_i32 = arith.constant 0 : i32
    %c0_i32_0 = arith.constant 0 : i32
    %c0_i32_1 = arith.constant 0 : i32
    return %c0_i32, %c0_i32_0 : i32, i32
  }
  func.func @transform_8(%arg0: i32, %arg1: i32) -> (i32, i32) {
    %c0_i32 = arith.constant 0 : i32
    %c0_i32_0 = arith.constant 0 : i32
    %c0_i32_1 = arith.constant 0 : i32
    return %c0_i32, %c0_i32_0 : i32, i32
  }
  func.func @transform_9(%arg0: i32, %arg1: i32) -> (i32, i32) {
    %c0_i32 = arith.constant 0 : i32
    %c0_i32_0 = arith.constant 0 : i32
    %c0_i32_1 = arith.constant 0 : i32
    return %c0_i32, %c0_i32_0 : i32, i32
  }
  func.func @transform_10(%arg0: i32, %arg1: i32) -> (i32, i32, i32) {
    %c0_i32 = arith.constant 0 : i32
    %c0_i32_0 = arith.constant 0 : i32
    return %arg0, %c0_i32, %arg1 : i32, i32, i32
  }
  func.func @transform_11(%arg0: i32, %arg1: i32) -> (i32, i32, i32) {
    %c0_i32 = arith.constant 0 : i32
    %c0_i32_0 = arith.constant 0 : i32
    return %arg0, %c0_i32, %arg1 : i32, i32, i32
  }
}

</mosaic_0001>

<llo_original>
// kernel: tpu_custom_call.1
$region0: #{tpu_custom_call.1}
  #allocation0 [shape = 'u32[]', space=smem, size = 0x4, offset = 0x4, fixed_abs, tag = 'smem constant byte address 0x4 - core index']
  #allocation1 [shape = 'u32[144,128]{1,0:T(1,128)}', space=vmem, size = 0x12000, scoped, tag = 'internal scratch']
  #allocation2 [shape = 'f32[1,1]{1,0:T(1,128)S(1)}', space=vmem, size = 0x200, scoped, tag = 'scoped memory for tpu_custom_call.1']
  %s0 = inlined_call_operand.hbm [shape: bf16[2,16,4000], index: 0, kind: input, shape index: {}]
  %s1 = inlined_call_operand.vmem [shape: bf16[64,16], index: 1, kind: input, shape index: {}]
  %s2 = inlined_call_operand.vmem [shape: f32[64,1], index: 2, kind: input, shape index: {}]
  %s3 = inlined_call_operand.vmem [shape: bf16[64,64], index: 3, kind: input, shape index: {}]
  %s4 = inlined_call_operand.vmem [shape: f32[64,1], index: 4, kind: input, shape index: {}]
  %s5 = inlined_call_operand.vmem [shape: bf16[32,64], index: 5, kind: input, shape index: {}]
  %s6 = inlined_call_operand.vmem [shape: bf16[32,16], index: 6, kind: input, shape index: {}]
  %s7 = inlined_call_operand.vmem [shape: f32[32,1], index: 7, kind: input, shape index: {}]
  %s8 = inlined_call_operand.vmem [shape: bf16[1,32], index: 8, kind: input, shape index: {}]
  %s9 = inlined_call_operand.<no memory space> [shape: f32[1,1], index: 9, kind: input, shape index: {}]
  %s10 = inlined_call_operand.hbm [shape: f32[2,1,4000], index: 10, kind: output, shape index: {0}]
  %s11 = inlined_call_operand.hbm [shape: bf16[2,64,4000], index: 11, kind: output, shape index: {1}]
  %12 = xla_tuple %s10, %s11
  %s13 = sld [smem:[#allocation0]]
  $region85: #{tpu_custom_call.1} parent=0
    _
  %s15 = ssub.s32 1, %s13
  %s16 = scalar_select 0, %s15, %s13
  %v17 = vstv %s9
  %18 = vst [vmem:[#allocation2] sm:$0x1] %v17
  $region1: #{tpu_custom_call.1} parent=0
    #allocation3 [shape = 'u8[131072]{0}', space=vmem, size = 0x20000, scoped, tag = 'input window, operand 0']
    #allocation4 [shape = 's32[2]{0}', space=sflag, size = 0x8, scoped, tag = 'scoped memory for tpu_custom_call.1']
    #allocation5 [shape = 's32[2]{0}', space=sflag, size = 0x8, scoped, tag = 'scoped memory for tpu_custom_call.1']
    #allocation6 [shape = 'u8[16384]{0}', space=vmem, size = 0x4000, scoped, tag = 'output window, operand 0']
    #allocation7 [shape = 'u8[524288]{0}', space=vmem, size = 0x80000, scoped, tag = 'output window, operand 1']
    #allocation8 [shape = 's32[2]{0}', space=sflag, size = 0x8, scoped, tag = 'scoped memory for tpu_custom_call.1']
    %19 = vsyncpa [#allocation4], 0
    %s20 = scalar_lea.sflag [#allocation4], 1
    %21 = vsyncpa %s20, 0
    %22 = vsyncpa [#allocation5], 0
    %s23 = scalar_lea.sflag [#allocation5], 1
    %24 = vsyncpa %s23, 0
    %25 = vsyncpa [#allocation8], 0
    %s26 = scalar_lea.sflag [#allocation8], 1
    %27 = vsyncpa %s26, 0
    loop: start=0, step=1, limit=6
    $region2: #{tpu_custom_call.1} parent=1 // loop_pre_header
      _
    $region3: #{tpu_custom_call.1} parent=1 // loop_header
      %s29 = sphi 0, %s33
      %p30 = scmp.ge.s32.totalorder %s29, 6
      %s36 = sphi 0, %s48
      %s37 = sphi 0, %s44
      %s38 = sphi 0, %s36
      %s39 = sphi 0, %s37
      %s40 = sphi 0, %s38
      %s41 = sphi 0, %s39
      %s53 = sphi 0, %s55
      %s56 = sphi 0, %s53
      %s57 = sphi 0, %s56
      %s73 = sphi 0, %s57
      %s77 = sphi 0, %s77
      %s79 = sphi 0, %s77
      %s80 = sphi 0, %s79
      %s94 = sphi 0, %s80
      %s98 = sphi 0, %s98
      %s100 = sphi 0, %s98
      %s101 = sphi 0, %s100
      %s115 = sphi 0, %s101
      %s119 = sphi 0, %s119
      %s121 = sphi 0, %s119
      %s122 = sphi 0, %s121
      %s136 = sphi 0, %s122
      %s140 = sphi 0, %s140
      %s142 = sphi 0, %s140
      %s143 = sphi 0, %s142
      %s157 = sphi 0, %s143
      %s161 = sphi 0, %s161
      %s163 = sphi 0, %s161
      %s164 = sphi 0, %s163
      %s178 = sphi 0, %s164
      %s182 = sphi 0, %s182
      %s184 = sphi 0, %s182
      %s185 = sphi 0, %s184
      %s199 = sphi 0, %s185
      %s203 = sphi 0, %s203
      %s205 = sphi 0, %s203
      %s206 = sphi 0, %s205
      %s220 = sphi 0, %s206
      %s224 = sphi 0, %s224
      %s226 = sphi 0, %s224
      %s227 = sphi 0, %s226
      %s241 = sphi 0, %s227
      %s245 = sphi 0, %s245
      %s247 = sphi 0, %s245
      %s248 = sphi 0, %s247
      %s262 = sphi 0, %s248
      %s270 = sphi 0, %s272
      %s273 = sphi 0, %s270
      %s274 = sphi 0, %s273
      %s290 = sphi 0, %s274
      %s298 = sphi 0, %s300
      %s301 = sphi 0, %s298
      %s302 = sphi 0, %s301
      %s318 = sphi 0, %s302
    $region4: #{tpu_custom_call.1} parent=1 // loop_header_branch
      %32 = sbr.rel (%p30) target = $region8
    $region5: #{tpu_custom_call.1} parent=1 // loop_body
      %s34 = ssub.s32 %s29, 1
      %s35 = ssub.s32 %s29, 2
      %s42 = sadd.s32 1, %s37
      %p43 = scmp.ge.s32.totalorder %s42, 2
      %s44 = scalar_select %p43, 0, %s42
      %s45 = sadd.s32 1, %s36
      %s46 = scalar_select %p43, %s45, %s36
      %p47 = scmp.ge.s32.totalorder %s46, 2
      %s48 = scalar_select %p47, 0, %s46
      %s49 = ssub.s32 %s36, %s48
      %s50 = ssub.s32 %s37, %s44
      %s51 = sor.u32 %s49, %s50
      %p52 = scmp.eq.s32.totalorder %s51, 0
      %s54 = sadd.s32 %s53, 1
      %s55 = scalar_select %p52, %s53, %s54
      %p58 = pneg %p52
      %p59 = scmp.eq.s32.totalorder %s29, 3
      %p60 = por %p58, %p59
      %p61 = scmp.ne.s32.totalorder %s53, %s56
      %p62 = scmp.eq.s32.totalorder %s29, 0
      %p63 = por %p61, %p62
      %p64 = scmp.ne.s32.totalorder %s53, %s56
      %p65 = scmp.eq.s32.totalorder %s34, 3
      %p66 = por %p64, %p65
      %p67 = scmp.ne.s32.totalorder %s56, %s57
      %p68 = scmp.eq.s32.totalorder %s34, 0
      %p69 = por %p67, %p68
      %p70 = scmp.ne.s32.totalorder %s56, %s57
      %p71 = scmp.eq.s32.totalorder %s35, 3
      %p72 = por %p70, %p71
      %p74 = scmp.ne.s32.totalorder %s57, %s73
      %p75 = scmp.eq.s32.totalorder %s35, 0
      %p76 = por %p74, %p75
      %s78 = sadd.s32 %s77, 1
      %p81 = scmp.eq.s32.totalorder %s29, 3
      %p82 = scmp.ne.s32.totalorder %s77, %s79
      %p83 = scmp.eq.s32.totalorder %s29, 0
      %p84 = por %p82, %p83
      %p85 = scmp.ne.s32.totalorder %s77, %s79
      %p86 = scmp.eq.s32.totalorder %s34, 3
      %p87 = por %p85, %p86
      %p88 = scmp.ne.s32.totalorder %s79, %s80
      %p89 = scmp.eq.s32.totalorder %s34, 0
      %p90 = por %p88, %p89
      %p91 = scmp.ne.s32.totalorder %s79, %s80
      %p92 = scmp.eq.s32.totalorder %s35, 3
      %p93 = por %p91, %p92
      %p95 = scmp.ne.s32.totalorder %s80, %s94
      %p96 = scmp.eq.s32.totalorder %s35, 0
      %p97 = por %p95, %p96
      %s99 = sadd.s32 %s98, 1
      %p102 = scmp.eq.s32.totalorder %s29, 3
      %p103 = scmp.ne.s32.totalorder %s98, %s100
      %p104 = scmp.eq.s32.totalorder %s29, 0
      %p105 = por %p103, %p104
      %p106 = scmp.ne.s32.totalorder %s98, %s100
      %p107 = scmp.eq.s32.totalorder %s34, 3
      %p108 = por %p106, %p107
      %p109 = scmp.ne.s32.totalorder %s100, %s101
      %p110 = scmp.eq.s32.totalorder %s34, 0
      %p111 = por %p109, %p110
      %p112 = scmp.ne.s32.totalorder %s100, %s101
      %p113 = scmp.eq.s32.totalorder %s35, 3
      %p114 = por %p112, %p113
      %p116 = scmp.ne.s32.totalorder %s101, %s115
      %p117 = scmp.eq.s32.totalorder %s35, 0
      %p118 = por %p116, %p117
      %s120 = sadd.s32 %s119, 1
      %p123 = scmp.eq.s32.totalorder %s29, 3
      %p124 = scmp.ne.s32.totalorder %s119, %s121
      %p125 = scmp.eq.s32.totalorder %s29, 0
      %p126 = por %p124, %p125
      %p127 = scmp.ne.s32.totalorder %s119, %s121
      %p128 = scmp.eq.s32.totalorder %s34, 3
      %p129 = por %p127, %p128
      %p130 = scmp.ne.s32.totalorder %s121, %s122
      %p131 = scmp.eq.s32.totalorder %s34, 0
      %p132 = por %p130, %p131
      %p133 = scmp.ne.s32.totalorder %s121, %s122
      %p134 = scmp.eq.s32.totalorder %s35, 3
      %p135 = por %p133, %p134
      %p137 = scmp.ne.s32.totalorder %s122, %s136
      %p138 = scmp.eq.s32.totalorder %s35, 0
      %p139 = por %p137, %p138
      %s141 = sadd.s32 %s140, 1
      %p144 = scmp.eq.s32.totalorder %s29, 3
      %p145 = scmp.ne.s32.totalorder %s140, %s142
      %p146 = scmp.eq.s32.totalorder %s29, 0
      %p147 = por %p145, %p146
      %p148 = scmp.ne.s32.totalorder %s140, %s142
      %p149 = scmp.eq.s32.totalorder %s34, 3
      %p150 = por %p148, %p149
      %p151 = scmp.ne.s32.totalorder %s142, %s143
      %p152 = scmp.eq.s32.totalorder %s34, 0
      %p153 = por %p151, %p152
      %p154 = scmp.ne.s32.totalorder %s142, %s143
      %p155 = scmp.eq.s32.totalorder %s35, 3
      %p156 = por %p154, %p155
      %p158 = scmp.ne.s32.totalorder %s143, %s157
      %p159 = scmp.eq.s32.totalorder %s35, 0
      %p160 = por %p158, %p159
      %s162 = sadd.s32 %s161, 1
      %p165 = scmp.eq.s32.totalorder %s29, 3
      %p166 = scmp.ne.s32.totalorder %s161, %s163
      %p167 = scmp.eq.s32.totalorder %s29, 0
      %p168 = por %p166, %p167
      %p169 = scmp.ne.s32.totalorder %s161, %s163
      %p170 = scmp.eq.s32.totalorder %s34, 3
      %p171 = por %p169, %p170
      %p172 = scmp.ne.s32.totalorder %s163, %s164
      %p173 = scmp.eq.s32.totalorder %s34, 0
      %p174 = por %p172, %p173
      %p175 = scmp.ne.s32.totalorder %s163, %s164
      %p176 = scmp.eq.s32.totalorder %s35, 3
      %p177 = por %p175, %p176
      %p179 = scmp.ne.s32.totalorder %s164, %s178
      %p180 = scmp.eq.s32.totalorder %s35, 0
      %p181 = por %p179, %p180
      %s183 = sadd.s32 %s182, 1
      %p186 = scmp.eq.s32.totalorder %s29, 3
      %p187 = scmp.ne.s32.totalorder %s182, %s184
      %p188 = scmp.eq.s32.totalorder %s29, 0
      %p189 = por %p187, %p188
      %p190 = scmp.ne.s32.totalorder %s182, %s184
      %p191 = scmp.eq.s32.totalorder %s34, 3
      %p192 = por %p190, %p191
      %p193 = scmp.ne.s32.totalorder %s184, %s185
      %p194 = scmp.eq.s32.totalorder %s34, 0
      %p195 = por %p193, %p194
      %p196 = scmp.ne.s32.totalorder %s184, %s185
      %p197 = scmp.eq.s32.totalorder %s35, 3
      %p198 = por %p196, %p197
      %p200 = scmp.ne.s32.totalorder %s185, %s199
      %p201 = scmp.eq.s32.totalorder %s35, 0
      %p202 = por %p200, %p201
      %s204 = sadd.s32 %s203, 1
      %p207 = scmp.eq.s32.totalorder %s29, 3
      %p208 = scmp.ne.s32.totalorder %s203, %s205
      %p209 = scmp.eq.s32.totalorder %s29, 0
      %p210 = por %p208, %p209
      %p211 = scmp.ne.s32.totalorder %s203, %s205
      %p212 = scmp.eq.s32.totalorder %s34, 3
      %p213 = por %p211, %p212
      %p214 = scmp.ne.s32.totalorder %s205, %s206
      %p215 = scmp.eq.s32.totalorder %s34, 0
      %p216 = por %p214, %p215
      %p217 = scmp.ne.s32.totalorder %s205, %s206
      %p218 = scmp.eq.s32.totalorder %s35, 3
      %p219 = por %p217, %p218
      %p221 = scmp.ne.s32.totalorder %s206, %s220
      %p222 = scmp.eq.s32.totalorder %s35, 0
      %p223 = por %p221, %p222
      %s225 = sadd.s32 %s224, 1
      %p228 = scmp.eq.s32.totalorder %s29, 3
      %p229 = scmp.ne.s32.totalorder %s224, %s226
      %p230 = scmp.eq.s32.totalorder %s29, 0
      %p231 = por %p229, %p230
      %p232 = scmp.ne.s32.totalorder %s224, %s226
      %p233 = scmp.eq.s32.totalorder %s34, 3
      %p234 = por %p232, %p233
      %p235 = scmp.ne.s32.totalorder %s226, %s227
      %p236 = scmp.eq.s32.totalorder %s34, 0
      %p237 = por %p235, %p236
      %p238 = scmp.ne.s32.totalorder %s226, %s227
      %p239 = scmp.eq.s32.totalorder %s35, 3
      %p240 = por %p238, %p239
      %p242 = scmp.ne.s32.totalorder %s227, %s241
      %p243 = scmp.eq.s32.totalorder %s35, 0
      %p244 = por %p242, %p243
      %s246 = sadd.s32 %s245, 1
      %p249 = scmp.eq.s32.totalorder %s29, 3
      %p250 = scmp.ne.s32.totalorder %s245, %s247
      %p251 = scmp.eq.s32.totalorder %s29, 0
      %p252 = por %p250, %p251
      %p253 = scmp.ne.s32.totalorder %s245, %s247
      %p254 = scmp.eq.s32.totalorder %s34, 3
      %p255 = por %p253, %p254
      %p256 = scmp.ne.s32.totalorder %s247, %s248
      %p257 = scmp.eq.s32.totalorder %s34, 0
      %p258 = por %p256, %p257
      %p259 = scmp.ne.s32.totalorder %s247, %s248
      %p260 = scmp.eq.s32.totalorder %s35, 3
      %p261 = por %p259, %p260
      %p263 = scmp.ne.s32.totalorder %s248, %s262
      %p264 = scmp.eq.s32.totalorder %s35, 0
      %p265 = por %p263, %p264
      %s266 = ssub.s32 %s36, %s48
      %s267 = ssub.s32 %s37, %s44
      %s268 = sor.u32 %s266, %s267
      %p269 = scmp.eq.s32.totalorder %s268, 0
      %s271 = sadd.s32 %s270, 1
      %s272 = scalar_select %p269, %s270, %s271
      %p275 = pneg %p269
      %p276 = scmp.eq.s32.totalorder %s29, 3
      %p277 = por %p275, %p276
      %p278 = scmp.ne.s32.totalorder %s270, %s273
      %p279 = scmp.eq.s32.totalorder %s29, 0
      %p280 = por %p278, %p279
      %p281 = scmp.ne.s32.totalorder %s270, %s273
      %p282 = scmp.eq.s32.totalorder %s34, 3
      %p283 = por %p281, %p282
      %p284 = scmp.ne.s32.totalorder %s273, %s274
      %p285 = scmp.eq.s32.totalorder %s34, 0
      %p286 = por %p284, %p285
      %p287 = scmp.ne.s32.totalorder %s273, %s274
      %p288 = scmp.eq.s32.totalorder %s35, 3
      %p289 = por %p287, %p288
      %p291 = scmp.ne.s32.totalorder %s274, %s290
      %p292 = scmp.eq.s32.totalorder %s35, 0
      %p293 = por %p291, %p292
      %s294 = ssub.s32 %s36, %s48
      %s295 = ssub.s32 %s37, %s44
      %s296 = sor.u32 %s294, %s295
      %p297 = scmp.eq.s32.totalorder %s296, 0
      %s299 = sadd.s32 %s298, 1
      %s300 = scalar_select %p297, %s298, %s299
      %p303 = pneg %p297
      %p304 = scmp.eq.s32.totalorder %s29, 3
      %p305 = por %p303, %p304
      %p306 = scmp.ne.s32.totalorder %s298, %s301
      %p307 = scmp.eq.s32.totalorder %s29, 0
      %p308 = por %p306, %p307
      %p309 = scmp.ne.s32.totalorder %s298, %s301
      %p310 = scmp.eq.s32.totalorder %s34, 3
      %p311 = por %p309, %p310
      %p312 = scmp.ne.s32.totalorder %s301, %s302
      %p313 = scmp.eq.s32.totalorder %s34, 0
      %p314 = por %p312, %p313
      %p315 = scmp.ne.s32.totalorder %s301, %s302
      %p316 = scmp.eq.s32.totalorder %s35, 3
      %p317 = por %p315, %p316
      %p319 = scmp.ne.s32.totalorder %s302, %s318
      %p320 = scmp.eq.s32.totalorder %s35, 0
      %p321 = por %p319, %p320
      %p322 = scmp.le.s32.totalorder 1, %s29
      %p323 = scmp.lt.s32.totalorder %s29, 5
      %p324 = pnand %p322, %p323
      %p325 = pneg %p324
      // Predicated region
      $region9: #{tpu_custom_call.1} parent=5 // pred_check
        _
      $region10: #{tpu_custom_call.1} parent=5 // pred_check_branch
        %327 = sbr.rel (%p324) target = $region12
      $region11: #{tpu_custom_call.1} parent=5 // pred_region
        %s328 = ssub.s32 %s29, 1
        // Predicated region
        $region13: #{tpu_custom_call.1} parent=11 // pred_check
          %p329 = pneg %p90
        $region14: #{tpu_custom_call.1} parent=11 // pred_check_branch
          %331 = sbr.rel (%p329) target = $region16
        $region15: #{tpu_custom_call.1} parent=11 // pred_region
          _
        $region16: #{tpu_custom_call.1} parent=11 // pred_fallthru
          _
        // Predicated region
        $region17: #{tpu_custom_call.1} parent=11 // pred_check
          %p332 = pneg %p111
        $region18: #{tpu_custom_call.1} parent=11 // pred_check_branch
          %334 = sbr.rel (%p332) target = $region20
        $region19: #{tpu_custom_call.1} parent=11 // pred_region
          _
        $region20: #{tpu_custom_call.1} parent=11 // pred_fallthru
          _
        // Predicated region
        $region21: #{tpu_custom_call.1} parent=11 // pred_check
          %p335 = pneg %p132
        $region22: #{tpu_custom_call.1} parent=11 // pred_check_branch
          %337 = sbr.rel (%p335) target = $region24
        $region23: #{tpu_custom_call.1} parent=11 // pred_region
          _
        $region24: #{tpu_custom_call.1} parent=11 // pred_fallthru
          _
        // Predicated region
        $region25: #{tpu_custom_call.1} parent=11 // pred_check
          %p338 = pneg %p153
        $region26: #{tpu_custom_call.1} parent=11 // pred_check_branch
          %340 = sbr.rel (%p338) target = $region28
        $region27: #{tpu_custom_call.1} parent=11 // pred_region
          _
        $region28: #{tpu_custom_call.1} parent=11 // pred_fallthru
          _
        // Predicated region
        $region29: #{tpu_custom_call.1} parent=11 // pred_check
          %p341 = pneg %p174
        $region30: #{tpu_custom_call.1} parent=11 // pred_check_branch
          %343 = sbr.rel (%p341) target = $region32
        $region31: #{tpu_custom_call.1} parent=11 // pred_region
          _
        $region32: #{tpu_custom_call.1} parent=11 // pred_fallthru
          _
        // Predicated region
        $region33: #{tpu_custom_call.1} parent=11 // pred_check
          %p344 = pneg %p195
        $region34: #{tpu_custom_call.1} parent=11 // pred_check_branch
          %346 = sbr.rel (%p344) target = $region36
        $region35: #{tpu_custom_call.1} parent=11 // pred_region
          _
        $region36: #{tpu_custom_call.1} parent=11 // pred_fallthru
          _
        // Predicated region
        $region37: #{tpu_custom_call.1} parent=11 // pred_check
          %p347 = pneg %p216
        $region38: #{tpu_custom_call.1} parent=11 // pred_check_branch
          %349 = sbr.rel (%p347) target = $region40
        $region39: #{tpu_custom_call.1} parent=11 // pred_region
          _
        $region40: #{tpu_custom_call.1} parent=11 // pred_fallthru
          _
        // Predicated region
        $region41: #{tpu_custom_call.1} parent=11 // pred_check
          %p350 = pneg %p237
        $region42: #{tpu_custom_call.1} parent=11 // pred_check_branch
          %352 = sbr.rel (%p350) target = $region44
        $region43: #{tpu_custom_call.1} parent=11 // pred_region
          _
        $region44: #{tpu_custom_call.1} parent=11 // pred_fallthru
          _
        // Predicated region
        $region45: #{tpu_custom_call.1} parent=11 // pred_check
          %p353 = pneg %p258
        $region46: #{tpu_custom_call.1} parent=11 // pred_check_branch
          %355 = sbr.rel (%p353) target = $region48
        $region47: #{tpu_custom_call.1} parent=11 // pred_region
          _
        $region48: #{tpu_custom_call.1} parent=11 // pred_fallthru
          _
      $region12: #{tpu_custom_call.1} parent=5 // pred_fallthru
        _
      %p356 = scmp.lt.s32.totalorder %s29, 4
      // Predicated region
      $region49: #{tpu_custom_call.1} parent=5 // pred_check
        %p357 = pneg %p356
      $region50: #{tpu_custom_call.1} parent=5 // pred_check_branch
        %359 = sbr.rel (%p357) target = $region52
      $region51: #{tpu_custom_call.1} parent=5 // pred_region
        // Predicated region
        $region53: #{tpu_custom_call.1} parent=51 // pred_check
          %p360 = pneg %p63
        $region54: #{tpu_custom_call.1} parent=51 // pred_check_branch
          %362 = sbr.rel (%p360) target = $region56
        $region55: #{tpu_custom_call.1} parent=51 // pred_region
          %s363 = sand.u32 %s53, 1
          %s364 = scalar_lea.sflag [#allocation4], %s363
          %s365 = sand.u32 %s53, 1
          %s366 = smul.addr %s365, 128
          %s367 = scalar_lea.vmem [#allocation3], %s366
          %s368 = smul.u32 16, %s37
          %s370 = ssub.s32 2048, 2048
          %371 = vsyncadd %s364, %s370
          %s372 = smul.addr %s36, 64
          %s373 = sadd.s32 %s368, %s372
          %s374 = smul.addr %s373, 64
          %s375 = scalar_lea.hbm %s0, %s374
          %s376 = sshll.u32 %s367, 4
          %s377 = int_to_ptr.vmem [resolvable:$true] %s376
          %382 = dma.hbm_to_vmem [thread:$0]  %s375, 2048, %s377, %s364, 2048, 1024, 64
        $region56: #{tpu_custom_call.1} parent=51 // pred_fallthru
          _
      $region52: #{tpu_custom_call.1} parent=5 // pred_fallthru
        _
      %p383 = scmp.le.s32.totalorder 1, %s29
      %p384 = scmp.lt.s32.totalorder %s29, 5
      %p385 = pnand %p383, %p384
      %p386 = pneg %p385
      // Predicated region
      $region57: #{tpu_custom_call.1} parent=5 // pred_check
        _
      $region58: #{tpu_custom_call.1} parent=5 // pred_check_branch
        %388 = sbr.rel (%p385) target = $region60
      $region59: #{tpu_custom_call.1} parent=5 // pred_region
        %s389 = ssub.s32 %s29, 1
        %s390 = sand.u32 %s56, 1
        %s391 = scalar_lea.sflag [#allocation4], %s390
        %s392 = sand.u32 %s56, 1
        %s393 = smul.addr %s392, 128
        %s394 = scalar_lea.vmem [#allocation3], %s393
        // Predicated region
        $region61: #{tpu_custom_call.1} parent=59 // pred_check
          %p395 = pneg %p69
        $region62: #{tpu_custom_call.1} parent=59 // pred_check_branch
          %397 = sbr.rel (%p395) target = $region64
        $region63: #{tpu_custom_call.1} parent=59 // pred_region
          %398 = dma.done %s391, 2048
        $region64: #{tpu_custom_call.1} parent=59 // pred_fallthru
          _
        %s399 = sand.u32 %s56, 1
        %s400 = scalar_lea.sflag [#allocation4], %s399
        %s401 = sand.u32 %s56, 1
        %s402 = smul.addr %s401, 128
        %s403 = scalar_lea.vmem [#allocation3], %s402
        %p404 = pneg %p69
        %p405 = pneg %p66
        %p406 = pneg %p90
        %p407 = pneg %p87
        %p408 = pneg %p111
        %p409 = pneg %p108
        %p410 = pneg %p132
        %p411 = pneg %p129
        %p412 = pneg %p153
        %p413 = pneg %p150
        %p414 = pneg %p174
        %p415 = pneg %p171
        %p416 = pneg %p195
        %p417 = pneg %p192
        %p418 = pneg %p216
        %p419 = pneg %p213
        %p420 = pneg %p237
        %p421 = pneg %p234
        %p422 = pneg %p258
        %p423 = pneg %p255
        %p424 = pneg %p286
        %p425 = pneg %p283
        %s426 = sand.u32 %s273, 1
        %s427 = scalar_lea.sflag [#allocation5], %s426
        %s428 = sand.u32 %s273, 1
        %s429 = smul.addr %s428, 16
        %s430 = scalar_lea.vmem [#allocation6], %s429
        %p431 = pneg %p314
        %p432 = pneg %p311
        %s433 = sand.u32 %s301, 1
        %s434 = scalar_lea.sflag [#allocation8], %s433
        %s435 = sand.u32 %s301, 1
        %s436 = smul.addr %s435, 512
        %s437 = scalar_lea.vmem [#allocation7], %s436
        %s438 = smul.u32 16, %s39
        %s439 = smul.u32 16, %s39
        %s440 = smul.u32 16, %s39
        %v442 = vld [vmem:[%s394] sm:$0xff]
        %v443 = vld [vmem:[%s394 + $0x8] sm:$0xff]
        %v444 = vld [vmem:[%s394 + $0x10] sm:$0xff]
        %v445 = vld [vmem:[%s394 + $0x18] sm:$0xff]
        %v446 = vld [vmem:[%s394 + $0x20] sm:$0xff]
        %v447 = vld [vmem:[%s394 + $0x28] sm:$0xff]
        %v448 = vld [vmem:[%s394 + $0x30] sm:$0xff]
        %v449 = vld [vmem:[%s394 + $0x38] sm:$0xff]
        %v450 = vld [vmem:[%s394 + $0x40] sm:$0xff]
        %v451 = vld [vmem:[%s394 + $0x48] sm:$0xff]
        %v452 = vld [vmem:[%s394 + $0x50] sm:$0xff]
        %v453 = vld [vmem:[%s394 + $0x58] sm:$0xff]
        %v454 = vld [vmem:[%s394 + $0x60] sm:$0xff]
        %v455 = vld [vmem:[%s394 + $0x68] sm:$0xff]
        %v456 = vld [vmem:[%s394 + $0x70] sm:$0xff]
        %v457 = vld [vmem:[%s394 + $0x78] sm:$0xff]
        %v458 = vld [vmem:[%s1] sm:$0xf]
        %v459 = vld [vmem:[%s1 + $0x4] sm:$0xf]
        %v460 = vld [vmem:[%s1 + $0x8] sm:$0xf]
        %v461 = vld [vmem:[%s1 + $0xc] sm:$0xf]
        %v462 = vld [vmem:[%s1 + $0x10] sm:$0xf]
        %v463 = vld [vmem:[%s1 + $0x14] sm:$0xf]
        %v464 = vld [vmem:[%s1 + $0x18] sm:$0xf]
        %v465 = vld [vmem:[%s1 + $0x1c] sm:$0xf]
        %v466 = vld [vmem:[%s2] sm:$0xff]
        %v467 = vld [vmem:[%s2 + $0x8] sm:$0xff]
        %v468 = vld [vmem:[%s2 + $0x10] sm:$0xff]
        %v469 = vld [vmem:[%s2 + $0x18] sm:$0xff]
        %v470 = vld [vmem:[%s2 + $0x20] sm:$0xff]
        %v471 = vld [vmem:[%s2 + $0x28] sm:$0xff]
        %v472 = vld [vmem:[%s2 + $0x30] sm:$0xff]
        %v473 = vld [vmem:[%s2 + $0x38] sm:$0xff]
        %475 = vset.pattern.permute.xlu0 0
        %476 = vperm.xlu0 %475, %v466
        %v477 = vpop.permute.xlu0 %476
        %480 = vset.pattern.permute.xlu0 0
        %481 = vperm.xlu0 %480, %v467
        %v482 = vpop.permute.xlu0 %481
        %485 = vset.pattern.permute.xlu0 0
        %486 = vperm.xlu0 %485, %v468
        %v487 = vpop.permute.xlu0 %486
        %490 = vset.pattern.permute.xlu0 0
        %491 = vperm.xlu0 %490, %v469
        %v492 = vpop.permute.xlu0 %491
        %495 = vset.pattern.permute.xlu0 0
        %496 = vperm.xlu0 %495, %v470
        %v497 = vpop.permute.xlu0 %496
        %500 = vset.pattern.permute.xlu0 0
        %501 = vperm.xlu0 %500, %v471
        %v502 = vpop.permute.xlu0 %501
        %505 = vset.pattern.permute.xlu0 0
        %506 = vperm.xlu0 %505, %v472
        %v507 = vpop.permute.xlu0 %506
        %510 = vset.pattern.permute.xlu0 0
        %511 = vperm.xlu0 %510, %v473
        %v512 = vpop.permute.xlu0 %511
        %v522 = vunpack.c.l.b16 %v458
        %v523 = vunpack.c.l.b16 %v459
        %v524 = vunpack.c.l.b16 %v460
        %v525 = vunpack.c.l.b16 %v461
        %v526 = vunpack.c.l.b16 %v462
        %v527 = vunpack.c.l.b16 %v463
        %v528 = vunpack.c.l.b16 %v464
        %v529 = vunpack.c.l.b16 %v465
        %v530 = vpack.c.b16 %v523, %v522
        %v531 = vpack.c.b16 %v525, %v524
        %v532 = vpack.c.b16 %v527, %v526
        %v533 = vpack.c.b16 %v529, %v528
        %v550 = vunpack.c.l.b16 %v442
        %v551 = vunpack.c.h.b16 %v442
        %v552 = vunpack.c.l.b16 %v443
        %v553 = vunpack.c.h.b16 %v443
        %v554 = vunpack.c.l.b16 %v444
        %v555 = vunpack.c.h.b16 %v444
        %v556 = vunpack.c.l.b16 %v445
        %v557 = vunpack.c.h.b16 %v445
        %v558 = vunpack.c.l.b16 %v446
        %v559 = vunpack.c.h.b16 %v446
        %v560 = vunpack.c.l.b16 %v447
        %v561 = vunpack.c.h.b16 %v447
        %v562 = vunpack.c.l.b16 %v448
        %v563 = vunpack.c.h.b16 %v448
        %v564 = vunpack.c.l.b16 %v449
        %v565 = vunpack.c.h.b16 %v449
        %v566 = vunpack.c.l.b16 %v450
        %v567 = vunpack.c.h.b16 %v450
        %v568 = vunpack.c.l.b16 %v451
        %v569 = vunpack.c.h.b16 %v451
        %v570 = vunpack.c.l.b16 %v452
        %v571 = vunpack.c.h.b16 %v452
        %v572 = vunpack.c.l.b16 %v453
        %v573 = vunpack.c.h.b16 %v453
        %v574 = vunpack.c.l.b16 %v454
        %v575 = vunpack.c.h.b16 %v454
        %v576 = vunpack.c.l.b16 %v455
        %v577 = vunpack.c.h.b16 %v455
        %v578 = vunpack.c.l.b16 %v456
        %v579 = vunpack.c.h.b16 %v456
        %v580 = vunpack.c.l.b16 %v457
        %v581 = vunpack.c.h.b16 %v457
        %v582 = vpack.c.b16 %v566, %v550
        %v583 = vpack.c.b16 %v567, %v551
        %v584 = vpack.c.b16 %v568, %v552
        %v585 = vpack.c.b16 %v569, %v553
        %v586 = vpack.c.b16 %v570, %v554
        %v587 = vpack.c.b16 %v571, %v555
        %v588 = vpack.c.b16 %v572, %v556
        %v589 = vpack.c.b16 %v573, %v557
        %v590 = vpack.c.b16 %v574, %v558
        %v591 = vpack.c.b16 %v575, %v559
        %v592 = vpack.c.b16 %v576, %v560
        %v593 = vpack.c.b16 %v577, %v561
        %v594 = vpack.c.b16 %v578, %v562
        %v595 = vpack.c.b16 %v579, %v563
        %v596 = vpack.c.b16 %v580, %v564
        %v597 = vpack.c.b16 %v581, %v565
        %vm614 = vcmask 130048
        %v616 = vsel %vm614, %v530, 0
        %v619 = vsel %vm614, %v531, 0
        %v622 = vsel %vm614, %v532, 0
        %v625 = vsel %vm614, %v533, 0
        %627 = vmatprep.subr.bf16.mxu0 %v583
        %628 = vmatpush1.bf16.msra.mxu0 %v582
        %629 = vmatprep.subr.bf16.mxu0 0
        %630 = vmatpush1.bf16.msra.mxu0 0
        %631 = vmatprep.subr.bf16.mxu0 0
        %632 = vmatpush1.bf16.msra.mxu0 0
        %633 = vmatprep.subr.bf16.mxu0 0
        %634 = vmatpush1.bf16.msra.mxu0 0
        %635 = vmatprep.subr.bf16.mxu0 0
        %636 = vmatpush1.bf16.msra.mxu0 0
        %637 = vmatprep.subr.bf16.mxu0 0
        %638 = vmatpush1.bf16.msra.mxu0 0
        %639 = vmatprep.subr.bf16.mxu0 0
        %640 = vmatpush1.bf16.msra.mxu0 0
        %641 = vmatprep.subr.bf16.mxu0 0
        %642 = vmatpush1.bf16.msra.mxu0 0
        %643 = vmatprep.subr.bf16.mxu0 0
        %644 = vmatpush1.bf16.msra.mxu0 0
        %645 = vmatprep.subr.bf16.mxu0 0
        %646 = vmatpush1.bf16.msra.mxu0 0
        %647 = vmatprep.subr.bf16.mxu0 0
        %648 = vmatpush1.bf16.msra.mxu0 0
        %649 = vmatprep.subr.bf16.mxu0 0
        %650 = vmatpush1.bf16.msra.mxu0 0
        %651 = vmatprep.subr.bf16.mxu0 0
        %652 = vmatpush1.bf16.msra.mxu0 0
        %653 = vmatprep.subr.bf16.mxu0 0
        %654 = vmatpush1.bf16.msra.mxu0 0
        %655 = vmatprep.subr.bf16.mxu0 0
        %656 = vmatpush1.bf16.msra.mxu0 0
        %657 = vmatprep.subr.bf16.mxu0 0
        %658 = vmatpush1.bf16.msra.mxu0 0
        %659 = vmatprep.mubr.bf16.mxu0 0
        %660 = vmatmul.mubr.bf16.gmra.mrb[0].mxu0 %v616
        %v661 = vpop.f32.mrb[0].mxu0
        %v662 = vadd.f32 %v477, %v661
        %v663 = vpop.f32.mrb[0].mxu0
        %v664 = vadd.f32 %v477, %v663
        %v665 = vpop.f32.mrb[0].mxu0
        %v666 = vadd.f32 %v482, %v665
        %v667 = vpop.f32.mrb[0].mxu0
        %v668 = vadd.f32 %v482, %v667
        %669 = vmatprep.mubr.bf16.mxu0 0
        %670 = vmatmul.mubr.bf16.gmra.mrb[0].mxu0 %v619
        %v671 = vpop.f32.mrb[0].mxu0
        %v672 = vadd.f32 %v487, %v671
        %v673 = vpop.f32.mrb[0].mxu0
        %v674 = vadd.f32 %v487, %v673
        %v675 = vpop.f32.mrb[0].mxu0
        %v676 = vadd.f32 %v492, %v675
        %v677 = vpop.f32.mrb[0].mxu0
        %v678 = vadd.f32 %v492, %v677
        %679 = vmatprep.mubr.bf16.mxu0 0
        %680 = vmatmul.mubr.bf16.gmra.mrb[0].mxu0 %v622
        %v681 = vpop.f32.mrb[0].mxu0
        %v682 = vadd.f32 %v497, %v681
        %v683 = vpop.f32.mrb[0].mxu0
        %v684 = vadd.f32 %v497, %v683
        %v685 = vpop.f32.mrb[0].mxu0
        %v686 = vadd.f32 %v502, %v685
        %v687 = vpop.f32.mrb[0].mxu0
        %v688 = vadd.f32 %v502, %v687
        %689 = vmatprep.mubr.bf16.mxu0 0
        %690 = vmatmul.mubr.bf16.gmra.mrb[0].mxu0 %v625
        %v691 = vpop.f32.mrb[0].mxu0
        %v692 = vadd.f32 %v507, %v691
        %v693 = vpop.f32.mrb[0].mxu0
        %v694 = vadd.f32 %v507, %v693
        %v695 = vpop.f32.mrb[0].mxu0
        %v696 = vadd.f32 %v512, %v695
        %v697 = vpop.f32.mrb[0].mxu0
        %v698 = vadd.f32 %v512, %v697
        %699 = vdwg.mxu0
        %700 = vmatprep.subr.bf16.mxu0 %v585
        %701 = vmatpush1.bf16.msra.mxu0 %v584
        %702 = vmatprep.subr.bf16.mxu0 0
        %703 = vmatpush1.bf16.msra.mxu0 0
        %704 = vmatprep.subr.bf16.mxu0 0
        %705 = vmatpush1.bf16.msra.mxu0 0
        %706 = vmatprep.subr.bf16.mxu0 0
        %707 = vmatpush1.bf16.msra.mxu0 0
        %708 = vmatprep.subr.bf16.mxu0 0
        %709 = vmatpush1.bf16.msra.mxu0 0
        %710 = vmatprep.subr.bf16.mxu0 0
        %711 = vmatpush1.bf16.msra.mxu0 0
        %712 = vmatprep.subr.bf16.mxu0 0
        %713 = vmatpush1.bf16.msra.mxu0 0
        %714 = vmatprep.subr.bf16.mxu0 0
        %715 = vmatpush1.bf16.msra.mxu0 0
        %716 = vmatprep.subr.bf16.mxu0 0
        %717 = vmatpush1.bf16.msra.mxu0 0
        %718 = vmatprep.subr.bf16.mxu0 0
        %719 = vmatpush1.bf16.msra.mxu0 0
        %720 = vmatprep.subr.bf16.mxu0 0
        %721 = vmatpush1.bf16.msra.mxu0 0
        %722 = vmatprep.subr.bf16.mxu0 0
        %723 = vmatpush1.bf16.msra.mxu0 0
        %724 = vmatprep.subr.bf16.mxu0 0
        %725 = vmatpush1.bf16.msra.mxu0 0
        %726 = vmatprep.subr.bf16.mxu0 0
        %727 = vmatpush1.bf16.msra.mxu0 0
        %728 = vmatprep.subr.bf16.mxu0 0
        %729 = vmatpush1.bf16.msra.mxu0 0
        %730 = vmatprep.subr.bf16.mxu0 0
        %731 = vmatpush1.bf16.msra.mxu0 0
        %732 = vmatprep.mubr.bf16.mxu0 0
        %733 = vmatmul.mubr.bf16.gmra.mrb[0].mxu0 %v616
        %v734 = vpop.f32.mrb[0].mxu0
        %v735 = vadd.f32 %v477, %v734
        %v736 = vpop.f32.mrb[0].mxu0
        %v737 = vadd.f32 %v477, %v736
        %v738 = vpop.f32.mrb[0].mxu0
        %v739 = vadd.f32 %v482, %v738
        %v740 = vpop.f32.mrb[0].mxu0
        %v741 = vadd.f32 %v482, %v740
        %742 = vmatprep.mubr.bf16.mxu0 0
        %743 = vmatmul.mubr.bf16.gmra.mrb[0].mxu0 %v619
        %v744 = vpop.f32.mrb[0].mxu0
        %v745 = vadd.f32 %v487, %v744
        %v746 = vpop.f32.mrb[0].mxu0
        %v747 = vadd.f32 %v487, %v746
        %v748 = vpop.f32.mrb[0].mxu0
        %v749 = vadd.f32 %v492, %v748
        %v750 = vpop.f32.mrb[0].mxu0
        %v751 = vadd.f32 %v492, %v750
        %752 = vmatprep.mubr.bf16.mxu0 0
        %753 = vmatmul.mubr.bf16.gmra.mrb[0].mxu0 %v622
        %v754 = vpop.f32.mrb[0].mxu0
        %v755 = vadd.f32 %v497, %v754
        %v756 = vpop.f32.mrb[0].mxu0
        %v757 = vadd.f32 %v497, %v756
        %v758 = vpop.f32.mrb[0].mxu0
        %v759 = vadd.f32 %v502, %v758
        %v760 = vpop.f32.mrb[0].mxu0
        %v761 = vadd.f32 %v502, %v760
        %762 = vmatprep.mubr.bf16.mxu0 0
        %763 = vmatmul.mubr.bf16.gmra.mrb[0].mxu0 %v625
        %v764 = vpop.f32.mrb[0].mxu0
        %v765 = vadd.f32 %v507, %v764
        %v766 = vpop.f32.mrb[0].mxu0
        %v767 = vadd.f32 %v507, %v766
        %v768 = vpop.f32.mrb[0].mxu0
        %v769 = vadd.f32 %v512, %v768
        %v770 = vpop.f32.mrb[0].mxu0
        %v771 = vadd.f32 %v512, %v770
        %772 = vdwg.mxu0
        %773 = vmatprep.subr.bf16.mxu0 %v587
        %774 = vmatpush1.bf16.msra.mxu0 %v586
        %775 = vmatprep.subr.bf16.mxu0 0
        %776 = vmatpush1.bf16.msra.mxu0 0
        %777 = vmatprep.subr.bf16.mxu0 0
        %778 = vmatpush1.bf16.msra.mxu0 0
        %779 = vmatprep.subr.bf16.mxu0 0
        %780 = vmatpush1.bf16.msra.mxu0 0
        %781 = vmatprep.subr.bf16.mxu0 0
        %782 = vmatpush1.bf16.msra.mxu0 0
        %783 = vmatprep.subr.bf16.mxu0 0
        %784 = vmatpush1.bf16.msra.mxu0 0
        %785 = vmatprep.subr.bf16.mxu0 0
        %786 = vmatpush1.bf16.msra.mxu0 0
        %787 = vmatprep.subr.bf16.mxu0 0
        %788 = vmatpush1.bf16.msra.mxu0 0
        %789 = vmatprep.subr.bf16.mxu0 0
        %790 = vmatpush1.bf16.msra.mxu0 0
        %791 = vmatprep.subr.bf16.mxu0 0
        %792 = vmatpush1.bf16.msra.mxu0 0
        %793 = vmatprep.subr.bf16.mxu0 0
        %794 = vmatpush1.bf16.msra.mxu0 0
        %795 = vmatprep.subr.bf16.mxu0 0
        %796 = vmatpush1.bf16.msra.mxu0 0
        %797 = vmatprep.subr.bf16.mxu0 0
        %798 = vmatpush1.bf16.msra.mxu0 0
        %799 = vmatprep.subr.bf16.mxu0 0
        %800 = vmatpush1.bf16.msra.mxu0 0
        %801 = vmatprep.subr.bf16.mxu0 0
        %802 = vmatpush1.bf16.msra.mxu0 0
        %803 = vmatprep.subr.bf16.mxu0 0
        %804 = vmatpush1.bf16.msra.mxu0 0
        %805 = vmatprep.mubr.bf16.mxu0 0
        %806 = vmatmul.mubr.bf16.gmra.mrb[0].mxu0 %v616
        %v807 = vpop.f32.mrb[0].mxu0
        %v808 = vadd.f32 %v477, %v807
        %v809 = vpop.f32.mrb[0].mxu0
        %v810 = vadd.f32 %v477, %v809
        %v811 = vpop.f32.mrb[0].mxu0
        %v812 = vadd.f32 %v482, %v811
        %v813 = vpop.f32.mrb[0].mxu0
        %v814 = vadd.f32 %v482, %v813
        %815 = vmatprep.mubr.bf16.mxu0 0
        %816 = vmatmul.mubr.bf16.gmra.mrb[0].mxu0 %v619
        %v817 = vpop.f32.mrb[0].mxu0
        %v818 = vadd.f32 %v487, %v817
        %v819 = vpop.f32.mrb[0].mxu0
        %v820 = vadd.f32 %v487, %v819
        %v821 = vpop.f32.mrb[0].mxu0
        %v822 = vadd.f32 %v492, %v821
        %v823 = vpop.f32.mrb[0].mxu0
        %v824 = vadd.f32 %v492, %v823
        %825 = vmatprep.mubr.bf16.mxu0 0
        %826 = vmatmul.mubr.bf16.gmra.mrb[0].mxu0 %v622
        %v827 = vpop.f32.mrb[0].mxu0
        %v828 = vadd.f32 %v497, %v827
        %v829 = vpop.f32.mrb[0].mxu0
        %v830 = vadd.f32 %v497, %v829
        %v831 = vpop.f32.mrb[0].mxu0
        %v832 = vadd.f32 %v502, %v831
        %v833 = vpop.f32.mrb[0].mxu0
        %v834 = vadd.f32 %v502, %v833
        %835 = vmatprep.mubr.bf16.mxu0 0
        %836 = vmatmul.mubr.bf16.gmra.mrb[0].mxu0 %v625
        %v837 = vpop.f32.mrb[0].mxu0
        %v838 = vadd.f32 %v507, %v837
        %v839 = vpop.f32.mrb[0].mxu0
        %v840 = vadd.f32 %v507, %v839
        %v841 = vpop.f32.mrb[0].mxu0
        %v842 = vadd.f32 %v512, %v841
        %v843 = vpop.f32.mrb[0].mxu0
        %v844 = vadd.f32 %v512, %v843
        %845 = vdwg.mxu0
        %846 = vmatprep.subr.bf16.mxu0 %v589
        %847 = vmatpush1.bf16.msra.mxu0 %v588
        %848 = vmatprep.subr.bf16.mxu0 0
        %849 = vmatpush1.bf16.msra.mxu0 0
        %850 = vmatprep.subr.bf16.mxu0 0
        %851 = vmatpush1.bf16.msra.mxu0 0
        %852 = vmatprep.subr.bf16.mxu0 0
        %853 = vmatpush1.bf16.msra.mxu0 0
        %854 = vmatprep.subr.bf16.mxu0 0
        %855 = vmatpush1.bf16.msra.mxu0 0
        %856 = vmatprep.subr.bf16.mxu0 0
        %857 = vmatpush1.bf16.msra.mxu0 0
        %858 = vmatprep.subr.bf16.mxu0 0
        %859 = vmatpush1.bf16.msra.mxu0 0
        %860 = vmatprep.subr.bf16.mxu0 0
        %861 = vmatpush1.bf16.msra.mxu0 0
        %862 = vmatprep.subr.bf16.mxu0 0
        %863 = vmatpush1.bf16.msra.mxu0 0
        %864 = vmatprep.subr.bf16.mxu0 0
        %865 = vmatpush1.bf16.msra.mxu0 0
        %866 = vmatprep.subr.bf16.mxu0 0
        %867 = vmatpush1.bf16.msra.mxu0 0
        %868 = vmatprep.subr.bf16.mxu0 0
        %869 = vmatpush1.bf16.msra.mxu0 0
        %870 = vmatprep.subr.bf16.mxu0 0
        %871 = vmatpush1.bf16.msra.mxu0 0
        %872 = vmatprep.subr.bf16.mxu0 0
        %873 = vmatpush1.bf16.msra.mxu0 0
        %874 = vmatprep.subr.bf16.mxu0 0
        %875 = vmatpush1.bf16.msra.mxu0 0
        %876 = vmatprep.subr.bf16.mxu0 0
        %877 = vmatpush1.bf16.msra.mxu0 0
        %878 = vmatprep.mubr.bf16.mxu0 0
        %879 = vmatmul.mubr.bf16.gmra.mrb[0].mxu0 %v616
        %v880 = vpop.f32.mrb[0].mxu0
        %v881 = vadd.f32 %v477, %v880
        %v882 = vpop.f32.mrb[0].mxu0
        %v883 = vadd.f32 %v477, %v882
        %v884 = vpop.f32.mrb[0].mxu0
        %v885 = vadd.f32 %v482, %v884
        %v886 = vpop.f32.mrb[0].mxu0
        %v887 = vadd.f32 %v482, %v886
        %888 = vmatprep.mubr.bf16.mxu0 0
        %889 = vmatmul.mubr.bf16.gmra.mrb[0].mxu0 %v619
        %v890 = vpop.f32.mrb[0].mxu0
        %v891 = vadd.f32 %v487, %v890
        %v892 = vpop.f32.mrb[0].mxu0
        %v893 = vadd.f32 %v487, %v892
        %v894 = vpop.f32.mrb[0].mxu0
        %v895 = vadd.f32 %v492, %v894
        %v896 = vpop.f32.mrb[0].mxu0
        %v897 = vadd.f32 %v492, %v896
        %898 = vmatprep.mubr.bf16.mxu0 0
        %899 = vmatmul.mubr.bf16.gmra.mrb[0].mxu0 %v622
        %v900 = vpop.f32.mrb[0].mxu0
        %v901 = vadd.f32 %v497, %v900
        %v902 = vpop.f32.mrb[0].mxu0
        %v903 = vadd.f32 %v497, %v902
        %v904 = vpop.f32.mrb[0].mxu0
        %v905 = vadd.f32 %v502, %v904
        %v906 = vpop.f32.mrb[0].mxu0
        %v907 = vadd.f32 %v502, %v906
        %908 = vmatprep.mubr.bf16.mxu0 0
        %909 = vmatmul.mubr.bf16.gmra.mrb[0].mxu0 %v625
        %v910 = vpop.f32.mrb[0].mxu0
        %v911 = vadd.f32 %v507, %v910
        %v912 = vpop.f32.mrb[0].mxu0
        %v913 = vadd.f32 %v507, %v912
        %v914 = vpop.f32.mrb[0].mxu0
        %v915 = vadd.f32 %v512, %v914
        %v916 = vpop.f32.mrb[0].mxu0
        %v917 = vadd.f32 %v512, %v916
        %918 = vdwg.mxu0
        %919 = vmatprep.subr.bf16.mxu0 %v591
        %920 = vmatpush1.bf16.msra.mxu0 %v590
        %921 = vmatprep.subr.bf16.mxu0 0
        %922 = vmatpush1.bf16.msra.mxu0 0
        %923 = vmatprep.subr.bf16.mxu0 0
        %924 = vmatpush1.bf16.msra.mxu0 0
        %925 = vmatprep.subr.bf16.mxu0 0
        %926 = vmatpush1.bf16.msra.mxu0 0
        %927 = vmatprep.subr.bf16.mxu0 0
        %928 = vmatpush1.bf16.msra.mxu0 0
        %929 = vmatprep.subr.bf16.mxu0 0
        %930 = vmatpush1.bf16.msra.mxu0 0
        %931 = vmatprep.subr.bf16.mxu0 0
        %932 = vmatpush1.bf16.msra.mxu0 0
        %933 = vmatprep.subr.bf16.mxu0 0
        %934 = vmatpush1.bf16.msra.mxu0 0
        %935 = vmatprep.subr.bf16.mxu0 0
        %936 = vmatpush1.bf16.msra.mxu0 0
        %937 = vmatprep.subr.bf16.mxu0 0
        %938 = vmatpush1.bf16.msra.mxu0 0
        %939 = vmatprep.subr.bf16.mxu0 0
        %940 = vmatpush1.bf16.msra.mxu0 0
        %941 = vmatprep.subr.bf16.mxu0 0
        %942 = vmatpush1.bf16.msra.mxu0 0
        %943 = vmatprep.subr.bf16.mxu0 0
        %944 = vmatpush1.bf16.msra.mxu0 0
        %945 = vmatprep.subr.bf16.mxu0 0
        %946 = vmatpush1.bf16.msra.mxu0 0
        %947 = vmatprep.subr.bf16.mxu0 0
        %948 = vmatpush1.bf16.msra.mxu0 0
        %949 = vmatprep.subr.bf16.mxu0 0
        %950 = vmatpush1.bf16.msra.mxu0 0
        %951 = vmatprep.mubr.bf16.mxu0 0
        %952 = vmatmul.mubr.bf16.gmra.mrb[0].mxu0 %v616
        %v953 = vpop.f32.mrb[0].mxu0
        %v954 = vadd.f32 %v477, %v953
        %v955 = vpop.f32.mrb[0].mxu0
        %v956 = vadd.f32 %v477, %v955
        %v957 = vpop.f32.mrb[0].mxu0
        %v958 = vadd.f32 %v482, %v957
        %v959 = vpop.f32.mrb[0].mxu0
        %v960 = vadd.f32 %v482, %v959
        %961 = vmatprep.mubr.bf16.mxu0 0
        %962 = vmatmul.mubr.bf16.gmra.mrb[0].mxu0 %v619
        %v963 = vpop.f32.mrb[0].mxu0
        %v964 = vadd.f32 %v487, %v963
        %v965 = vpop.f32.mrb[0].mxu0
        %v966 = vadd.f32 %v487, %v965
        %v967 = vpop.f32.mrb[0].mxu0
        %v968 = vadd.f32 %v492, %v967
        %v969 = vpop.f32.mrb[0].mxu0
        %v970 = vadd.f32 %v492, %v969
        %971 = vmatprep.mubr.bf16.mxu0 0
        %972 = vmatmul.mubr.bf16.gmra.mrb[0].mxu0 %v622
        %v973 = vpop.f32.mrb[0].mxu0
        %v974 = vadd.f32 %v497, %v973
        %v975 = vpop.f32.mrb[0].mxu0
        %v976 = vadd.f32 %v497, %v975
        %v977 = vpop.f32.mrb[0].mxu0
        %v978 = vadd.f32 %v502, %v977
        %v979 = vpop.f32.mrb[0].mxu0
        %v980 = vadd.f32 %v502, %v979
        %981 = vmatprep.mubr.bf16.mxu0 0
        %982 = vmatmul.mubr.bf16.gmra.mrb[0].mxu0 %v625
        %v983 = vpop.f32.mrb[0].mxu0
        %v984 = vadd.f32 %v507, %v983
        %v985 = vpop.f32.mrb[0].mxu0
        %v986 = vadd.f32 %v507, %v985
        %v987 = vpop.f32.mrb[0].mxu0
        %v988 = vadd.f32 %v512, %v987
        %v989 = vpop.f32.mrb[0].mxu0
        %v990 = vadd.f32 %v512, %v989
        %991 = vdwg.mxu0
        %992 = vmatprep.subr.bf16.mxu0 %v593
        %993 = vmatpush1.bf16.msra.mxu0 %v592
        %994 = vmatprep.subr.bf16.mxu0 0
        %995 = vmatpush1.bf16.msra.mxu0 0
        %996 = vmatprep.subr.bf16.mxu0 0
        %997 = vmatpush1.bf16.msra.mxu0 0
        %998 = vmatprep.subr.bf16.mxu0 0
        %999 = vmatpush1.bf16.msra.mxu0 0
        %1000 = vmatprep.subr.bf16.mxu0 0
        %1001 = vmatpush1.bf16.msra.mxu0 0
        %1002 = vmatprep.subr.bf16.mxu0 0
        %1003 = vmatpush1.bf16.msra.mxu0 0
        %1004 = vmatprep.subr.bf16.mxu0 0
        %1005 = vmatpush1.bf16.msra.mxu0 0
        %1006 = vmatprep.subr.bf16.mxu0 0
        %1007 = vmatpush1.bf16.msra.mxu0 0
        %1008 = vmatprep.subr.bf16.mxu0 0
        %1009 = vmatpush1.bf16.msra.mxu0 0
        %1010 = vmatprep.subr.bf16.mxu0 0
        %1011 = vmatpush1.bf16.msra.mxu0 0
        %1012 = vmatprep.subr.bf16.mxu0 0
        %1013 = vmatpush1.bf16.msra.mxu0 0
        %1014 = vmatprep.subr.bf16.mxu0 0
        %1015 = vmatpush1.bf16.msra.mxu0 0
        %1016 = vmatprep.subr.bf16.mxu0 0
        %1017 = vmatpush1.bf16.msra.mxu0 0
        %1018 = vmatprep.subr.bf16.mxu0 0
        %1019 = vmatpush1.bf16.msra.mxu0 0
        %1020 = vmatprep.subr.bf16.mxu0 0
        %1021 = vmatpush1.bf16.msra.mxu0 0
        %1022 = vmatprep.subr.bf16.mxu0 0
        %1023 = vmatpush1.bf16.msra.mxu0 0
        %1024 = vmatprep.mubr.bf16.mxu0 0
        %1025 = vmatmul.mubr.bf16.gmra.mrb[0].mxu0 %v616
        %v1026 = vpop.f32.mrb[0].mxu0
        %v1027 = vadd.f32 %v477, %v1026
        %v1028 = vpop.f32.mrb[0].mxu0
        %v1029 = vadd.f32 %v477, %v1028
        %v1030 = vpop.f32.mrb[0].mxu0
        %v1031 = vadd.f32 %v482, %v1030
        %v1032 = vpop.f32.mrb[0].mxu0
        %v1033 = vadd.f32 %v482, %v1032
        %1034 = vmatprep.mubr.bf16.mxu0 0
        %1035 = vmatmul.mubr.bf16.gmra.mrb[0].mxu0 %v619
        %v1036 = vpop.f32.mrb[0].mxu0
        %v1037 = vadd.f32 %v487, %v1036
        %v1038 = vpop.f32.mrb[0].mxu0
        %v1039 = vadd.f32 %v487, %v1038
        %v1040 = vpop.f32.mrb[0].mxu0
        %v1041 = vadd.f32 %v492, %v1040
        %v1042 = vpop.f32.mrb[0].mxu0
        %v1043 = vadd.f32 %v492, %v1042
        %1044 = vmatprep.mubr.bf16.mxu0 0
        %1045 = vmatmul.mubr.bf16.gmra.mrb[0].mxu0 %v622
        %v1046 = vpop.f32.mrb[0].mxu0
        %v1047 = vadd.f32 %v497, %v1046
        %v1048 = vpop.f32.mrb[0].mxu0
        %v1049 = vadd.f32 %v497, %v1048
        %v1050 = vpop.f32.mrb[0].mxu0
        %v1051 = vadd.f32 %v502, %v1050
        %v1052 = vpop.f32.mrb[0].mxu0
        %v1053 = vadd.f32 %v502, %v1052
        %1054 = vmatprep.mubr.bf16.mxu0 0
        %1055 = vmatmul.mubr.bf16.gmra.mrb[0].mxu0 %v625
        %v1056 = vpop.f32.mrb[0].mxu0
        %v1057 = vadd.f32 %v507, %v1056
        %v1058 = vpop.f32.mrb[0].mxu0
        %v1059 = vadd.f32 %v507, %v1058
        %v1060 = vpop.f32.mrb[0].mxu0
        %v1061 = vadd.f32 %v512, %v1060
        %v1062 = vpop.f32.mrb[0].mxu0
        %v1063 = vadd.f32 %v512, %v1062
        %1064 = vdwg.mxu0
        %1065 = vmatprep.subr.bf16.mxu0 %v595
        %1066 = vmatpush1.bf16.msra.mxu0 %v594
        %1067 = vmatprep.subr.bf16.mxu0 0
        %1068 = vmatpush1.bf16.msra.mxu0 0
        %1069 = vmatprep.subr.bf16.mxu0 0
        %1070 = vmatpush1.bf16.msra.mxu0 0
        %1071 = vmatprep.subr.bf16.mxu0 0
        %1072 = vmatpush1.bf16.msra.mxu0 0
        %1073 = vmatprep.subr.bf16.mxu0 0
        %1074 = vmatpush1.bf16.msra.mxu0 0
        %1075 = vmatprep.subr.bf16.mxu0 0
        %1076 = vmatpush1.bf16.msra.mxu0 0
        %1077 = vmatprep.subr.bf16.mxu0 0
        %1078 = vmatpush1.bf16.msra.mxu0 0
        %1079 = vmatprep.subr.bf16.mxu0 0
        %1080 = vmatpush1.bf16.msra.mxu0 0
        %1081 = vmatprep.subr.bf16.mxu0 0
        %1082 = vmatpush1.bf16.msra.mxu0 0
        %1083 = vmatprep.subr.bf16.mxu0 0
        %1084 = vmatpush1.bf16.msra.mxu0 0
        %1085 = vmatprep.subr.bf16.mxu0 0
        %1086 = vmatpush1.bf16.msra.mxu0 0
        %1087 = vmatprep.subr.bf16.mxu0 0
        %1088 = vmatpush1.bf16.msra.mxu0 0
        %1089 = vmatprep.subr.bf16.mxu0 0
        %1090 = vmatpush1.bf16.msra.mxu0 0
        %1091 = vmatprep.subr.bf16.mxu0 0
        %1092 = vmatpush1.bf16.msra.mxu0 0
        %1093 = vmatprep.subr.bf16.mxu0 0
        %1094 = vmatpush1.bf16.msra.mxu0 0
        %1095 = vmatprep.subr.bf16.mxu0 0
        %1096 = vmatpush1.bf16.msra.mxu0 0
        %1097 = vmatprep.mubr.bf16.mxu0 0
        %1098 = vmatmul.mubr.bf16.gmra.mrb[0].mxu0 %v616
        %v1099 = vpop.f32.mrb[0].mxu0
        %v1100 = vadd.f32 %v477, %v1099
        %v1101 = vpop.f32.mrb[0].mxu0
        %v1102 = vadd.f32 %v477, %v1101
        %v1103 = vpop.f32.mrb[0].mxu0
        %v1104 = vadd.f32 %v482, %v1103
        %v1105 = vpop.f32.mrb[0].mxu0
        %v1106 = vadd.f32 %v482, %v1105
        %1107 = vmatprep.mubr.bf16.mxu0 0
        %1108 = vmatmul.mubr.bf16.gmra.mrb[0].mxu0 %v619
        %v1109 = vpop.f32.mrb[0].mxu0
        %v1110 = vadd.f32 %v487, %v1109
        %v1111 = vpop.f32.mrb[0].mxu0
        %v1112 = vadd.f32 %v487, %v1111
        %v1113 = vpop.f32.mrb[0].mxu0
        %v1114 = vadd.f32 %v492, %v1113
        %v1115 = vpop.f32.mrb[0].mxu0
        %v1116 = vadd.f32 %v492, %v1115
        %1117 = vmatprep.mubr.bf16.mxu0 0
        %1118 = vmatmul.mubr.bf16.gmra.mrb[0].mxu0 %v622
        %v1119 = vpop.f32.mrb[0].mxu0
        %v1120 = vadd.f32 %v497, %v1119
        %v1121 = vpop.f32.mrb[0].mxu0
        %v1122 = vadd.f32 %v497, %v1121
        %v1123 = vpop.f32.mrb[0].mxu0
        %v1124 = vadd.f32 %v502, %v1123
        %v1125 = vpop.f32.mrb[0].mxu0
        %v1126 = vadd.f32 %v502, %v1125
        %1127 = vmatprep.mubr.bf16.mxu0 0
        %1128 = vmatmul.mubr.bf16.gmra.mrb[0].mxu0 %v625
        %v1129 = vpop.f32.mrb[0].mxu0
        %v1130 = vadd.f32 %v507, %v1129
        %v1131 = vpop.f32.mrb[0].mxu0
        %v1132 = vadd.f32 %v507, %v1131
        %v1133 = vpop.f32.mrb[0].mxu0
        %v1134 = vadd.f32 %v512, %v1133
        %v1135 = vpop.f32.mrb[0].mxu0
        %v1136 = vadd.f32 %v512, %v1135
        %1137 = vdwg.mxu0
        %1138 = vmatprep.subr.bf16.mxu0 %v597
        %1139 = vmatpush1.bf16.msra.mxu0 %v596
        %1140 = vmatprep.subr.bf16.mxu0 0
        %1141 = vmatpush1.bf16.msra.mxu0 0
        %1142 = vmatprep.subr.bf16.mxu0 0
        %1143 = vmatpush1.bf16.msra.mxu0 0
        %1144 = vmatprep.subr.bf16.mxu0 0
        %1145 = vmatpush1.bf16.msra.mxu0 0
        %1146 = vmatprep.subr.bf16.mxu0 0
        %1147 = vmatpush1.bf16.msra.mxu0 0
        %1148 = vmatprep.subr.bf16.mxu0 0
        %1149 = vmatpush1.bf16.msra.mxu0 0
        %1150 = vmatprep.subr.bf16.mxu0 0
        %1151 = vmatpush1.bf16.msra.mxu0 0
        %1152 = vmatprep.subr.bf16.mxu0 0
        %1153 = vmatpush1.bf16.msra.mxu0 0
        %1154 = vmatprep.subr.bf16.mxu0 0
        %1155 = vmatpush1.bf16.msra.mxu0 0
        %1156 = vmatprep.subr.bf16.mxu0 0
        %1157 = vmatpush1.bf16.msra.mxu0 0
        %1158 = vmatprep.subr.bf16.mxu0 0
        %1159 = vmatpush1.bf16.msra.mxu0 0
        %1160 = vmatprep.subr.bf16.mxu0 0
        %1161 = vmatpush1.bf16.msra.mxu0 0
        %1162 = vmatprep.subr.bf16.mxu0 0
        %1163 = vmatpush1.bf16.msra.mxu0 0
        %1164 = vmatprep.subr.bf16.mxu0 0
        %1165 = vmatpush1.bf16.msra.mxu0 0
        %1166 = vmatprep.subr.bf16.mxu0 0
        %1167 = vmatpush1.bf16.msra.mxu0 0
        %1168 = vmatprep.subr.bf16.mxu0 0
        %1169 = vmatpush1.bf16.msra.mxu0 0
        %1170 = vmatprep.mubr.bf16.mxu0 0
        %1171 = vmatmul.mubr.bf16.gmra.mrb[0].mxu0 %v616
        %v1172 = vpop.f32.mrb[0].mxu0
        %v1173 = vadd.f32 %v477, %v1172
        %v1174 = vpop.f32.mrb[0].mxu0
        %v1175 = vadd.f32 %v477, %v1174
        %v1176 = vpop.f32.mrb[0].mxu0
        %v1177 = vadd.f32 %v482, %v1176
        %v1178 = vpop.f32.mrb[0].mxu0
        %v1179 = vadd.f32 %v482, %v1178
        %1180 = vmatprep.mubr.bf16.mxu0 0
        %1181 = vmatmul.mubr.bf16.gmra.mrb[0].mxu0 %v619
        %v1182 = vpop.f32.mrb[0].mxu0
        %v1183 = vadd.f32 %v487, %v1182
        %v1184 = vpop.f32.mrb[0].mxu0
        %v1185 = vadd.f32 %v487, %v1184
        %v1186 = vpop.f32.mrb[0].mxu0
        %v1187 = vadd.f32 %v492, %v1186
        %v1188 = vpop.f32.mrb[0].mxu0
        %v1189 = vadd.f32 %v492, %v1188
        %1190 = vmatprep.mubr.bf16.mxu0 0
        %1191 = vmatmul.mubr.bf16.gmra.mrb[0].mxu0 %v622
        %v1192 = vpop.f32.mrb[0].mxu0
        %v1193 = vadd.f32 %v497, %v1192
        %v1194 = vpop.f32.mrb[0].mxu0
        %v1195 = vadd.f32 %v497, %v1194
        %v1196 = vpop.f32.mrb[0].mxu0
        %v1197 = vadd.f32 %v502, %v1196
        %v1198 = vpop.f32.mrb[0].mxu0
        %v1199 = vadd.f32 %v502, %v1198
        %1200 = vmatprep.mubr.bf16.mxu0 0
        %1201 = vmatmul.mubr.bf16.gmra.mrb[0].mxu0 %v625
        %v1202 = vpop.f32.mrb[0].mxu0
        %v1203 = vadd.f32 %v507, %v1202
        %v1204 = vpop.f32.mrb[0].mxu0
        %v1205 = vadd.f32 %v507, %v1204
        %v1206 = vpop.f32.mrb[0].mxu0
        %v1207 = vadd.f32 %v512, %v1206
        %v1208 = vpop.f32.mrb[0].mxu0
        %v1209 = vadd.f32 %v512, %v1208
        %1210 = vdwg.mxu0
        %v1211 = vmul.f32 %v662, 0.01
        %v1212 = vmul.f32 %v664, 0.01
        %v1213 = vmul.f32 %v735, 0.01
        %v1214 = vmul.f32 %v737, 0.01
        %v1215 = vmul.f32 %v808, 0.01
        %v1216 = vmul.f32 %v810, 0.01
        %v1217 = vmul.f32 %v881, 0.01
        %v1218 = vmul.f32 %v883, 0.01
        %v1219 = vmul.f32 %v954, 0.01
        %v1220 = vmul.f32 %v956, 0.01
        %v1221 = vmul.f32 %v1027, 0.01
        %v1222 = vmul.f32 %v1029, 0.01
        %v1223 = vmul.f32 %v1100, 0.01
        %v1224 = vmul.f32 %v1102, 0.01
        %v1225 = vmul.f32 %v1173, 0.01
        %v1226 = vmul.f32 %v1175, 0.01
        %v1227 = vmul.f32 %v666, 0.01
        %v1228 = vmul.f32 %v668, 0.01
        %v1229 = vmul.f32 %v739, 0.01
        %v1230 = vmul.f32 %v741, 0.01
        %v1231 = vmul.f32 %v812, 0.01
        %v1232 = vmul.f32 %v814, 0.01
        %v1233 = vmul.f32 %v885, 0.01
        %v1234 = vmul.f32 %v887, 0.01
        %v1235 = vmul.f32 %v958, 0.01
        %v1236 = vmul.f32 %v960, 0.01
        %v1237 = vmul.f32 %v1031, 0.01
        %v1238 = vmul.f32 %v1033, 0.01
        %v1239 = vmul.f32 %v1104, 0.01
        %v1240 = vmul.f32 %v1106, 0.01
        %v1241 = vmul.f32 %v1177, 0.01
        %v1242 = vmul.f32 %v1179, 0.01
        %v1243 = vmul.f32 %v672, 0.01
        %v1244 = vmul.f32 %v674, 0.01
        %v1245 = vmul.f32 %v745, 0.01
        %v1246 = vmul.f32 %v747, 0.01
        %v1247 = vmul.f32 %v818, 0.01
        %v1248 = vmul.f32 %v820, 0.01
        %v1249 = vmul.f32 %v891, 0.01
        %v1250 = vmul.f32 %v893, 0.01
        %v1251 = vmul.f32 %v964, 0.01
        %v1252 = vmul.f32 %v966, 0.01
        %v1253 = vmul.f32 %v1037, 0.01
        %v1254 = vmul.f32 %v1039, 0.01
        %v1255 = vmul.f32 %v1110, 0.01
        %v1256 = vmul.f32 %v1112, 0.01
        %v1257 = vmul.f32 %v1183, 0.01
        %v1258 = vmul.f32 %v1185, 0.01
        %v1259 = vmul.f32 %v676, 0.01
        %v1260 = vmul.f32 %v678, 0.01
        %v1261 = vmul.f32 %v749, 0.01
        %v1262 = vmul.f32 %v751, 0.01
        %v1263 = vmul.f32 %v822, 0.01
        %v1264 = vmul.f32 %v824, 0.01
        %v1265 = vmul.f32 %v895, 0.01
        %v1266 = vmul.f32 %v897, 0.01
        %v1267 = vmul.f32 %v968, 0.01
        %v1268 = vmul.f32 %v970, 0.01
        %v1269 = vmul.f32 %v1041, 0.01
        %v1270 = vmul.f32 %v1043, 0.01
        %v1271 = vmul.f32 %v1114, 0.01
        %v1272 = vmul.f32 %v1116, 0.01
        %v1273 = vmul.f32 %v1187, 0.01
        %v1274 = vmul.f32 %v1189, 0.01
        %v1275 = vmul.f32 %v682, 0.01
        %v1276 = vmul.f32 %v684, 0.01
        %v1277 = vmul.f32 %v755, 0.01
        %v1278 = vmul.f32 %v757, 0.01
        %v1279 = vmul.f32 %v828, 0.01
        %v1280 = vmul.f32 %v830, 0.01
        %v1281 = vmul.f32 %v901, 0.01
        %v1282 = vmul.f32 %v903, 0.01
        %v1283 = vmul.f32 %v974, 0.01
        %v1284 = vmul.f32 %v976, 0.01
        %v1285 = vmul.f32 %v1047, 0.01
        %v1286 = vmul.f32 %v1049, 0.01
        %v1287 = vmul.f32 %v1120, 0.01
        %v1288 = vmul.f32 %v1122, 0.01
        %v1289 = vmul.f32 %v1193, 0.01
        %v1290 = vmul.f32 %v1195, 0.01
        %v1291 = vmul.f32 %v686, 0.01
        %v1292 = vmul.f32 %v688, 0.01
        %v1293 = vmul.f32 %v759, 0.01
        %v1294 = vmul.f32 %v761, 0.01
        %v1295 = vmul.f32 %v832, 0.01
        %v1296 = vmul.f32 %v834, 0.01
        %v1297 = vmul.f32 %v905, 0.01
        %v1298 = vmul.f32 %v907, 0.01
        %v1299 = vmul.f32 %v978, 0.01
        %v1300 = vmul.f32 %v980, 0.01
        %v1301 = vmul.f32 %v1051, 0.01
        %v1302 = vmul.f32 %v1053, 0.01
        %v1303 = vmul.f32 %v1124, 0.01
        %v1304 = vmul.f32 %v1126, 0.01
        %v1305 = vmul.f32 %v1197, 0.01
        %v1306 = vmul.f32 %v1199, 0.01
        %v1307 = vmul.f32 %v692, 0.01
        %v1308 = vmul.f32 %v694, 0.01
        %v1309 = vmul.f32 %v765, 0.01
        %v1310 = vmul.f32 %v767, 0.01
        %v1311 = vmul.f32 %v838, 0.01
        %v1312 = vmul.f32 %v840, 0.01
        %v1313 = vmul.f32 %v911, 0.01
        %v1314 = vmul.f32 %v913, 0.01
        %v1315 = vmul.f32 %v984, 0.01
        %v1316 = vmul.f32 %v986, 0.01
        %v1317 = vmul.f32 %v1057, 0.01
        %v1318 = vmul.f32 %v1059, 0.01
        %v1319 = vmul.f32 %v1130, 0.01
        %v1320 = vmul.f32 %v1132, 0.01
        %v1321 = vmul.f32 %v1203, 0.01
        %v1322 = vmul.f32 %v1205, 0.01
        %v1323 = vmul.f32 %v696, 0.01
        %v1324 = vmul.f32 %v698, 0.01
        %v1325 = vmul.f32 %v769, 0.01
        %v1326 = vmul.f32 %v771, 0.01
        %v1327 = vmul.f32 %v842, 0.01
        %v1328 = vmul.f32 %v844, 0.01
        %v1329 = vmul.f32 %v915, 0.01
        %v1330 = vmul.f32 %v917, 0.01
        %v1331 = vmul.f32 %v988, 0.01
        %v1332 = vmul.f32 %v990, 0.01
        %v1333 = vmul.f32 %v1061, 0.01
        %v1334 = vmul.f32 %v1063, 0.01
        %v1335 = vmul.f32 %v1134, 0.01
        %v1336 = vmul.f32 %v1136, 0.01
        %v1337 = vmul.f32 %v1207, 0.01
        %v1338 = vmul.f32 %v1209, 0.01
        %v1339 = vmax.f32 %v662, %v1211
        %v1340 = vmax.f32 %v664, %v1212
        %v1341 = vmax.f32 %v735, %v1213
        %v1342 = vmax.f32 %v737, %v1214
        %v1343 = vmax.f32 %v808, %v1215
        %v1344 = vmax.f32 %v810, %v1216
        %v1345 = vmax.f32 %v881, %v1217
        %v1346 = vmax.f32 %v883, %v1218
        %v1347 = vmax.f32 %v954, %v1219
        %v1348 = vmax.f32 %v956, %v1220
        %v1349 = vmax.f32 %v1027, %v1221
        %v1350 = vmax.f32 %v1029, %v1222
        %v1351 = vmax.f32 %v1100, %v1223
        %v1352 = vmax.f32 %v1102, %v1224
        %v1353 = vmax.f32 %v1173, %v1225
        %v1354 = vmax.f32 %v1175, %v1226
        %v1355 = vmax.f32 %v666, %v1227
        %v1356 = vmax.f32 %v668, %v1228
        %v1357 = vmax.f32 %v739, %v1229
        %v1358 = vmax.f32 %v741, %v1230
        %v1359 = vmax.f32 %v812, %v1231
        %v1360 = vmax.f32 %v814, %v1232
        %v1361 = vmax.f32 %v885, %v1233
        %v1362 = vmax.f32 %v887, %v1234
        %v1363 = vmax.f32 %v958, %v1235
        %v1364 = vmax.f32 %v960, %v1236
        %v1365 = vmax.f32 %v1031, %v1237
        %v1366 = vmax.f32 %v1033, %v1238
        %v1367 = vmax.f32 %v1104, %v1239
        %v1368 = vmax.f32 %v1106, %v1240
        %v1369 = vmax.f32 %v1177, %v1241
        %v1370 = vmax.f32 %v1179, %v1242
        %v1371 = vmax.f32 %v672, %v1243
        %v1372 = vmax.f32 %v674, %v1244
        %v1373 = vmax.f32 %v745, %v1245
        %v1374 = vmax.f32 %v747, %v1246
        %v1375 = vmax.f32 %v818, %v1247
        %v1376 = vmax.f32 %v820, %v1248
        %v1377 = vmax.f32 %v891, %v1249
        %v1378 = vmax.f32 %v893, %v1250
        %v1379 = vmax.f32 %v964, %v1251
        %v1380 = vmax.f32 %v966, %v1252
        %v1381 = vmax.f32 %v1037, %v1253
        %v1382 = vmax.f32 %v1039, %v1254
        %v1383 = vmax.f32 %v1110, %v1255
        %v1384 = vmax.f32 %v1112, %v1256
        %v1385 = vmax.f32 %v1183, %v1257
        %v1386 = vmax.f32 %v1185, %v1258
        %v1387 = vmax.f32 %v676, %v1259
        %v1388 = vmax.f32 %v678, %v1260
        %v1389 = vmax.f32 %v749, %v1261
        %v1390 = vmax.f32 %v751, %v1262
        %v1391 = vmax.f32 %v822, %v1263
        %v1392 = vmax.f32 %v824, %v1264
        %v1393 = vmax.f32 %v895, %v1265
        %v1394 = vmax.f32 %v897, %v1266
        %v1395 = vmax.f32 %v968, %v1267
        %v1396 = vmax.f32 %v970, %v1268
        %v1397 = vmax.f32 %v1041, %v1269
        %v1398 = vmax.f32 %v1043, %v1270
        %v1399 = vmax.f32 %v1114, %v1271
        %v1400 = vmax.f32 %v1116, %v1272
        %v1401 = vmax.f32 %v1187, %v1273
        %v1402 = vmax.f32 %v1189, %v1274
        %v1403 = vmax.f32 %v682, %v1275
        %v1404 = vmax.f32 %v684, %v1276
        %v1405 = vmax.f32 %v755, %v1277
        %v1406 = vmax.f32 %v757, %v1278
        %v1407 = vmax.f32 %v828, %v1279
        %v1408 = vmax.f32 %v830, %v1280
        %v1409 = vmax.f32 %v901, %v1281
        %v1410 = vmax.f32 %v903, %v1282
        %v1411 = vmax.f32 %v974, %v1283
        %v1412 = vmax.f32 %v976, %v1284
        %v1413 = vmax.f32 %v1047, %v1285
        %v1414 = vmax.f32 %v1049, %v1286
        %v1415 = vmax.f32 %v1120, %v1287
        %v1416 = vmax.f32 %v1122, %v1288
        %v1417 = vmax.f32 %v1193, %v1289
        %v1418 = vmax.f32 %v1195, %v1290
        %v1419 = vmax.f32 %v686, %v1291
        %v1420 = vmax.f32 %v688, %v1292
        %v1421 = vmax.f32 %v759, %v1293
        %v1422 = vmax.f32 %v761, %v1294
        %v1423 = vmax.f32 %v832, %v1295
        %v1424 = vmax.f32 %v834, %v1296
        %v1425 = vmax.f32 %v905, %v1297
        %v1426 = vmax.f32 %v907, %v1298
        %v1427 = vmax.f32 %v978, %v1299
        %v1428 = vmax.f32 %v980, %v1300
        %v1429 = vmax.f32 %v1051, %v1301
        %v1430 = vmax.f32 %v1053, %v1302
        %v1431 = vmax.f32 %v1124, %v1303
        %v1432 = vmax.f32 %v1126, %v1304
        %v1433 = vmax.f32 %v1197, %v1305
        %v1434 = vmax.f32 %v1199, %v1306
        %v1435 = vmax.f32 %v692, %v1307
        %v1436 = vmax.f32 %v694, %v1308
        %v1437 = vmax.f32 %v765, %v1309
        %v1438 = vmax.f32 %v767, %v1310
        %v1439 = vmax.f32 %v838, %v1311
        %v1440 = vmax.f32 %v840, %v1312
        %v1441 = vmax.f32 %v911, %v1313
        %v1442 = vmax.f32 %v913, %v1314
        %v1443 = vmax.f32 %v984, %v1315
        %v1444 = vmax.f32 %v986, %v1316
        %v1445 = vmax.f32 %v1057, %v1317
        %v1446 = vmax.f32 %v1059, %v1318
        %v1447 = vmax.f32 %v1130, %v1319
        %v1448 = vmax.f32 %v1132, %v1320
        %v1449 = vmax.f32 %v1203, %v1321
        %v1450 = vmax.f32 %v1205, %v1322
        %v1451 = vmax.f32 %v696, %v1323
        %v1452 = vmax.f32 %v698, %v1324
        %v1453 = vmax.f32 %v769, %v1325
        %v1454 = vmax.f32 %v771, %v1326
        %v1455 = vmax.f32 %v842, %v1327
        %v1456 = vmax.f32 %v844, %v1328
        %v1457 = vmax.f32 %v915, %v1329
        %v1458 = vmax.f32 %v917, %v1330
        %v1459 = vmax.f32 %v988, %v1331
        %v1460 = vmax.f32 %v990, %v1332
        %v1461 = vmax.f32 %v1061, %v1333
        %v1462 = vmax.f32 %v1063, %v1334
        %v1463 = vmax.f32 %v1134, %v1335
        %v1464 = vmax.f32 %v1136, %v1336
        %v1465 = vmax.f32 %v1207, %v1337
        %v1466 = vmax.f32 %v1209, %v1338
        %v1467 = vld [vmem:[%s3] sm:$0xf]
        %v1468 = vld [vmem:[%s3 + $0x4] sm:$0xf]
        %v1469 = vld [vmem:[%s3 + $0x8] sm:$0xf]
        %v1470 = vld [vmem:[%s3 + $0xc] sm:$0xf]
        %v1471 = vld [vmem:[%s3 + $0x10] sm:$0xf]
        %v1472 = vld [vmem:[%s3 + $0x14] sm:$0xf]
        %v1473 = vld [vmem:[%s3 + $0x18] sm:$0xf]
        %v1474 = vld [vmem:[%s3 + $0x1c] sm:$0xf]
        %v1475 = vld [vmem:[%s4] sm:$0xff]
        %v1476 = vld [vmem:[%s4 + $0x8] sm:$0xff]
        %v1477 = vld [vmem:[%s4 + $0x10] sm:$0xff]
        %v1478 = vld [vmem:[%s4 + $0x18] sm:$0xff]
        %v1479 = vld [vmem:[%s4 + $0x20] sm:$0xff]
        %v1480 = vld [vmem:[%s4 + $0x28] sm:$0xff]
        %v1481 = vld [vmem:[%s4 + $0x30] sm:$0xff]
        %v1482 = vld [vmem:[%s4 + $0x38] sm:$0xff]
        %v1483 = vpack.c.bf16 %v1355, %v1339
        %v1484 = vpack.c.bf16 %v1356, %v1340
        %v1485 = vpack.c.bf16 %v1357, %v1341
        %v1486 = vpack.c.bf16 %v1358, %v1342
        %v1487 = vpack.c.bf16 %v1359, %v1343
        %v1488 = vpack.c.bf16 %v1360, %v1344
        %v1489 = vpack.c.bf16 %v1361, %v1345
        %v1490 = vpack.c.bf16 %v1362, %v1346
        %v1491 = vpack.c.bf16 %v1363, %v1347
        %v1492 = vpack.c.bf16 %v1364, %v1348
        %v1493 = vpack.c.bf16 %v1365, %v1349
        %v1494 = vpack.c.bf16 %v1366, %v1350
        %v1495 = vpack.c.bf16 %v1367, %v1351
        %v1496 = vpack.c.bf16 %v1368, %v1352
        %v1497 = vpack.c.bf16 %v1369, %v1353
        %v1498 = vpack.c.bf16 %v1370, %v1354
        %v1499 = vpack.c.bf16 %v1387, %v1371
        %v1500 = vpack.c.bf16 %v1388, %v1372
        %v1501 = vpack.c.bf16 %v1389, %v1373
        %v1502 = vpack.c.bf16 %v1390, %v1374
        %v1503 = vpack.c.bf16 %v1391, %v1375
        %v1504 = vpack.c.bf16 %v1392, %v1376
        %v1505 = vpack.c.bf16 %v1393, %v1377
        %v1506 = vpack.c.bf16 %v1394, %v1378
        %v1507 = vpack.c.bf16 %v1395, %v1379
        %v1508 = vpack.c.bf16 %v1396, %v1380
        %v1509 = vpack.c.bf16 %v1397, %v1381
        %v1510 = vpack.c.bf16 %v1398, %v1382
        %v1511 = vpack.c.bf16 %v1399, %v1383
        %v1512 = vpack.c.bf16 %v1400, %v1384
        %v1513 = vpack.c.bf16 %v1401, %v1385
        %v1514 = vpack.c.bf16 %v1402, %v1386
        %v1515 = vpack.c.bf16 %v1419, %v1403
        %v1516 = vpack.c.bf16 %v1420, %v1404
        %v1517 = vpack.c.bf16 %v1421, %v1405
        %v1518 = vpack.c.bf16 %v1422, %v1406
        %v1519 = vpack.c.bf16 %v1423, %v1407
        %v1520 = vpack.c.bf16 %v1424, %v1408
        %v1521 = vpack.c.bf16 %v1425, %v1409
        %v1522 = vpack.c.bf16 %v1426, %v1410
        %v1523 = vpack.c.bf16 %v1427, %v1411
        %v1524 = vpack.c.bf16 %v1428, %v1412
        %v1525 = vpack.c.bf16 %v1429, %v1413
        %v1526 = vpack.c.bf16 %v1430, %v1414
        %v1527 = vpack.c.bf16 %v1431, %v1415
        %v1528 = vpack.c.bf16 %v1432, %v1416
        %v1529 = vpack.c.bf16 %v1433, %v1417
        %v1530 = vpack.c.bf16 %v1434, %v1418
        %v1531 = vpack.c.bf16 %v1451, %v1435
        %v1532 = vpack.c.bf16 %v1452, %v1436
        %v1533 = vpack.c.bf16 %v1453, %v1437
        %v1534 = vpack.c.bf16 %v1454, %v1438
        %v1535 = vpack.c.bf16 %v1455, %v1439
        %v1536 = vpack.c.bf16 %v1456, %v1440
        %v1537 = vpack.c.bf16 %v1457, %v1441
        %v1538 = vpack.c.bf16 %v1458, %v1442
        %v1539 = vpack.c.bf16 %v1459, %v1443
        %v1540 = vpack.c.bf16 %v1460, %v1444
        %v1541 = vpack.c.bf16 %v1461, %v1445
        %v1542 = vpack.c.bf16 %v1462, %v1446
        %v1543 = vpack.c.bf16 %v1463, %v1447
        %v1544 = vpack.c.bf16 %v1464, %v1448
        %v1545 = vpack.c.bf16 %v1465, %v1449
        %v1546 = vpack.c.bf16 %v1466, %v1450
        %1548 = vset.pattern.permute.xlu0 0
        %1549 = vperm.xlu0 %1548, %v1475
        %v1550 = vpop.permute.xlu0 %1549
        %1553 = vset.pattern.permute.xlu0 0
        %1554 = vperm.xlu0 %1553, %v1476
        %v1555 = vpop.permute.xlu0 %1554
        %1558 = vset.pattern.permute.xlu0 0
        %1559 = vperm.xlu0 %1558, %v1477
        %v1560 = vpop.permute.xlu0 %1559
        %1563 = vset.pattern.permute.xlu0 0
        %1564 = vperm.xlu0 %1563, %v1478
        %v1565 = vpop.permute.xlu0 %1564
        %1568 = vset.pattern.permute.xlu0 0
        %1569 = vperm.xlu0 %1568, %v1479
        %v1570 = vpop.permute.xlu0 %1569
        %1573 = vset.pattern.permute.xlu0 0
        %1574 = vperm.xlu0 %1573, %v1480
        %v1575 = vpop.permute.xlu0 %1574
        %1578 = vset.pattern.permute.xlu0 0
        %1579 = vperm.xlu0 %1578, %v1481
        %v1580 = vpop.permute.xlu0 %1579
        %1583 = vset.pattern.permute.xlu0 0
        %1584 = vperm.xlu0 %1583, %v1482
        %v1585 = vpop.permute.xlu0 %1584
        %v1595 = vunpack.c.l.b16 %v1467
        %v1596 = vunpack.c.l.b16 %v1468
        %v1597 = vunpack.c.l.b16 %v1469
        %v1598 = vunpack.c.l.b16 %v1470
        %v1599 = vunpack.c.l.b16 %v1471
        %v1600 = vunpack.c.l.b16 %v1472
        %v1601 = vunpack.c.l.b16 %v1473
        %v1602 = vunpack.c.l.b16 %v1474
        %v1603 = vpack.c.b16 %v1596, %v1595
        %v1604 = vpack.c.b16 %v1598, %v1597
        %v1605 = vpack.c.b16 %v1600, %v1599
        %v1606 = vpack.c.b16 %v1602, %v1601
        %vm1607 = vcmask 523264
        %v1609 = vsel %vm1607, %v1603, 0
        %v1612 = vsel %vm1607, %v1604, 0
        %v1615 = vsel %vm1607, %v1605, 0
        %v1618 = vsel %vm1607, %v1606, 0
        %1620 = vmatprep.subr.bf16.mxu0 %v1484
        %1621 = vmatpush1.bf16.msra.mxu0 %v1483
        %1622 = vmatprep.subr.bf16.mxu0 %v1500
        %1623 = vmatpush1.bf16.msra.mxu0 %v1499
        %1624 = vmatprep.subr.bf16.mxu0 %v1516
        %1625 = vmatpush1.bf16.msra.mxu0 %v1515
        %1626 = vmatprep.subr.bf16.mxu0 %v1532
        %1627 = vmatpush1.bf16.msra.mxu0 %v1531
        %1628 = vmatprep.subr.bf16.mxu0 0
        %1629 = vmatpush1.bf16.msra.mxu0 0
        %1630 = vmatprep.subr.bf16.mxu0 0
        %1631 = vmatpush1.bf16.msra.mxu0 0
        %1632 = vmatprep.subr.bf16.mxu0 0
        %1633 = vmatpush1.bf16.msra.mxu0 0
        %1634 = vmatprep.subr.bf16.mxu0 0
        %1635 = vmatpush1.bf16.msra.mxu0 0
        %1636 = vmatprep.subr.bf16.mxu0 0
        %1637 = vmatpush1.bf16.msra.mxu0 0
        %1638 = vmatprep.subr.bf16.mxu0 0
        %1639 = vmatpush1.bf16.msra.mxu0 0
        %1640 = vmatprep.subr.bf16.mxu0 0
        %1641 = vmatpush1.bf16.msra.mxu0 0
        %1642 = vmatprep.subr.bf16.mxu0 0
        %1643 = vmatpush1.bf16.msra.mxu0 0
        %1644 = vmatprep.subr.bf16.mxu0 0
        %1645 = vmatpush1.bf16.msra.mxu0 0
        %1646 = vmatprep.subr.bf16.mxu0 0
        %1647 = vmatpush1.bf16.msra.mxu0 0
        %1648 = vmatprep.subr.bf16.mxu0 0
        %1649 = vmatpush1.bf16.msra.mxu0 0
        %1650 = vmatprep.subr.bf16.mxu0 0
        %1651 = vmatpush1.bf16.msra.mxu0 0
        %1652 = vmatprep.mubr.bf16.mxu0 0
        %1653 = vmatmul.mubr.bf16.gmra.mrb[0].mxu0 %v1609
        %v1654 = vpop.f32.mrb[0].mxu0
        %v1655 = vadd.f32 %v1550, %v1654
        %v1656 = vpop.f32.mrb[0].mxu0
        %v1657 = vadd.f32 %v1550, %v1656
        %v1658 = vpop.f32.mrb[0].mxu0
        %v1659 = vadd.f32 %v1555, %v1658
        %v1660 = vpop.f32.mrb[0].mxu0
        %v1661 = vadd.f32 %v1555, %v1660
        %1662 = vmatprep.mubr.bf16.mxu0 0
        %1663 = vmatmul.mubr.bf16.gmra.mrb[0].mxu0 %v1612
        %v1664 = vpop.f32.mrb[0].mxu0
        %v1665 = vadd.f32 %v1560, %v1664
        %v1666 = vpop.f32.mrb[0].mxu0
        %v1667 = vadd.f32 %v1560, %v1666
        %v1668 = vpop.f32.mrb[0].mxu0
        %v1669 = vadd.f32 %v1565, %v1668
        %v1670 = vpop.f32.mrb[0].mxu0
        %v1671 = vadd.f32 %v1565, %v1670
        %1672 = vmatprep.mubr.bf16.mxu0 0
        %1673 = vmatmul.mubr.bf16.gmra.mrb[0].mxu0 %v1615
        %v1674 = vpop.f32.mrb[0].mxu0
        %v1675 = vadd.f32 %v1570, %v1674
        %v1676 = vpop.f32.mrb[0].mxu0
        %v1677 = vadd.f32 %v1570, %v1676
        %v1678 = vpop.f32.mrb[0].mxu0
        %v1679 = vadd.f32 %v1575, %v1678
        %v1680 = vpop.f32.mrb[0].mxu0
        %v1681 = vadd.f32 %v1575, %v1680
        %1682 = vmatprep.mubr.bf16.mxu0 0
        %1683 = vmatmul.mubr.bf16.gmra.mrb[0].mxu0 %v1618
        %v1684 = vpop.f32.mrb[0].mxu0
        %v1685 = vadd.f32 %v1580, %v1684
        %v1686 = vpop.f32.mrb[0].mxu0
        %v1687 = vadd.f32 %v1580, %v1686
        %v1688 = vpop.f32.mrb[0].mxu0
        %v1689 = vadd.f32 %v1585, %v1688
        %v1690 = vpop.f32.mrb[0].mxu0
        %v1691 = vadd.f32 %v1585, %v1690
        %1692 = vdwg.mxu0
        %1693 = vmatprep.subr.bf16.mxu0 %v1486
        %1694 = vmatpush1.bf16.msra.mxu0 %v1485
        %1695 = vmatprep.subr.bf16.mxu0 %v1502
        %1696 = vmatpush1.bf16.msra.mxu0 %v1501
        %1697 = vmatprep.subr.bf16.mxu0 %v1518
        %1698 = vmatpush1.bf16.msra.mxu0 %v1517
        %1699 = vmatprep.subr.bf16.mxu0 %v1534
        %1700 = vmatpush1.bf16.msra.mxu0 %v1533
        %1701 = vmatprep.subr.bf16.mxu0 0
        %1702 = vmatpush1.bf16.msra.mxu0 0
        %1703 = vmatprep.subr.bf16.mxu0 0
        %1704 = vmatpush1.bf16.msra.mxu0 0
        %1705 = vmatprep.subr.bf16.mxu0 0
        %1706 = vmatpush1.bf16.msra.mxu0 0
        %1707 = vmatprep.subr.bf16.mxu0 0
        %1708 = vmatpush1.bf16.msra.mxu0 0
        %1709 = vmatprep.subr.bf16.mxu0 0
        %1710 = vmatpush1.bf16.msra.mxu0 0
        %1711 = vmatprep.subr.bf16.mxu0 0
        %1712 = vmatpush1.bf16.msra.mxu0 0
        %1713 = vmatprep.subr.bf16.mxu0 0
        %1714 = vmatpush1.bf16.msra.mxu0 0
        %1715 = vmatprep.subr.bf16.mxu0 0
        %1716 = vmatpush1.bf16.msra.mxu0 0
        %1717 = vmatprep.subr.bf16.mxu0 0
        %1718 = vmatpush1.bf16.msra.mxu0 0
        %1719 = vmatprep.subr.bf16.mxu0 0
        %1720 = vmatpush1.bf16.msra.mxu0 0
        %1721 = vmatprep.subr.bf16.mxu0 0
        %1722 = vmatpush1.bf16.msra.mxu0 0
        %1723 = vmatprep.subr.bf16.mxu0 0
        %1724 = vmatpush1.bf16.msra.mxu0 0
        %1725 = vmatprep.mubr.bf16.mxu0 0
        %1726 = vmatmul.mubr.bf16.gmra.mrb[0].mxu0 %v1609
        %v1727 = vpop.f32.mrb[0].mxu0
        %v1728 = vadd.f32 %v1550, %v1727
        %v1729 = vpop.f32.mrb[0].mxu0
        %v1730 = vadd.f32 %v1550, %v1729
        %v1731 = vpop.f32.mrb[0].mxu0
        %v1732 = vadd.f32 %v1555, %v1731
        %v1733 = vpop.f32.mrb[0].mxu0
        %v1734 = vadd.f32 %v1555, %v1733
        %1735 = vmatprep.mubr.bf16.mxu0 0
        %1736 = vmatmul.mubr.bf16.gmra.mrb[0].mxu0 %v1612
        %v1737 = vpop.f32.mrb[0].mxu0
        %v1738 = vadd.f32 %v1560, %v1737
        %v1739 = vpop.f32.mrb[0].mxu0
        %v1740 = vadd.f32 %v1560, %v1739
        %v1741 = vpop.f32.mrb[0].mxu0
        %v1742 = vadd.f32 %v1565, %v1741
        %v1743 = vpop.f32.mrb[0].mxu0
        %v1744 = vadd.f32 %v1565, %v1743
        %1745 = vmatprep.mubr.bf16.mxu0 0
        %1746 = vmatmul.mubr.bf16.gmra.mrb[0].mxu0 %v1615
        %v1747 = vpop.f32.mrb[0].mxu0
        %v1748 = vadd.f32 %v1570, %v1747
        %v1749 = vpop.f32.mrb[0].mxu0
        %v1750 = vadd.f32 %v1570, %v1749
        %v1751 = vpop.f32.mrb[0].mxu0
        %v1752 = vadd.f32 %v1575, %v1751
        %v1753 = vpop.f32.mrb[0].mxu0
        %v1754 = vadd.f32 %v1575, %v1753
        %1755 = vmatprep.mubr.bf16.mxu0 0
        %1756 = vmatmul.mubr.bf16.gmra.mrb[0].mxu0 %v1618
        %v1757 = vpop.f32.mrb[0].mxu0
        %v1758 = vadd.f32 %v1580, %v1757
        %v1759 = vpop.f32.mrb[0].mxu0
        %v1760 = vadd.f32 %v1580, %v1759
        %v1761 = vpop.f32.mrb[0].mxu0
        %v1762 = vadd.f32 %v1585, %v1761
        %v1763 = vpop.f32.mrb[0].mxu0
        %v1764 = vadd.f32 %v1585, %v1763
        %1765 = vdwg.mxu0
        %1766 = vmatprep.subr.bf16.mxu0 %v1488
        %1767 = vmatpush1.bf16.msra.mxu0 %v1487
        %1768 = vmatprep.subr.bf16.mxu0 %v1504
        %1769 = vmatpush1.bf16.msra.mxu0 %v1503
        %1770 = vmatprep.subr.bf16.mxu0 %v1520
        %1771 = vmatpush1.bf16.msra.mxu0 %v1519
        %1772 = vmatprep.subr.bf16.mxu0 %v1536
        %1773 = vmatpush1.bf16.msra.mxu0 %v1535
        %1774 = vmatprep.subr.bf16.mxu0 0
        %1775 = vmatpush1.bf16.msra.mxu0 0
        %1776 = vmatprep.subr.bf16.mxu0 0
        %1777 = vmatpush1.bf16.msra.mxu0 0
        %1778 = vmatprep.subr.bf16.mxu0 0
        %1779 = vmatpush1.bf16.msra.mxu0 0
        %1780 = vmatprep.subr.bf16.mxu0 0
        %1781 = vmatpush1.bf16.msra.mxu0 0
        %1782 = vmatprep.subr.bf16.mxu0 0
        %1783 = vmatpush1.bf16.msra.mxu0 0
        %1784 = vmatprep.subr.bf16.mxu0 0
        %1785 = vmatpush1.bf16.msra.mxu0 0
        %1786 = vmatprep.subr.bf16.mxu0 0
        %1787 = vmatpush1.bf16.msra.mxu0 0
        %1788 = vmatprep.subr.bf16.mxu0 0
        %1789 = vmatpush1.bf16.msra.mxu0 0
        %1790 = vmatprep.subr.bf16.mxu0 0
        %1791 = vmatpush1.bf16.msra.mxu0 0
        %1792 = vmatprep.subr.bf16.mxu0 0
        %1793 = vmatpush1.bf16.msra.mxu0 0
        %1794 = vmatprep.subr.bf16.mxu0 0
        %1795 = vmatpush1.bf16.msra.mxu0 0
        %1796 = vmatprep.subr.bf16.mxu0 0
        %1797 = vmatpush1.bf16.msra.mxu0 0
        %1798 = vmatprep.mubr.bf16.mxu0 0
        %1799 = vmatmul.mubr.bf16.gmra.mrb[0].mxu0 %v1609
        %v1800 = vpop.f32.mrb[0].mxu0
        %v1801 = vadd.f32 %v1550, %v1800
        %v1802 = vpop.f32.mrb[0].mxu0
        %v1803 = vadd.f32 %v1550, %v1802
        %v1804 = vpop.f32.mrb[0].mxu0
        %v1805 = vadd.f32 %v1555, %v1804
        %v1806 = vpop.f32.mrb[0].mxu0
        %v1807 = vadd.f32 %v1555, %v1806
        %1808 = vmatprep.mubr.bf16.mxu0 0
        %1809 = vmatmul.mubr.bf16.gmra.mrb[0].mxu0 %v1612
        %v1810 = vpop.f32.mrb[0].mxu0
        %v1811 = vadd.f32 %v1560, %v1810
        %v1812 = vpop.f32.mrb[0].mxu0
        %v1813 = vadd.f32 %v1560, %v1812
        %v1814 = vpop.f32.mrb[0].mxu0
        %v1815 = vadd.f32 %v1565, %v1814
        %v1816 = vpop.f32.mrb[0].mxu0
        %v1817 = vadd.f32 %v1565, %v1816
        %1818 = vmatprep.mubr.bf16.mxu0 0
        %1819 = vmatmul.mubr.bf16.gmra.mrb[0].mxu0 %v1615
        %v1820 = vpop.f32.mrb[0].mxu0
        %v1821 = vadd.f32 %v1570, %v1820
        %v1822 = vpop.f32.mrb[0].mxu0
        %v1823 = vadd.f32 %v1570, %v1822
        %v1824 = vpop.f32.mrb[0].mxu0
        %v1825 = vadd.f32 %v1575, %v1824
        %v1826 = vpop.f32.mrb[0].mxu0
        %v1827 = vadd.f32 %v1575, %v1826
        %1828 = vmatprep.mubr.bf16.mxu0 0
        %1829 = vmatmul.mubr.bf16.gmra.mrb[0].mxu0 %v1618
        %v1830 = vpop.f32.mrb[0].mxu0
        %v1831 = vadd.f32 %v1580, %v1830
        %v1832 = vpop.f32.mrb[0].mxu0
        %v1833 = vadd.f32 %v1580, %v1832
        %v1834 = vpop.f32.mrb[0].mxu0
        %v1835 = vadd.f32 %v1585, %v1834
        %v1836 = vpop.f32.mrb[0].mxu0
        %v1837 = vadd.f32 %v1585, %v1836
        %1838 = vdwg.mxu0
        %1839 = vmatprep.subr.bf16.mxu0 %v1490
        %1840 = vmatpush1.bf16.msra.mxu0 %v1489
        %1841 = vmatprep.subr.bf16.mxu0 %v1506
        %1842 = vmatpush1.bf16.msra.mxu0 %v1505
        %1843 = vmatprep.subr.bf16.mxu0 %v1522
        %1844 = vmatpush1.bf16.msra.mxu0 %v1521
        %1845 = vmatprep.subr.bf16.mxu0 %v1538
        %1846 = vmatpush1.bf16.msra.mxu0 %v1537
        %1847 = vmatprep.subr.bf16.mxu0 0
        %1848 = vmatpush1.bf16.msra.mxu0 0
        %1849 = vmatprep.subr.bf16.mxu0 0
        %1850 = vmatpush1.bf16.msra.mxu0 0
        %1851 = vmatprep.subr.bf16.mxu0 0
        %1852 = vmatpush1.bf16.msra.mxu0 0
        %1853 = vmatprep.subr.bf16.mxu0 0
        %1854 = vmatpush1.bf16.msra.mxu0 0
        %1855 = vmatprep.subr.bf16.mxu0 0
        %1856 = vmatpush1.bf16.msra.mxu0 0
        %1857 = vmatprep.subr.bf16.mxu0 0
        %1858 = vmatpush1.bf16.msra.mxu0 0
        %1859 = vmatprep.subr.bf16.mxu0 0
        %1860 = vmatpush1.bf16.msra.mxu0 0
        %1861 = vmatprep.subr.bf16.mxu0 0
        %1862 = vmatpush1.bf16.msra.mxu0 0
        %1863 = vmatprep.subr.bf16.mxu0 0
        %1864 = vmatpush1.bf16.msra.mxu0 0
        %1865 = vmatprep.subr.bf16.mxu0 0
        %1866 = vmatpush1.bf16.msra.mxu0 0
        %1867 = vmatprep.subr.bf16.mxu0 0
        %1868 = vmatpush1.bf16.msra.mxu0 0
        %1869 = vmatprep.subr.bf16.mxu0 0
        %1870 = vmatpush1.bf16.msra.mxu0 0
        %1871 = vmatprep.mubr.bf16.mxu0 0
        %1872 = vmatmul.mubr.bf16.gmra.mrb[0].mxu0 %v1609
        %v1873 = vpop.f32.mrb[0].mxu0
        %v1874 = vadd.f32 %v1550, %v1873
        %v1875 = vpop.f32.mrb[0].mxu0
        %v1876 = vadd.f32 %v1550, %v1875
        %v1877 = vpop.f32.mrb[0].mxu0
        %v1878 = vadd.f32 %v1555, %v1877
        %v1879 = vpop.f32.mrb[0].mxu0
        %v1880 = vadd.f32 %v1555, %v1879
        %1881 = vmatprep.mubr.bf16.mxu0 0
        %1882 = vmatmul.mubr.bf16.gmra.mrb[0].mxu0 %v1612
        %v1883 = vpop.f32.mrb[0].mxu0
        %v1884 = vadd.f32 %v1560, %v1883
        %v1885 = vpop.f32.mrb[0].mxu0
        %v1886 = vadd.f32 %v1560, %v1885
        %v1887 = vpop.f32.mrb[0].mxu0
        %v1888 = vadd.f32 %v1565, %v1887
        %v1889 = vpop.f32.mrb[0].mxu0
        %v1890 = vadd.f32 %v1565, %v1889
        %1891 = vmatprep.mubr.bf16.mxu0 0
        %1892 = vmatmul.mubr.bf16.gmra.mrb[0].mxu0 %v1615
        %v1893 = vpop.f32.mrb[0].mxu0
        %v1894 = vadd.f32 %v1570, %v1893
        %v1895 = vpop.f32.mrb[0].mxu0
        %v1896 = vadd.f32 %v1570, %v1895
        %v1897 = vpop.f32.mrb[0].mxu0
        %v1898 = vadd.f32 %v1575, %v1897
        %v1899 = vpop.f32.mrb[0].mxu0
        %v1900 = vadd.f32 %v1575, %v1899
        %1901 = vmatprep.mubr.bf16.mxu0 0
        %1902 = vmatmul.mubr.bf16.gmra.mrb[0].mxu0 %v1618
        %v1903 = vpop.f32.mrb[0].mxu0
        %v1904 = vadd.f32 %v1580, %v1903
        %v1905 = vpop.f32.mrb[0].mxu0
        %v1906 = vadd.f32 %v1580, %v1905
        %v1907 = vpop.f32.mrb[0].mxu0
        %v1908 = vadd.f32 %v1585, %v1907
        %v1909 = vpop.f32.mrb[0].mxu0
        %v1910 = vadd.f32 %v1585, %v1909
        %1911 = vdwg.mxu0
        %1912 = vmatprep.subr.bf16.mxu0 %v1492
        %1913 = vmatpush1.bf16.msra.mxu0 %v1491
        %1914 = vmatprep.subr.bf16.mxu0 %v1508
        %1915 = vmatpush1.bf16.msra.mxu0 %v1507
        %1916 = vmatprep.subr.bf16.mxu0 %v1524
        %1917 = vmatpush1.bf16.msra.mxu0 %v1523
        %1918 = vmatprep.subr.bf16.mxu0 %v1540
        %1919 = vmatpush1.bf16.msra.mxu0 %v1539
        %1920 = vmatprep.subr.bf16.mxu0 0
        %1921 = vmatpush1.bf16.msra.mxu0 0
        %1922 = vmatprep.subr.bf16.mxu0 0
        %1923 = vmatpush1.bf16.msra.mxu0 0
        %1924 = vmatprep.subr.bf16.mxu0 0
        %1925 = vmatpush1.bf16.msra.mxu0 0
        %1926 = vmatprep.subr.bf16.mxu0 0
        %1927 = vmatpush1.bf16.msra.mxu0 0
        %1928 = vmatprep.subr.bf16.mxu0 0
        %1929 = vmatpush1.bf16.msra.mxu0 0
        %1930 = vmatprep.subr.bf16.mxu0 0
        %1931 = vmatpush1.bf16.msra.mxu0 0
        %1932 = vmatprep.subr.bf16.mxu0 0
        %1933 = vmatpush1.bf16.msra.mxu0 0
        %1934 = vmatprep.subr.bf16.mxu0 0
        %1935 = vmatpush1.bf16.msra.mxu0 0
        %1936 = vmatprep.subr.bf16.mxu0 0
        %1937 = vmatpush1.bf16.msra.mxu0 0
        %1938 = vmatprep.subr.bf16.mxu0 0
        %1939 = vmatpush1.bf16.msra.mxu0 0
        %1940 = vmatprep.subr.bf16.mxu0 0
        %1941 = vmatpush1.bf16.msra.mxu0 0
        %1942 = vmatprep.subr.bf16.mxu0 0
        %1943 = vmatpush1.bf16.msra.mxu0 0
        %1944 = vmatprep.mubr.bf16.mxu0 0
        %1945 = vmatmul.mubr.bf16.gmra.mrb[0].mxu0 %v1609
        %v1946 = vpop.f32.mrb[0].mxu0
        %v1947 = vadd.f32 %v1550, %v1946
        %v1948 = vpop.f32.mrb[0].mxu0
        %v1949 = vadd.f32 %v1550, %v1948
        %v1950 = vpop.f32.mrb[0].mxu0
        %v1951 = vadd.f32 %v1555, %v1950
        %v1952 = vpop.f32.mrb[0].mxu0
        %v1953 = vadd.f32 %v1555, %v1952
        %1954 = vmatprep.mubr.bf16.mxu0 0
        %1955 = vmatmul.mubr.bf16.gmra.mrb[0].mxu0 %v1612
        %v1956 = vpop.f32.mrb[0].mxu0
        %v1957 = vadd.f32 %v1560, %v1956
        %v1958 = vpop.f32.mrb[0].mxu0
        %v1959 = vadd.f32 %v1560, %v1958
        %v1960 = vpop.f32.mrb[0].mxu0
        %v1961 = vadd.f32 %v1565, %v1960
        %v1962 = vpop.f32.mrb[0].mxu0
        %v1963 = vadd.f32 %v1565, %v1962
        %1964 = vmatprep.mubr.bf16.mxu0 0
        %1965 = vmatmul.mubr.bf16.gmra.mrb[0].mxu0 %v1615
        %v1966 = vpop.f32.mrb[0].mxu0
        %v1967 = vadd.f32 %v1570, %v1966
        %v1968 = vpop.f32.mrb[0].mxu0
        %v1969 = vadd.f32 %v1570, %v1968
        %v1970 = vpop.f32.mrb[0].mxu0
        %v1971 = vadd.f32 %v1575, %v1970
        %v1972 = vpop.f32.mrb[0].mxu0
        %v1973 = vadd.f32 %v1575, %v1972
        %1974 = vmatprep.mubr.bf16.mxu0 0
        %1975 = vmatmul.mubr.bf16.gmra.mrb[0].mxu0 %v1618
        %v1976 = vpop.f32.mrb[0].mxu0
        %v1977 = vadd.f32 %v1580, %v1976
        %v1978 = vpop.f32.mrb[0].mxu0
        %v1979 = vadd.f32 %v1580, %v1978
        %v1980 = vpop.f32.mrb[0].mxu0
        %v1981 = vadd.f32 %v1585, %v1980
        %v1982 = vpop.f32.mrb[0].mxu0
        %v1983 = vadd.f32 %v1585, %v1982
        %1984 = vdwg.mxu0
        %1985 = vmatprep.subr.bf16.mxu0 %v1494
        %1986 = vmatpush1.bf16.msra.mxu0 %v1493
        %1987 = vmatprep.subr.bf16.mxu0 %v1510
        %1988 = vmatpush1.bf16.msra.mxu0 %v1509
        %1989 = vmatprep.subr.bf16.mxu0 %v1526
        %1990 = vmatpush1.bf16.msra.mxu0 %v1525
        %1991 = vmatprep.subr.bf16.mxu0 %v1542
        %1992 = vmatpush1.bf16.msra.mxu0 %v1541
        %1993 = vmatprep.subr.bf16.mxu0 0
        %1994 = vmatpush1.bf16.msra.mxu0 0
        %1995 = vmatprep.subr.bf16.mxu0 0
        %1996 = vmatpush1.bf16.msra.mxu0 0
        %1997 = vmatprep.subr.bf16.mxu0 0
        %1998 = vmatpush1.bf16.msra.mxu0 0
        %1999 = vmatprep.subr.bf16.mxu0 0
        %2000 = vmatpush1.bf16.msra.mxu0 0
        %2001 = vmatprep.subr.bf16.mxu0 0
        %2002 = vmatpush1.bf16.msra.mxu0 0
        %2003 = vmatprep.subr.bf16.mxu0 0
        %2004 = vmatpush1.bf16.msra.mxu0 0
        %2005 = vmatprep.subr.bf16.mxu0 0
        %2006 = vmatpush1.bf16.msra.mxu0 0
        %2007 = vmatprep.subr.bf16.mxu0 0
        %2008 = vmatpush1.bf16.msra.mxu0 0
        %2009 = vmatprep.subr.bf16.mxu0 0
        %2010 = vmatpush1.bf16.msra.mxu0 0
        %2011 = vmatprep.subr.bf16.mxu0 0
        %2012 = vmatpush1.bf16.msra.mxu0 0
        %2013 = vmatprep.subr.bf16.mxu0 0
        %2014 = vmatpush1.bf16.msra.mxu0 0
        %2015 = vmatprep.subr.bf16.mxu0 0
        %2016 = vmatpush1.bf16.msra.mxu0 0
        %2017 = vmatprep.mubr.bf16.mxu0 0
        %2018 = vmatmul.mubr.bf16.gmra.mrb[0].mxu0 %v1609
        %v2019 = vpop.f32.mrb[0].mxu0
        %v2020 = vadd.f32 %v1550, %v2019
        %v2021 = vpop.f32.mrb[0].mxu0
        %v2022 = vadd.f32 %v1550, %v2021
        %v2023 = vpop.f32.mrb[0].mxu0
        %v2024 = vadd.f32 %v1555, %v2023
        %v2025 = vpop.f32.mrb[0].mxu0
        %v2026 = vadd.f32 %v1555, %v2025
        %2027 = vmatprep.mubr.bf16.mxu0 0
        %2028 = vmatmul.mubr.bf16.gmra.mrb[0].mxu0 %v1612
        %v2029 = vpop.f32.mrb[0].mxu0
        %v2030 = vadd.f32 %v1560, %v2029
        %v2031 = vpop.f32.mrb[0].mxu0
        %v2032 = vadd.f32 %v1560, %v2031
        %v2033 = vpop.f32.mrb[0].mxu0
        %v2034 = vadd.f32 %v1565, %v2033
        %v2035 = vpop.f32.mrb[0].mxu0
        %v2036 = vadd.f32 %v1565, %v2035
        %2037 = vmatprep.mubr.bf16.mxu0 0
        %2038 = vmatmul.mubr.bf16.gmra.mrb[0].mxu0 %v1615
        %v2039 = vpop.f32.mrb[0].mxu0
        %v2040 = vadd.f32 %v1570, %v2039
        %v2041 = vpop.f32.mrb[0].mxu0
        %v2042 = vadd.f32 %v1570, %v2041
        %v2043 = vpop.f32.mrb[0].mxu0
        %v2044 = vadd.f32 %v1575, %v2043
        %v2045 = vpop.f32.mrb[0].mxu0
        %v2046 = vadd.f32 %v1575, %v2045
        %2047 = vmatprep.mubr.bf16.mxu0 0
        %2048 = vmatmul.mubr.bf16.gmra.mrb[0].mxu0 %v1618
        %v2049 = vpop.f32.mrb[0].mxu0
        %v2050 = vadd.f32 %v1580, %v2049
        %v2051 = vpop.f32.mrb[0].mxu0
        %v2052 = vadd.f32 %v1580, %v2051
        %v2053 = vpop.f32.mrb[0].mxu0
        %v2054 = vadd.f32 %v1585, %v2053
        %v2055 = vpop.f32.mrb[0].mxu0
        %v2056 = vadd.f32 %v1585, %v2055
        %2057 = vdwg.mxu0
        %2058 = vmatprep.subr.bf16.mxu0 %v1496
        %2059 = vmatpush1.bf16.msra.mxu0 %v1495
        %2060 = vmatprep.subr.bf16.mxu0 %v1512
        %2061 = vmatpush1.bf16.msra.mxu0 %v1511
        %2062 = vmatprep.subr.bf16.mxu0 %v1528
        %2063 = vmatpush1.bf16.msra.mxu0 %v1527
        %2064 = vmatprep.subr.bf16.mxu0 %v1544
        %2065 = vmatpush1.bf16.msra.mxu0 %v1543
        %2066 = vmatprep.subr.bf16.mxu0 0
        %2067 = vmatpush1.bf16.msra.mxu0 0
        %2068 = vmatprep.subr.bf16.mxu0 0
        %2069 = vmatpush1.bf16.msra.mxu0 0
        %2070 = vmatprep.subr.bf16.mxu0 0
        %2071 = vmatpush1.bf16.msra.mxu0 0
        %2072 = vmatprep.subr.bf16.mxu0 0
        %2073 = vmatpush1.bf16.msra.mxu0 0
        %2074 = vmatprep.subr.bf16.mxu0 0
        %2075 = vmatpush1.bf16.msra.mxu0 0
        %2076 = vmatprep.subr.bf16.mxu0 0
        %2077 = vmatpush1.bf16.msra.mxu0 0
        %2078 = vmatprep.subr.bf16.mxu0 0
        %2079 = vmatpush1.bf16.msra.mxu0 0
        %2080 = vmatprep.subr.bf16.mxu0 0
        %2081 = vmatpush1.bf16.msra.mxu0 0
        %2082 = vmatprep.subr.bf16.mxu0 0
        %2083 = vmatpush1.bf16.msra.mxu0 0
        %2084 = vmatprep.subr.bf16.mxu0 0
        %2085 = vmatpush1.bf16.msra.mxu0 0
        %2086 = vmatprep.subr.bf16.mxu0 0
        %2087 = vmatpush1.bf16.msra.mxu0 0
        %2088 = vmatprep.subr.bf16.mxu0 0
        %2089 = vmatpush1.bf16.msra.mxu0 0
        %2090 = vmatprep.mubr.bf16.mxu0 0
        %2091 = vmatmul.mubr.bf16.gmra.mrb[0].mxu0 %v1609
        %v2092 = vpop.f32.mrb[0].mxu0
        %v2093 = vadd.f32 %v1550, %v2092
        %v2094 = vpop.f32.mrb[0].mxu0
        %v2095 = vadd.f32 %v1550, %v2094
        %v2096 = vpop.f32.mrb[0].mxu0
        %v2097 = vadd.f32 %v1555, %v2096
        %v2098 = vpop.f32.mrb[0].mxu0
        %v2099 = vadd.f32 %v1555, %v2098
        %2100 = vmatprep.mubr.bf16.mxu0 0
        %2101 = vmatmul.mubr.bf16.gmra.mrb[0].mxu0 %v1612
        %v2102 = vpop.f32.mrb[0].mxu0
        %v2103 = vadd.f32 %v1560, %v2102
        %v2104 = vpop.f32.mrb[0].mxu0
        %v2105 = vadd.f32 %v1560, %v2104
        %v2106 = vpop.f32.mrb[0].mxu0
        %v2107 = vadd.f32 %v1565, %v2106
        %v2108 = vpop.f32.mrb[0].mxu0
        %v2109 = vadd.f32 %v1565, %v2108
        %2110 = vmatprep.mubr.bf16.mxu0 0
        %2111 = vmatmul.mubr.bf16.gmra.mrb[0].mxu0 %v1615
        %v2112 = vpop.f32.mrb[0].mxu0
        %v2113 = vadd.f32 %v1570, %v2112
        %v2114 = vpop.f32.mrb[0].mxu0
        %v2115 = vadd.f32 %v1570, %v2114
        %v2116 = vpop.f32.mrb[0].mxu0
        %v2117 = vadd.f32 %v1575, %v2116
        %v2118 = vpop.f32.mrb[0].mxu0
        %v2119 = vadd.f32 %v1575, %v2118
        %2120 = vmatprep.mubr.bf16.mxu0 0
        %2121 = vmatmul.mubr.bf16.gmra.mrb[0].mxu0 %v1618
        %v2122 = vpop.f32.mrb[0].mxu0
        %v2123 = vadd.f32 %v1580, %v2122
        %v2124 = vpop.f32.mrb[0].mxu0
        %v2125 = vadd.f32 %v1580, %v2124
        %v2126 = vpop.f32.mrb[0].mxu0
        %v2127 = vadd.f32 %v1585, %v2126
        %v2128 = vpop.f32.mrb[0].mxu0
        %v2129 = vadd.f32 %v1585, %v2128
        %2130 = vdwg.mxu0
        %2131 = vmatprep.subr.bf16.mxu0 %v1498
        %2132 = vmatpush1.bf16.msra.mxu0 %v1497
        %2133 = vmatprep.subr.bf16.mxu0 %v1514
        %2134 = vmatpush1.bf16.msra.mxu0 %v1513
        %2135 = vmatprep.subr.bf16.mxu0 %v1530
        %2136 = vmatpush1.bf16.msra.mxu0 %v1529
        %2137 = vmatprep.subr.bf16.mxu0 %v1546
        %2138 = vmatpush1.bf16.msra.mxu0 %v1545
        %2139 = vmatprep.subr.bf16.mxu0 0
        %2140 = vmatpush1.bf16.msra.mxu0 0
        %2141 = vmatprep.subr.bf16.mxu0 0
        %2142 = vmatpush1.bf16.msra.mxu0 0
        %2143 = vmatprep.subr.bf16.mxu0 0
        %2144 = vmatpush1.bf16.msra.mxu0 0
        %2145 = vmatprep.subr.bf16.mxu0 0
        %2146 = vmatpush1.bf16.msra.mxu0 0
        %2147 = vmatprep.subr.bf16.mxu0 0
        %2148 = vmatpush1.bf16.msra.mxu0 0
        %2149 = vmatprep.subr.bf16.mxu0 0
        %2150 = vmatpush1.bf16.msra.mxu0 0
        %2151 = vmatprep.subr.bf16.mxu0 0
        %2152 = vmatpush1.bf16.msra.mxu0 0
        %2153 = vmatprep.subr.bf16.mxu0 0
        %2154 = vmatpush1.bf16.msra.mxu0 0
        %2155 = vmatprep.subr.bf16.mxu0 0
        %2156 = vmatpush1.bf16.msra.mxu0 0
        %2157 = vmatprep.subr.bf16.mxu0 0
        %2158 = vmatpush1.bf16.msra.mxu0 0
        %2159 = vmatprep.subr.bf16.mxu0 0
        %2160 = vmatpush1.bf16.msra.mxu0 0
        %2161 = vmatprep.subr.bf16.mxu0 0
        %2162 = vmatpush1.bf16.msra.mxu0 0
        %2163 = vmatprep.mubr.bf16.mxu0 0
        %2164 = vmatmul.mubr.bf16.gmra.mrb[0].mxu0 %v1609
        %v2165 = vpop.f32.mrb[0].mxu0
        %v2166 = vadd.f32 %v1550, %v2165
        %v2167 = vpop.f32.mrb[0].mxu0
        %v2168 = vadd.f32 %v1550, %v2167
        %v2169 = vpop.f32.mrb[0].mxu0
        %v2170 = vadd.f32 %v1555, %v2169
        %v2171 = vpop.f32.mrb[0].mxu0
        %v2172 = vadd.f32 %v1555, %v2171
        %2173 = vmatprep.mubr.bf16.mxu0 0
        %2174 = vmatmul.mubr.bf16.gmra.mrb[0].mxu0 %v1612
        %v2175 = vpop.f32.mrb[0].mxu0
        %v2176 = vadd.f32 %v1560, %v2175
        %v2177 = vpop.f32.mrb[0].mxu0
        %v2178 = vadd.f32 %v1560, %v2177
        %v2179 = vpop.f32.mrb[0].mxu0
        %v2180 = vadd.f32 %v1565, %v2179
        %v2181 = vpop.f32.mrb[0].mxu0
        %v2182 = vadd.f32 %v1565, %v2181
        %2183 = vmatprep.mubr.bf16.mxu0 0
        %2184 = vmatmul.mubr.bf16.gmra.mrb[0].mxu0 %v1615
        %v2185 = vpop.f32.mrb[0].mxu0
        %v2186 = vadd.f32 %v1570, %v2185
        %v2187 = vpop.f32.mrb[0].mxu0
        %v2188 = vadd.f32 %v1570, %v2187
        %v2189 = vpop.f32.mrb[0].mxu0
        %v2190 = vadd.f32 %v1575, %v2189
        %v2191 = vpop.f32.mrb[0].mxu0
        %v2192 = vadd.f32 %v1575, %v2191
        %2193 = vmatprep.mubr.bf16.mxu0 0
        %2194 = vmatmul.mubr.bf16.gmra.mrb[0].mxu0 %v1618
        %v2195 = vpop.f32.mrb[0].mxu0
        %v2196 = vadd.f32 %v1580, %v2195
        %v2197 = vpop.f32.mrb[0].mxu0
        %v2198 = vadd.f32 %v1580, %v2197
        %v2199 = vpop.f32.mrb[0].mxu0
        %v2200 = vadd.f32 %v1585, %v2199
        %v2201 = vpop.f32.mrb[0].mxu0
        %v2202 = vadd.f32 %v1585, %v2201
        %2203 = vdwg.mxu0
        %v2204 = vmul.f32 %v1655, 0.01
        %v2205 = vmul.f32 %v1657, 0.01
        %v2206 = vmul.f32 %v1728, 0.01
        %v2207 = vmul.f32 %v1730, 0.01
        %v2208 = vmul.f32 %v1801, 0.01
        %v2209 = vmul.f32 %v1803, 0.01
        %v2210 = vmul.f32 %v1874, 0.01
        %v2211 = vmul.f32 %v1876, 0.01
        %v2212 = vmul.f32 %v1947, 0.01
        %v2213 = vmul.f32 %v1949, 0.01
        %v2214 = vmul.f32 %v2020, 0.01
        %v2215 = vmul.f32 %v2022, 0.01
        %v2216 = vmul.f32 %v2093, 0.01
        %v2217 = vmul.f32 %v2095, 0.01
        %v2218 = vmul.f32 %v2166, 0.01
        %v2219 = vmul.f32 %v2168, 0.01
        %v2220 = vmul.f32 %v1659, 0.01
        %v2221 = vmul.f32 %v1661, 0.01
        %v2222 = vmul.f32 %v1732, 0.01
        %v2223 = vmul.f32 %v1734, 0.01
        %v2224 = vmul.f32 %v1805, 0.01
        %v2225 = vmul.f32 %v1807, 0.01
        %v2226 = vmul.f32 %v1878, 0.01
        %v2227 = vmul.f32 %v1880, 0.01
        %v2228 = vmul.f32 %v1951, 0.01
        %v2229 = vmul.f32 %v1953, 0.01
        %v2230 = vmul.f32 %v2024, 0.01
        %v2231 = vmul.f32 %v2026, 0.01
        %v2232 = vmul.f32 %v2097, 0.01
        %v2233 = vmul.f32 %v2099, 0.01
        %v2234 = vmul.f32 %v2170, 0.01
        %v2235 = vmul.f32 %v2172, 0.01
        %v2236 = vmul.f32 %v1665, 0.01
        %v2237 = vmul.f32 %v1667, 0.01
        %v2238 = vmul.f32 %v1738, 0.01
        %v2239 = vmul.f32 %v1740, 0.01
        %v2240 = vmul.f32 %v1811, 0.01
        %v2241 = vmul.f32 %v1813, 0.01
        %v2242 = vmul.f32 %v1884, 0.01
        %v2243 = vmul.f32 %v1886, 0.01
        %v2244 = vmul.f32 %v1957, 0.01
        %v2245 = vmul.f32 %v1959, 0.01
        %v2246 = vmul.f32 %v2030, 0.01
        %v2247 = vmul.f32 %v2032, 0.01
        %v2248 = vmul.f32 %v2103, 0.01
        %v2249 = vmul.f32 %v2105, 0.01
        %v2250 = vmul.f32 %v2176, 0.01
        %v2251 = vmul.f32 %v2178, 0.01
        %v2252 = vmul.f32 %v1669, 0.01
        %v2253 = vmul.f32 %v1671, 0.01
        %v2254 = vmul.f32 %v1742, 0.01
        %v2255 = vmul.f32 %v1744, 0.01
        %v2256 = vmul.f32 %v1815, 0.01
        %v2257 = vmul.f32 %v1817, 0.01
        %v2258 = vmul.f32 %v1888, 0.01
        %v2259 = vmul.f32 %v1890, 0.01
        %v2260 = vmul.f32 %v1961, 0.01
        %v2261 = vmul.f32 %v1963, 0.01
        %v2262 = vmul.f32 %v2034, 0.01
        %v2263 = vmul.f32 %v2036, 0.01
        %v2264 = vmul.f32 %v2107, 0.01
        %v2265 = vmul.f32 %v2109, 0.01
        %v2266 = vmul.f32 %v2180, 0.01
        %v2267 = vmul.f32 %v2182, 0.01
        %v2268 = vmul.f32 %v1675, 0.01
        %v2269 = vmul.f32 %v1677, 0.01
        %v2270 = vmul.f32 %v1748, 0.01
        %v2271 = vmul.f32 %v1750, 0.01
        %v2272 = vmul.f32 %v1821, 0.01
        %v2273 = vmul.f32 %v1823, 0.01
        %v2274 = vmul.f32 %v1894, 0.01
        %v2275 = vmul.f32 %v1896, 0.01
        %v2276 = vmul.f32 %v1967, 0.01
        %v2277 = vmul.f32 %v1969, 0.01
        %v2278 = vmul.f32 %v2040, 0.01
        %v2279 = vmul.f32 %v2042, 0.01
        %v2280 = vmul.f32 %v2113, 0.01
        %v2281 = vmul.f32 %v2115, 0.01
        %v2282 = vmul.f32 %v2186, 0.01
        %v2283 = vmul.f32 %v2188, 0.01
        %v2284 = vmul.f32 %v1679, 0.01
        %v2285 = vmul.f32 %v1681, 0.01
        %v2286 = vmul.f32 %v1752, 0.01
        %v2287 = vmul.f32 %v1754, 0.01
        %v2288 = vmul.f32 %v1825, 0.01
        %v2289 = vmul.f32 %v1827, 0.01
        %v2290 = vmul.f32 %v1898, 0.01
        %v2291 = vmul.f32 %v1900, 0.01
        %v2292 = vmul.f32 %v1971, 0.01
        %v2293 = vmul.f32 %v1973, 0.01
        %v2294 = vmul.f32 %v2044, 0.01
        %v2295 = vmul.f32 %v2046, 0.01
        %v2296 = vmul.f32 %v2117, 0.01
        %v2297 = vmul.f32 %v2119, 0.01
        %v2298 = vmul.f32 %v2190, 0.01
        %v2299 = vmul.f32 %v2192, 0.01
        %v2300 = vmul.f32 %v1685, 0.01
        %v2301 = vmul.f32 %v1687, 0.01
        %v2302 = vmul.f32 %v1758, 0.01
        %v2303 = vmul.f32 %v1760, 0.01
        %v2304 = vmul.f32 %v1831, 0.01
        %v2305 = vmul.f32 %v1833, 0.01
        %v2306 = vmul.f32 %v1904, 0.01
        %v2307 = vmul.f32 %v1906, 0.01
        %v2308 = vmul.f32 %v1977, 0.01
        %v2309 = vmul.f32 %v1979, 0.01
        %v2310 = vmul.f32 %v2050, 0.01
        %v2311 = vmul.f32 %v2052, 0.01
        %v2312 = vmul.f32 %v2123, 0.01
        %v2313 = vmul.f32 %v2125, 0.01
        %v2314 = vmul.f32 %v2196, 0.01
        %v2315 = vmul.f32 %v2198, 0.01
        %v2316 = vmul.f32 %v1689, 0.01
        %v2317 = vmul.f32 %v1691, 0.01
        %v2318 = vmul.f32 %v1762, 0.01
        %v2319 = vmul.f32 %v1764, 0.01
        %v2320 = vmul.f32 %v1835, 0.01
        %v2321 = vmul.f32 %v1837, 0.01
        %v2322 = vmul.f32 %v1908, 0.01
        %v2323 = vmul.f32 %v1910, 0.01
        %v2324 = vmul.f32 %v1981, 0.01
        %v2325 = vmul.f32 %v1983, 0.01
        %v2326 = vmul.f32 %v2054, 0.01
        %v2327 = vmul.f32 %v2056, 0.01
        %v2328 = vmul.f32 %v2127, 0.01
        %v2329 = vmul.f32 %v2129, 0.01
        %v2330 = vmul.f32 %v2200, 0.01
        %v2331 = vmul.f32 %v2202, 0.01
        %v2332 = vmax.f32 %v1655, %v2204
        %v2333 = vmax.f32 %v1657, %v2205
        %v2334 = vmax.f32 %v1728, %v2206
        %v2335 = vmax.f32 %v1730, %v2207
        %v2336 = vmax.f32 %v1801, %v2208
        %v2337 = vmax.f32 %v1803, %v2209
        %v2338 = vmax.f32 %v1874, %v2210
        %v2339 = vmax.f32 %v1876, %v2211
        %v2340 = vmax.f32 %v1947, %v2212
        %v2341 = vmax.f32 %v1949, %v2213
        %v2342 = vmax.f32 %v2020, %v2214
        %v2343 = vmax.f32 %v2022, %v2215
        %v2344 = vmax.f32 %v2093, %v2216
        %v2345 = vmax.f32 %v2095, %v2217
        %v2346 = vmax.f32 %v2166, %v2218
        %v2347 = vmax.f32 %v2168, %v2219
        %v2348 = vmax.f32 %v1659, %v2220
        %v2349 = vmax.f32 %v1661, %v2221
        %v2350 = vmax.f32 %v1732, %v2222
        %v2351 = vmax.f32 %v1734, %v2223
        %v2352 = vmax.f32 %v1805, %v2224
        %v2353 = vmax.f32 %v1807, %v2225
        %v2354 = vmax.f32 %v1878, %v2226
        %v2355 = vmax.f32 %v1880, %v2227
        %v2356 = vmax.f32 %v1951, %v2228
        %v2357 = vmax.f32 %v1953, %v2229
        %v2358 = vmax.f32 %v2024, %v2230
        %v2359 = vmax.f32 %v2026, %v2231
        %v2360 = vmax.f32 %v2097, %v2232
        %v2361 = vmax.f32 %v2099, %v2233
        %v2362 = vmax.f32 %v2170, %v2234
        %v2363 = vmax.f32 %v2172, %v2235
        %v2364 = vmax.f32 %v1665, %v2236
        %v2365 = vmax.f32 %v1667, %v2237
        %v2366 = vmax.f32 %v1738, %v2238
        %v2367 = vmax.f32 %v1740, %v2239
        %v2368 = vmax.f32 %v1811, %v2240
        %v2369 = vmax.f32 %v1813, %v2241
        %v2370 = vmax.f32 %v1884, %v2242
        %v2371 = vmax.f32 %v1886, %v2243
        %v2372 = vmax.f32 %v1957, %v2244
        %v2373 = vmax.f32 %v1959, %v2245
        %v2374 = vmax.f32 %v2030, %v2246
        %v2375 = vmax.f32 %v2032, %v2247
        %v2376 = vmax.f32 %v2103, %v2248
        %v2377 = vmax.f32 %v2105, %v2249
        %v2378 = vmax.f32 %v2176, %v2250
        %v2379 = vmax.f32 %v2178, %v2251
        %v2380 = vmax.f32 %v1669, %v2252
        %v2381 = vmax.f32 %v1671, %v2253
        %v2382 = vmax.f32 %v1742, %v2254
        %v2383 = vmax.f32 %v1744, %v2255
        %v2384 = vmax.f32 %v1815, %v2256
        %v2385 = vmax.f32 %v1817, %v2257
        %v2386 = vmax.f32 %v1888, %v2258
        %v2387 = vmax.f32 %v1890, %v2259
        %v2388 = vmax.f32 %v1961, %v2260
        %v2389 = vmax.f32 %v1963, %v2261
        %v2390 = vmax.f32 %v2034, %v2262
        %v2391 = vmax.f32 %v2036, %v2263
        %v2392 = vmax.f32 %v2107, %v2264
        %v2393 = vmax.f32 %v2109, %v2265
        %v2394 = vmax.f32 %v2180, %v2266
        %v2395 = vmax.f32 %v2182, %v2267
        %v2396 = vmax.f32 %v1675, %v2268
        %v2397 = vmax.f32 %v1677, %v2269
        %v2398 = vmax.f32 %v1748, %v2270
        %v2399 = vmax.f32 %v1750, %v2271
        %v2400 = vmax.f32 %v1821, %v2272
        %v2401 = vmax.f32 %v1823, %v2273
        %v2402 = vmax.f32 %v1894, %v2274
        %v2403 = vmax.f32 %v1896, %v2275
        %v2404 = vmax.f32 %v1967, %v2276
        %v2405 = vmax.f32 %v1969, %v2277
        %v2406 = vmax.f32 %v2040, %v2278
        %v2407 = vmax.f32 %v2042, %v2279
        %v2408 = vmax.f32 %v2113, %v2280
        %v2409 = vmax.f32 %v2115, %v2281
        %v2410 = vmax.f32 %v2186, %v2282
        %v2411 = vmax.f32 %v2188, %v2283
        %v2412 = vmax.f32 %v1679, %v2284
        %v2413 = vmax.f32 %v1681, %v2285
        %v2414 = vmax.f32 %v1752, %v2286
        %v2415 = vmax.f32 %v1754, %v2287
        %v2416 = vmax.f32 %v1825, %v2288
        %v2417 = vmax.f32 %v1827, %v2289
        %v2418 = vmax.f32 %v1898, %v2290
        %v2419 = vmax.f32 %v1900, %v2291
        %v2420 = vmax.f32 %v1971, %v2292
        %v2421 = vmax.f32 %v1973, %v2293
        %v2422 = vmax.f32 %v2044, %v2294
        %v2423 = vmax.f32 %v2046, %v2295
        %v2424 = vmax.f32 %v2117, %v2296
        %v2425 = vmax.f32 %v2119, %v2297
        %v2426 = vmax.f32 %v2190, %v2298
        %v2427 = vmax.f32 %v2192, %v2299
        %v2428 = vmax.f32 %v1685, %v2300
        %v2429 = vmax.f32 %v1687, %v2301
        %v2430 = vmax.f32 %v1758, %v2302
        %v2431 = vmax.f32 %v1760, %v2303
        %v2432 = vmax.f32 %v1831, %v2304
        %v2433 = vmax.f32 %v1833, %v2305
        %v2434 = vmax.f32 %v1904, %v2306
        %v2435 = vmax.f32 %v1906, %v2307
        %v2436 = vmax.f32 %v1977, %v2308
        %v2437 = vmax.f32 %v1979, %v2309
        %v2438 = vmax.f32 %v2050, %v2310
        %v2439 = vmax.f32 %v2052, %v2311
        %v2440 = vmax.f32 %v2123, %v2312
        %v2441 = vmax.f32 %v2125, %v2313
        %v2442 = vmax.f32 %v2196, %v2314
        %v2443 = vmax.f32 %v2198, %v2315
        %v2444 = vmax.f32 %v1689, %v2316
        %v2445 = vmax.f32 %v1691, %v2317
        %v2446 = vmax.f32 %v1762, %v2318
        %v2447 = vmax.f32 %v1764, %v2319
        %v2448 = vmax.f32 %v1835, %v2320
        %v2449 = vmax.f32 %v1837, %v2321
        %v2450 = vmax.f32 %v1908, %v2322
        %v2451 = vmax.f32 %v1910, %v2323
        %v2452 = vmax.f32 %v1981, %v2324
        %v2453 = vmax.f32 %v1983, %v2325
        %v2454 = vmax.f32 %v2054, %v2326
        %v2455 = vmax.f32 %v2056, %v2327
        %v2456 = vmax.f32 %v2127, %v2328
        %v2457 = vmax.f32 %v2129, %v2329
        %v2458 = vmax.f32 %v2200, %v2330
        %v2459 = vmax.f32 %v2202, %v2331
        %v2460 = vpack.c.bf16 %v2348, %v2332
        %v2461 = vpack.c.bf16 %v2349, %v2333
        %v2462 = vpack.c.bf16 %v2350, %v2334
        %v2463 = vpack.c.bf16 %v2351, %v2335
        %v2464 = vpack.c.bf16 %v2352, %v2336
        %v2465 = vpack.c.bf16 %v2353, %v2337
        %v2466 = vpack.c.bf16 %v2354, %v2338
        %v2467 = vpack.c.bf16 %v2355, %v2339
        %v2468 = vpack.c.bf16 %v2356, %v2340
        %v2469 = vpack.c.bf16 %v2357, %v2341
        %v2470 = vpack.c.bf16 %v2358, %v2342
        %v2471 = vpack.c.bf16 %v2359, %v2343
        %v2472 = vpack.c.bf16 %v2360, %v2344
        %v2473 = vpack.c.bf16 %v2361, %v2345
        %v2474 = vpack.c.bf16 %v2362, %v2346
        %v2475 = vpack.c.bf16 %v2363, %v2347
        %v2476 = vpack.c.bf16 %v2380, %v2364
        %v2477 = vpack.c.bf16 %v2381, %v2365
        %v2478 = vpack.c.bf16 %v2382, %v2366
        %v2479 = vpack.c.bf16 %v2383, %v2367
        %v2480 = vpack.c.bf16 %v2384, %v2368
        %v2481 = vpack.c.bf16 %v2385, %v2369
        %v2482 = vpack.c.bf16 %v2386, %v2370
        %v2483 = vpack.c.bf16 %v2387, %v2371
        %v2484 = vpack.c.bf16 %v2388, %v2372
        %v2485 = vpack.c.bf16 %v2389, %v2373
        %v2486 = vpack.c.bf16 %v2390, %v2374
        %v2487 = vpack.c.bf16 %v2391, %v2375
        %v2488 = vpack.c.bf16 %v2392, %v2376
        %v2489 = vpack.c.bf16 %v2393, %v2377
        %v2490 = vpack.c.bf16 %v2394, %v2378
        %v2491 = vpack.c.bf16 %v2395, %v2379
        %v2492 = vpack.c.bf16 %v2412, %v2396
        %v2493 = vpack.c.bf16 %v2413, %v2397
        %v2494 = vpack.c.bf16 %v2414, %v2398
        %v2495 = vpack.c.bf16 %v2415, %v2399
        %v2496 = vpack.c.bf16 %v2416, %v2400
        %v2497 = vpack.c.bf16 %v2417, %v2401
        %v2498 = vpack.c.bf16 %v2418, %v2402
        %v2499 = vpack.c.bf16 %v2419, %v2403
        %v2500 = vpack.c.bf16 %v2420, %v2404
        %v2501 = vpack.c.bf16 %v2421, %v2405
        %v2502 = vpack.c.bf16 %v2422, %v2406
        %v2503 = vpack.c.bf16 %v2423, %v2407
        %v2504 = vpack.c.bf16 %v2424, %v2408
        %v2505 = vpack.c.bf16 %v2425, %v2409
        %v2506 = vpack.c.bf16 %v2426, %v2410
        %v2507 = vpack.c.bf16 %v2427, %v2411
        %v2508 = vpack.c.bf16 %v2444, %v2428
        %v2509 = vpack.c.bf16 %v2445, %v2429
        %v2510 = vpack.c.bf16 %v2446, %v2430
        %v2511 = vpack.c.bf16 %v2447, %v2431
        %v2512 = vpack.c.bf16 %v2448, %v2432
        %v2513 = vpack.c.bf16 %v2449, %v2433
        %v2514 = vpack.c.bf16 %v2450, %v2434
        %v2515 = vpack.c.bf16 %v2451, %v2435
        %v2516 = vpack.c.bf16 %v2452, %v2436
        %v2517 = vpack.c.bf16 %v2453, %v2437
        %v2518 = vpack.c.bf16 %v2454, %v2438
        %v2519 = vpack.c.bf16 %v2455, %v2439
        %v2520 = vpack.c.bf16 %v2456, %v2440
        %v2521 = vpack.c.bf16 %v2457, %v2441
        %v2522 = vpack.c.bf16 %v2458, %v2442
        %v2523 = vpack.c.bf16 %v2459, %v2443
        %v2588 = vunpack.c.l.b16 %v2460
        %v2589 = vunpack.c.l.b16 %v2461
        %v2590 = vunpack.c.l.b16 %v2462
        %v2591 = vunpack.c.l.b16 %v2463
        %v2592 = vunpack.c.l.b16 %v2464
        %v2593 = vunpack.c.l.b16 %v2465
        %v2594 = vunpack.c.l.b16 %v2466
        %v2595 = vunpack.c.l.b16 %v2467
        %v2596 = vunpack.c.l.b16 %v2468
        %v2597 = vunpack.c.l.b16 %v2469
        %v2598 = vunpack.c.l.b16 %v2470
        %v2599 = vunpack.c.l.b16 %v2471
        %v2600 = vunpack.c.l.b16 %v2472
        %v2601 = vunpack.c.l.b16 %v2473
        %v2602 = vunpack.c.l.b16 %v2474
        %v2603 = vunpack.c.l.b16 %v2475
        %v2604 = vunpack.c.h.b16 %v2460
        %v2605 = vunpack.c.h.b16 %v2461
        %v2606 = vunpack.c.h.b16 %v2462
        %v2607 = vunpack.c.h.b16 %v2463
        %v2608 = vunpack.c.h.b16 %v2464
        %v2609 = vunpack.c.h.b16 %v2465
        %v2610 = vunpack.c.h.b16 %v2466
        %v2611 = vunpack.c.h.b16 %v2467
        %v2612 = vunpack.c.h.b16 %v2468
        %v2613 = vunpack.c.h.b16 %v2469
        %v2614 = vunpack.c.h.b16 %v2470
        %v2615 = vunpack.c.h.b16 %v2471
        %v2616 = vunpack.c.h.b16 %v2472
        %v2617 = vunpack.c.h.b16 %v2473
        %v2618 = vunpack.c.h.b16 %v2474
        %v2619 = vunpack.c.h.b16 %v2475
        %v2620 = vunpack.c.l.b16 %v2476
        %v2621 = vunpack.c.l.b16 %v2477
        %v2622 = vunpack.c.l.b16 %v2478
        %v2623 = vunpack.c.l.b16 %v2479
        %v2624 = vunpack.c.l.b16 %v2480
        %v2625 = vunpack.c.l.b16 %v2481
        %v2626 = vunpack.c.l.b16 %v2482
        %v2627 = vunpack.c.l.b16 %v2483
        %v2628 = vunpack.c.l.b16 %v2484
        %v2629 = vunpack.c.l.b16 %v2485
        %v2630 = vunpack.c.l.b16 %v2486
        %v2631 = vunpack.c.l.b16 %v2487
        %v2632 = vunpack.c.l.b16 %v2488
        %v2633 = vunpack.c.l.b16 %v2489
        %v2634 = vunpack.c.l.b16 %v2490
        %v2635 = vunpack.c.l.b16 %v2491
        %v2636 = vunpack.c.h.b16 %v2476
        %v2637 = vunpack.c.h.b16 %v2477
        %v2638 = vunpack.c.h.b16 %v2478
        %v2639 = vunpack.c.h.b16 %v2479
        %v2640 = vunpack.c.h.b16 %v2480
        %v2641 = vunpack.c.h.b16 %v2481
        %v2642 = vunpack.c.h.b16 %v2482
        %v2643 = vunpack.c.h.b16 %v2483
        %v2644 = vunpack.c.h.b16 %v2484
        %v2645 = vunpack.c.h.b16 %v2485
        %v2646 = vunpack.c.h.b16 %v2486
        %v2647 = vunpack.c.h.b16 %v2487
        %v2648 = vunpack.c.h.b16 %v2488
        %v2649 = vunpack.c.h.b16 %v2489
        %v2650 = vunpack.c.h.b16 %v2490
        %v2651 = vunpack.c.h.b16 %v2491
        %v2652 = vunpack.c.l.b16 %v2492
        %v2653 = vunpack.c.l.b16 %v2493
        %v2654 = vunpack.c.l.b16 %v2494
        %v2655 = vunpack.c.l.b16 %v2495
        %v2656 = vunpack.c.l.b16 %v2496
        %v2657 = vunpack.c.l.b16 %v2497
        %v2658 = vunpack.c.l.b16 %v2498
        %v2659 = vunpack.c.l.b16 %v2499
        %v2660 = vunpack.c.l.b16 %v2500
        %v2661 = vunpack.c.l.b16 %v2501
        %v2662 = vunpack.c.l.b16 %v2502
        %v2663 = vunpack.c.l.b16 %v2503
        %v2664 = vunpack.c.l.b16 %v2504
        %v2665 = vunpack.c.l.b16 %v2505
        %v2666 = vunpack.c.l.b16 %v2506
        %v2667 = vunpack.c.l.b16 %v2507
        %v2668 = vunpack.c.h.b16 %v2492
        %v2669 = vunpack.c.h.b16 %v2493
        %v2670 = vunpack.c.h.b16 %v2494
        %v2671 = vunpack.c.h.b16 %v2495
        %v2672 = vunpack.c.h.b16 %v2496
        %v2673 = vunpack.c.h.b16 %v2497
        %v2674 = vunpack.c.h.b16 %v2498
        %v2675 = vunpack.c.h.b16 %v2499
        %v2676 = vunpack.c.h.b16 %v2500
        %v2677 = vunpack.c.h.b16 %v2501
        %v2678 = vunpack.c.h.b16 %v2502
        %v2679 = vunpack.c.h.b16 %v2503
        %v2680 = vunpack.c.h.b16 %v2504
        %v2681 = vunpack.c.h.b16 %v2505
        %v2682 = vunpack.c.h.b16 %v2506
        %v2683 = vunpack.c.h.b16 %v2507
        %v2684 = vunpack.c.l.b16 %v2508
        %v2685 = vunpack.c.l.b16 %v2509
        %v2686 = vunpack.c.l.b16 %v2510
        %v2687 = vunpack.c.l.b16 %v2511
        %v2688 = vunpack.c.l.b16 %v2512
        %v2689 = vunpack.c.l.b16 %v2513
        %v2690 = vunpack.c.l.b16 %v2514
        %v2691 = vunpack.c.l.b16 %v2515
        %v2692 = vunpack.c.l.b16 %v2516
        %v2693 = vunpack.c.l.b16 %v2517
        %v2694 = vunpack.c.l.b16 %v2518
        %v2695 = vunpack.c.l.b16 %v2519
        %v2696 = vunpack.c.l.b16 %v2520
        %v2697 = vunpack.c.l.b16 %v2521
        %v2698 = vunpack.c.l.b16 %v2522
        %v2699 = vunpack.c.l.b16 %v2523
        %v2700 = vunpack.c.h.b16 %v2508
        %v2701 = vunpack.c.h.b16 %v2509
        %v2702 = vunpack.c.h.b16 %v2510
        %v2703 = vunpack.c.h.b16 %v2511
        %v2704 = vunpack.c.h.b16 %v2512
        %v2705 = vunpack.c.h.b16 %v2513
        %v2706 = vunpack.c.h.b16 %v2514
        %v2707 = vunpack.c.h.b16 %v2515
        %v2708 = vunpack.c.h.b16 %v2516
        %v2709 = vunpack.c.h.b16 %v2517
        %v2710 = vunpack.c.h.b16 %v2518
        %v2711 = vunpack.c.h.b16 %v2519
        %v2712 = vunpack.c.h.b16 %v2520
        %v2713 = vunpack.c.h.b16 %v2521
        %v2714 = vunpack.c.h.b16 %v2522
        %v2715 = vunpack.c.h.b16 %v2523
        %v2716 = vpack.c.b16 %v2589, %v2588
        %v2717 = vpack.c.b16 %v2591, %v2590
        %v2718 = vpack.c.b16 %v2593, %v2592
        %v2719 = vpack.c.b16 %v2595, %v2594
        %v2720 = vpack.c.b16 %v2597, %v2596
        %v2721 = vpack.c.b16 %v2599, %v2598
        %v2722 = vpack.c.b16 %v2601, %v2600
        %v2723 = vpack.c.b16 %v2603, %v2602
        %v2724 = vpack.c.b16 %v2605, %v2604
        %v2725 = vpack.c.b16 %v2607, %v2606
        %v2726 = vpack.c.b16 %v2609, %v2608
        %v2727 = vpack.c.b16 %v2611, %v2610
        %v2728 = vpack.c.b16 %v2613, %v2612
        %v2729 = vpack.c.b16 %v2615, %v2614
        %v2730 = vpack.c.b16 %v2617, %v2616
        %v2731 = vpack.c.b16 %v2619, %v2618
        %v2732 = vpack.c.b16 %v2621, %v2620
        %v2733 = vpack.c.b16 %v2623, %v2622
        %v2734 = vpack.c.b16 %v2625, %v2624
        %v2735 = vpack.c.b16 %v2627, %v2626
        %v2736 = vpack.c.b16 %v2629, %v2628
        %v2737 = vpack.c.b16 %v2631, %v2630
        %v2738 = vpack.c.b16 %v2633, %v2632
        %v2739 = vpack.c.b16 %v2635, %v2634
        %v2740 = vpack.c.b16 %v2637, %v2636
        %v2741 = vpack.c.b16 %v2639, %v2638
        %v2742 = vpack.c.b16 %v2641, %v2640
        %v2743 = vpack.c.b16 %v2643, %v2642
        %v2744 = vpack.c.b16 %v2645, %v2644
        %v2745 = vpack.c.b16 %v2647, %v2646
        %v2746 = vpack.c.b16 %v2649, %v2648
        %v2747 = vpack.c.b16 %v2651, %v2650
        %v2748 = vpack.c.b16 %v2653, %v2652
        %v2749 = vpack.c.b16 %v2655, %v2654
        %v2750 = vpack.c.b16 %v2657, %v2656
        %v2751 = vpack.c.b16 %v2659, %v2658
        %v2752 = vpack.c.b16 %v2661, %v2660
        %v2753 = vpack.c.b16 %v2663, %v2662
        %v2754 = vpack.c.b16 %v2665, %v2664
        %v2755 = vpack.c.b16 %v2667, %v2666
        %v2756 = vpack.c.b16 %v2669, %v2668
        %v2757 = vpack.c.b16 %v2671, %v2670
        %v2758 = vpack.c.b16 %v2673, %v2672
        %v2759 = vpack.c.b16 %v2675, %v2674
        %v2760 = vpack.c.b16 %v2677, %v2676
        %v2761 = vpack.c.b16 %v2679, %v2678
        %v2762 = vpack.c.b16 %v2681, %v2680
        %v2763 = vpack.c.b16 %v2683, %v2682
        %v2764 = vpack.c.b16 %v2685, %v2684
        %v2765 = vpack.c.b16 %v2687, %v2686
        %v2766 = vpack.c.b16 %v2689, %v2688
        %v2767 = vpack.c.b16 %v2691, %v2690
        %v2768 = vpack.c.b16 %v2693, %v2692
        %v2769 = vpack.c.b16 %v2695, %v2694
        %v2770 = vpack.c.b16 %v2697, %v2696
        %v2771 = vpack.c.b16 %v2699, %v2698
        %v2772 = vpack.c.b16 %v2701, %v2700
        %v2773 = vpack.c.b16 %v2703, %v2702
        %v2774 = vpack.c.b16 %v2705, %v2704
        %v2775 = vpack.c.b16 %v2707, %v2706
        %v2776 = vpack.c.b16 %v2709, %v2708
        %v2777 = vpack.c.b16 %v2711, %v2710
        %v2778 = vpack.c.b16 %v2713, %v2712
        %v2779 = vpack.c.b16 %v2715, %v2714
        %2844 = vst [vmem:[%s437] sm:$0xff] %v2716
        %2845 = vst [vmem:[%s437 + $0x8] sm:$0xff] %v2717
        %2846 = vst [vmem:[%s437 + $0x10] sm:$0xff] %v2718
        %2847 = vst [vmem:[%s437 + $0x18] sm:$0xff] %v2719
        %2848 = vst [vmem:[%s437 + $0x20] sm:$0xff] %v2720
        %2849 = vst [vmem:[%s437 + $0x28] sm:$0xff] %v2721
        %2850 = vst [vmem:[%s437 + $0x30] sm:$0xff] %v2722
        %2851 = vst [vmem:[%s437 + $0x38] sm:$0xff] %v2723
        %2852 = vst [vmem:[%s437 + $0x40] sm:$0xff] %v2724
        %2853 = vst [vmem:[%s437 + $0x48] sm:$0xff] %v2725
        %2854 = vst [vmem:[%s437 + $0x50] sm:$0xff] %v2726
        %2855 = vst [vmem:[%s437 + $0x58] sm:$0xff] %v2727
        %2856 = vst [vmem:[%s437 + $0x60] sm:$0xff] %v2728
        %2857 = vst [vmem:[%s437 + $0x68] sm:$0xff] %v2729
        %2858 = vst [vmem:[%s437 + $0x70] sm:$0xff] %v2730
        %2859 = vst [vmem:[%s437 + $0x78] sm:$0xff] %v2731
        %2860 = vst [vmem:[%s437 + $0x80] sm:$0xff] %v2732
        %2861 = vst [vmem:[%s437 + $0x88] sm:$0xff] %v2733
        %2862 = vst [vmem:[%s437 + $0x90] sm:$0xff] %v2734
        %2863 = vst [vmem:[%s437 + $0x98] sm:$0xff] %v2735
        %2864 = vst [vmem:[%s437 + $0xa0] sm:$0xff] %v2736
        %2865 = vst [vmem:[%s437 + $0xa8] sm:$0xff] %v2737
        %2866 = vst [vmem:[%s437 + $0xb0] sm:$0xff] %v2738
        %2867 = vst [vmem:[%s437 + $0xb8] sm:$0xff] %v2739
        %2868 = vst [vmem:[%s437 + $0xc0] sm:$0xff] %v2740
        %2869 = vst [vmem:[%s437 + $0xc8] sm:$0xff] %v2741
        %2870 = vst [vmem:[%s437 + $0xd0] sm:$0xff] %v2742
        %2871 = vst [vmem:[%s437 + $0xd8] sm:$0xff] %v2743
        %2872 = vst [vmem:[%s437 + $0xe0] sm:$0xff] %v2744
        %2873 = vst [vmem:[%s437 + $0xe8] sm:$0xff] %v2745
        %2874 = vst [vmem:[%s437 + $0xf0] sm:$0xff] %v2746
        %2875 = vst [vmem:[%s437 + $0xf8] sm:$0xff] %v2747
        %2876 = vst [vmem:[%s437 + $0x100] sm:$0xff] %v2748
        %2877 = vst [vmem:[%s437 + $0x108] sm:$0xff] %v2749
        %2878 = vst [vmem:[%s437 + $0x110] sm:$0xff] %v2750
        %2879 = vst [vmem:[%s437 + $0x118] sm:$0xff] %v2751
        %2880 = vst [vmem:[%s437 + $0x120] sm:$0xff] %v2752
        %2881 = vst [vmem:[%s437 + $0x128] sm:$0xff] %v2753
        %2882 = vst [vmem:[%s437 + $0x130] sm:$0xff] %v2754
        %2883 = vst [vmem:[%s437 + $0x138] sm:$0xff] %v2755
        %2884 = vst [vmem:[%s437 + $0x140] sm:$0xff] %v2756
        %2885 = vst [vmem:[%s437 + $0x148] sm:$0xff] %v2757
        %2886 = vst [vmem:[%s437 + $0x150] sm:$0xff] %v2758
        %2887 = vst [vmem:[%s437 + $0x158] sm:$0xff] %v2759
        %2888 = vst [vmem:[%s437 + $0x160] sm:$0xff] %v2760
        %2889 = vst [vmem:[%s437 + $0x168] sm:$0xff] %v2761
        %2890 = vst [vmem:[%s437 + $0x170] sm:$0xff] %v2762
        %2891 = vst [vmem:[%s437 + $0x178] sm:$0xff] %v2763
        %2892 = vst [vmem:[%s437 + $0x180] sm:$0xff] %v2764
        %2893 = vst [vmem:[%s437 + $0x188] sm:$0xff] %v2765
        %2894 = vst [vmem:[%s437 + $0x190] sm:$0xff] %v2766
        %2895 = vst [vmem:[%s437 + $0x198] sm:$0xff] %v2767
        %2896 = vst [vmem:[%s437 + $0x1a0] sm:$0xff] %v2768
        %2897 = vst [vmem:[%s437 + $0x1a8] sm:$0xff] %v2769
        %2898 = vst [vmem:[%s437 + $0x1b0] sm:$0xff] %v2770
        %2899 = vst [vmem:[%s437 + $0x1b8] sm:$0xff] %v2771
        %2900 = vst [vmem:[%s437 + $0x1c0] sm:$0xff] %v2772
        %2901 = vst [vmem:[%s437 + $0x1c8] sm:$0xff] %v2773
        %2902 = vst [vmem:[%s437 + $0x1d0] sm:$0xff] %v2774
        %2903 = vst [vmem:[%s437 + $0x1d8] sm:$0xff] %v2775
        %2904 = vst [vmem:[%s437 + $0x1e0] sm:$0xff] %v2776
        %2905 = vst [vmem:[%s437 + $0x1e8] sm:$0xff] %v2777
        %2906 = vst [vmem:[%s437 + $0x1f0] sm:$0xff] %v2778
        %2907 = vst [vmem:[%s437 + $0x1f8] sm:$0xff] %v2779
        %v2908 = vld [vmem:[%s5] sm:$0xf]
        %v2909 = vld [vmem:[%s5 + $0x4] sm:$0xf]
        %v2910 = vld [vmem:[%s5 + $0x8] sm:$0xf]
        %v2911 = vld [vmem:[%s5 + $0xc] sm:$0xf]
        %v2912 = vld [vmem:[%s6] sm:$0xf]
        %v2913 = vld [vmem:[%s6 + $0x4] sm:$0xf]
        %v2914 = vld [vmem:[%s6 + $0x8] sm:$0xf]
        %v2915 = vld [vmem:[%s6 + $0xc] sm:$0xf]
        %v2916 = vld [vmem:[%s7] sm:$0xff]
        %v2917 = vld [vmem:[%s7 + $0x8] sm:$0xff]
        %v2918 = vld [vmem:[%s7 + $0x10] sm:$0xff]
        %v2919 = vld [vmem:[%s7 + $0x18] sm:$0xff]
        %v2924 = vunpack.c.l.b16 %v2912
        %v2925 = vunpack.c.l.b16 %v2913
        %v2926 = vunpack.c.l.b16 %v2914
        %v2927 = vunpack.c.l.b16 %v2915
        %v2928 = vpack.c.b16 %v2925, %v2924
        %v2929 = vpack.c.b16 %v2927, %v2926
        %v2931 = vsel %vm614, %v2928, 0
        %v2934 = vsel %vm614, %v2929, 0
        %2936 = vmatprep.subr.bf16.mxu0 %v583
        %2937 = vmatpush1.bf16.msra.mxu0 %v582
        %2938 = vmatprep.subr.bf16.mxu0 0
        %2939 = vmatpush1.bf16.msra.mxu0 0
        %2940 = vmatprep.subr.bf16.mxu0 0
        %2941 = vmatpush1.bf16.msra.mxu0 0
        %2942 = vmatprep.subr.bf16.mxu0 0
        %2943 = vmatpush1.bf16.msra.mxu0 0
        %2944 = vmatprep.subr.bf16.mxu0 0
        %2945 = vmatpush1.bf16.msra.mxu0 0
        %2946 = vmatprep.subr.bf16.mxu0 0
        %2947 = vmatpush1.bf16.msra.mxu0 0
        %2948 = vmatprep.subr.bf16.mxu0 0
        %2949 = vmatpush1.bf16.msra.mxu0 0
        %2950 = vmatprep.subr.bf16.mxu0 0
        %2951 = vmatpush1.bf16.msra.mxu0 0
        %2952 = vmatprep.subr.bf16.mxu0 0
        %2953 = vmatpush1.bf16.msra.mxu0 0
        %2954 = vmatprep.subr.bf16.mxu0 0
        %2955 = vmatpush1.bf16.msra.mxu0 0
        %2956 = vmatprep.subr.bf16.mxu0 0
        %2957 = vmatpush1.bf16.msra.mxu0 0
        %2958 = vmatprep.subr.bf16.mxu0 0
        %2959 = vmatpush1.bf16.msra.mxu0 0
        %2960 = vmatprep.subr.bf16.mxu0 0
        %2961 = vmatpush1.bf16.msra.mxu0 0
        %2962 = vmatprep.subr.bf16.mxu0 0
        %2963 = vmatpush1.bf16.msra.mxu0 0
        %2964 = vmatprep.subr.bf16.mxu0 0
        %2965 = vmatpush1.bf16.msra.mxu0 0
        %2966 = vmatprep.subr.bf16.mxu0 0
        %2967 = vmatpush1.bf16.msra.mxu0 0
        %2968 = vmatprep.mubr.bf16.mxu0 0
        %2969 = vmatmul.mubr.bf16.gmra.mrb[0].mxu0 %v2931
        %v2970 = vpop.f32.mrb[0].mxu0
        %v2971 = vadd.f32 0.0, %v2970
        %v2972 = vpop.f32.mrb[0].mxu0
        %v2973 = vadd.f32 0.0, %v2972
        %v2974 = vpop.f32.mrb[0].mxu0
        %v2975 = vadd.f32 0.0, %v2974
        %v2976 = vpop.f32.mrb[0].mxu0
        %v2977 = vadd.f32 0.0, %v2976
        %2978 = vmatprep.mubr.bf16.mxu0 0
        %2979 = vmatmul.mubr.bf16.gmra.mrb[0].mxu0 %v2934
        %v2980 = vpop.f32.mrb[0].mxu0
        %v2981 = vadd.f32 0.0, %v2980
        %v2982 = vpop.f32.mrb[0].mxu0
        %v2983 = vadd.f32 0.0, %v2982
        %v2984 = vpop.f32.mrb[0].mxu0
        %v2985 = vadd.f32 0.0, %v2984
        %v2986 = vpop.f32.mrb[0].mxu0
        %v2987 = vadd.f32 0.0, %v2986
        %2988 = vdwg.mxu0
        %2989 = vmatprep.subr.bf16.mxu0 %v585
        %2990 = vmatpush1.bf16.msra.mxu0 %v584
        %2991 = vmatprep.subr.bf16.mxu0 0
        %2992 = vmatpush1.bf16.msra.mxu0 0
        %2993 = vmatprep.subr.bf16.mxu0 0
        %2994 = vmatpush1.bf16.msra.mxu0 0
        %2995 = vmatprep.subr.bf16.mxu0 0
        %2996 = vmatpush1.bf16.msra.mxu0 0
        %2997 = vmatprep.subr.bf16.mxu0 0
        %2998 = vmatpush1.bf16.msra.mxu0 0
        %2999 = vmatprep.subr.bf16.mxu0 0
        %3000 = vmatpush1.bf16.msra.mxu0 0
        %3001 = vmatprep.subr.bf16.mxu0 0
        %3002 = vmatpush1.bf16.msra.mxu0 0
        %3003 = vmatprep.subr.bf16.mxu0 0
        %3004 = vmatpush1.bf16.msra.mxu0 0
        %3005 = vmatprep.subr.bf16.mxu0 0
        %3006 = vmatpush1.bf16.msra.mxu0 0
        %3007 = vmatprep.subr.bf16.mxu0 0
        %3008 = vmatpush1.bf16.msra.mxu0 0
        %3009 = vmatprep.subr.bf16.mxu0 0
        %3010 = vmatpush1.bf16.msra.mxu0 0
        %3011 = vmatprep.subr.bf16.mxu0 0
        %3012 = vmatpush1.bf16.msra.mxu0 0
        %3013 = vmatprep.subr.bf16.mxu0 0
        %3014 = vmatpush1.bf16.msra.mxu0 0
        %3015 = vmatprep.subr.bf16.mxu0 0
        %3016 = vmatpush1.bf16.msra.mxu0 0
        %3017 = vmatprep.subr.bf16.mxu0 0
        %3018 = vmatpush1.bf16.msra.mxu0 0
        %3019 = vmatprep.subr.bf16.mxu0 0
        %3020 = vmatpush1.bf16.msra.mxu0 0
        %3021 = vmatprep.mubr.bf16.mxu0 0
        %3022 = vmatmul.mubr.bf16.gmra.mrb[0].mxu0 %v2931
        %v3023 = vpop.f32.mrb[0].mxu0
        %v3024 = vadd.f32 0.0, %v3023
        %v3025 = vpop.f32.mrb[0].mxu0
        %v3026 = vadd.f32 0.0, %v3025
        %v3027 = vpop.f32.mrb[0].mxu0
        %v3028 = vadd.f32 0.0, %v3027
        %v3029 = vpop.f32.mrb[0].mxu0
        %v3030 = vadd.f32 0.0, %v3029
        %3031 = vmatprep.mubr.bf16.mxu0 0
        %3032 = vmatmul.mubr.bf16.gmra.mrb[0].mxu0 %v2934
        %v3033 = vpop.f32.mrb[0].mxu0
        %v3034 = vadd.f32 0.0, %v3033
        %v3035 = vpop.f32.mrb[0].mxu0
        %v3036 = vadd.f32 0.0, %v3035
        %v3037 = vpop.f32.mrb[0].mxu0
        %v3038 = vadd.f32 0.0, %v3037
        %v3039 = vpop.f32.mrb[0].mxu0
        %v3040 = vadd.f32 0.0, %v3039
        %3041 = vdwg.mxu0
        %3042 = vmatprep.subr.bf16.mxu0 %v587
        %3043 = vmatpush1.bf16.msra.mxu0 %v586
        %3044 = vmatprep.subr.bf16.mxu0 0
        %3045 = vmatpush1.bf16.msra.mxu0 0
        %3046 = vmatprep.subr.bf16.mxu0 0
        %3047 = vmatpush1.bf16.msra.mxu0 0
        %3048 = vmatprep.subr.bf16.mxu0 0
        %3049 = vmatpush1.bf16.msra.mxu0 0
        %3050 = vmatprep.subr.bf16.mxu0 0
        %3051 = vmatpush1.bf16.msra.mxu0 0
        %3052 = vmatprep.subr.bf16.mxu0 0
        %3053 = vmatpush1.bf16.msra.mxu0 0
        %3054 = vmatprep.subr.bf16.mxu0 0
        %3055 = vmatpush1.bf16.msra.mxu0 0
        %3056 = vmatprep.subr.bf16.mxu0 0
        %3057 = vmatpush1.bf16.msra.mxu0 0
        %3058 = vmatprep.subr.bf16.mxu0 0
        %3059 = vmatpush1.bf16.msra.mxu0 0
        %3060 = vmatprep.subr.bf16.mxu0 0
        %3061 = vmatpush1.bf16.msra.mxu0 0
        %3062 = vmatprep.subr.bf16.mxu0 0
        %3063 = vmatpush1.bf16.msra.mxu0 0
        %3064 = vmatprep.subr.bf16.mxu0 0
        %3065 = vmatpush1.bf16.msra.mxu0 0
        %3066 = vmatprep.subr.bf16.mxu0 0
        %3067 = vmatpush1.bf16.msra.mxu0 0
        %3068 = vmatprep.subr.bf16.mxu0 0
        %3069 = vmatpush1.bf16.msra.mxu0 0
        %3070 = vmatprep.subr.bf16.mxu0 0
        %3071 = vmatpush1.bf16.msra.mxu0 0
        %3072 = vmatprep.subr.bf16.mxu0 0
        %3073 = vmatpush1.bf16.msra.mxu0 0
        %3074 = vmatprep.mubr.bf16.mxu0 0
        %3075 = vmatmul.mubr.bf16.gmra.mrb[0].mxu0 %v2931
        %v3076 = vpop.f32.mrb[0].mxu0
        %v3077 = vadd.f32 0.0, %v3076
        %v3078 = vpop.f32.mrb[0].mxu0
        %v3079 = vadd.f32 0.0, %v3078
        %v3080 = vpop.f32.mrb[0].mxu0
        %v3081 = vadd.f32 0.0, %v3080
        %v3082 = vpop.f32.mrb[0].mxu0
        %v3083 = vadd.f32 0.0, %v3082
        %3084 = vmatprep.mubr.bf16.mxu0 0
        %3085 = vmatmul.mubr.bf16.gmra.mrb[0].mxu0 %v2934
        %v3086 = vpop.f32.mrb[0].mxu0
        %v3087 = vadd.f32 0.0, %v3086
        %v3088 = vpop.f32.mrb[0].mxu0
        %v3089 = vadd.f32 0.0, %v3088
        %v3090 = vpop.f32.mrb[0].mxu0
        %v3091 = vadd.f32 0.0, %v3090
        %v3092 = vpop.f32.mrb[0].mxu0
        %v3093 = vadd.f32 0.0, %v3092
        %3094 = vdwg.mxu0
        %3095 = vmatprep.subr.bf16.mxu0 %v589
        %3096 = vmatpush1.bf16.msra.mxu0 %v588
        %3097 = vmatprep.subr.bf16.mxu0 0
        %3098 = vmatpush1.bf16.msra.mxu0 0
        %3099 = vmatprep.subr.bf16.mxu0 0
        %3100 = vmatpush1.bf16.msra.mxu0 0
        %3101 = vmatprep.subr.bf16.mxu0 0
        %3102 = vmatpush1.bf16.msra.mxu0 0
        %3103 = vmatprep.subr.bf16.mxu0 0
        %3104 = vmatpush1.bf16.msra.mxu0 0
        %3105 = vmatprep.subr.bf16.mxu0 0
        %3106 = vmatpush1.bf16.msra.mxu0 0
        %3107 = vmatprep.subr.bf16.mxu0 0
        %3108 = vmatpush1.bf16.msra.mxu0 0
        %3109 = vmatprep.subr.bf16.mxu0 0
        %3110 = vmatpush1.bf16.msra.mxu0 0
        %3111 = vmatprep.subr.bf16.mxu0 0
        %3112 = vmatpush1.bf16.msra.mxu0 0
        %3113 = vmatprep.subr.bf16.mxu0 0
        %3114 = vmatpush1.bf16.msra.mxu0 0
        %3115 = vmatprep.subr.bf16.mxu0 0
        %3116 = vmatpush1.bf16.msra.mxu0 0
        %3117 = vmatprep.subr.bf16.mxu0 0
        %3118 = vmatpush1.bf16.msra.mxu0 0
        %3119 = vmatprep.subr.bf16.mxu0 0
        %3120 = vmatpush1.bf16.msra.mxu0 0
        %3121 = vmatprep.subr.bf16.mxu0 0
        %3122 = vmatpush1.bf16.msra.mxu0 0
        %3123 = vmatprep.subr.bf16.mxu0 0
        %3124 = vmatpush1.bf16.msra.mxu0 0
        %3125 = vmatprep.subr.bf16.mxu0 0
        %3126 = vmatpush1.bf16.msra.mxu0 0
        %3127 = vmatprep.mubr.bf16.mxu0 0
        %3128 = vmatmul.mubr.bf16.gmra.mrb[0].mxu0 %v2931
        %v3129 = vpop.f32.mrb[0].mxu0
        %v3130 = vadd.f32 0.0, %v3129
        %v3131 = vpop.f32.mrb[0].mxu0
        %v3132 = vadd.f32 0.0, %v3131
        %v3133 = vpop.f32.mrb[0].mxu0
        %v3134 = vadd.f32 0.0, %v3133
        %v3135 = vpop.f32.mrb[0].mxu0
        %v3136 = vadd.f32 0.0, %v3135
        %3137 = vmatprep.mubr.bf16.mxu0 0
        %3138 = vmatmul.mubr.bf16.gmra.mrb[0].mxu0 %v2934
        %v3139 = vpop.f32.mrb[0].mxu0
        %v3140 = vadd.f32 0.0, %v3139
        %v3141 = vpop.f32.mrb[0].mxu0
        %v3142 = vadd.f32 0.0, %v3141
        %v3143 = vpop.f32.mrb[0].mxu0
        %v3144 = vadd.f32 0.0, %v3143
        %v3145 = vpop.f32.mrb[0].mxu0
        %v3146 = vadd.f32 0.0, %v3145
        %3147 = vdwg.mxu0
        %3148 = vmatprep.subr.bf16.mxu0 %v591
        %3149 = vmatpush1.bf16.msra.mxu0 %v590
        %3150 = vmatprep.subr.bf16.mxu0 0
        %3151 = vmatpush1.bf16.msra.mxu0 0
        %3152 = vmatprep.subr.bf16.mxu0 0
        %3153 = vmatpush1.bf16.msra.mxu0 0
        %3154 = vmatprep.subr.bf16.mxu0 0
        %3155 = vmatpush1.bf16.msra.mxu0 0
        %3156 = vmatprep.subr.bf16.mxu0 0
        %3157 = vmatpush1.bf16.msra.mxu0 0
        %3158 = vmatprep.subr.bf16.mxu0 0
        %3159 = vmatpush1.bf16.msra.mxu0 0
        %3160 = vmatprep.subr.bf16.mxu0 0
        %3161 = vmatpush1.bf16.msra.mxu0 0
        %3162 = vmatprep.subr.bf16.mxu0 0
        %3163 = vmatpush1.bf16.msra.mxu0 0
        %3164 = vmatprep.subr.bf16.mxu0 0
        %3165 = vmatpush1.bf16.msra.mxu0 0
        %3166 = vmatprep.subr.bf16.mxu0 0
        %3167 = vmatpush1.bf16.msra.mxu0 0
        %3168 = vmatprep.subr.bf16.mxu0 0
        %3169 = vmatpush1.bf16.msra.mxu0 0
        %3170 = vmatprep.subr.bf16.mxu0 0
        %3171 = vmatpush1.bf16.msra.mxu0 0
        %3172 = vmatprep.subr.bf16.mxu0 0
        %3173 = vmatpush1.bf16.msra.mxu0 0
        %3174 = vmatprep.subr.bf16.mxu0 0
        %3175 = vmatpush1.bf16.msra.mxu0 0
        %3176 = vmatprep.subr.bf16.mxu0 0
        %3177 = vmatpush1.bf16.msra.mxu0 0
        %3178 = vmatprep.subr.bf16.mxu0 0
        %3179 = vmatpush1.bf16.msra.mxu0 0
        %3180 = vmatprep.mubr.bf16.mxu0 0
        %3181 = vmatmul.mubr.bf16.gmra.mrb[0].mxu0 %v2931
        %v3182 = vpop.f32.mrb[0].mxu0
        %v3183 = vadd.f32 0.0, %v3182
        %v3184 = vpop.f32.mrb[0].mxu0
        %v3185 = vadd.f32 0.0, %v3184
        %v3186 = vpop.f32.mrb[0].mxu0
        %v3187 = vadd.f32 0.0, %v3186
        %v3188 = vpop.f32.mrb[0].mxu0
        %v3189 = vadd.f32 0.0, %v3188
        %3190 = vmatprep.mubr.bf16.mxu0 0
        %3191 = vmatmul.mubr.bf16.gmra.mrb[0].mxu0 %v2934
        %v3192 = vpop.f32.mrb[0].mxu0
        %v3193 = vadd.f32 0.0, %v3192
        %v3194 = vpop.f32.mrb[0].mxu0
        %v3195 = vadd.f32 0.0, %v3194
        %v3196 = vpop.f32.mrb[0].mxu0
        %v3197 = vadd.f32 0.0, %v3196
        %v3198 = vpop.f32.mrb[0].mxu0
        %v3199 = vadd.f32 0.0, %v3198
        %3200 = vdwg.mxu0
        %3201 = vmatprep.subr.bf16.mxu0 %v593
        %3202 = vmatpush1.bf16.msra.mxu0 %v592
        %3203 = vmatprep.subr.bf16.mxu0 0
        %3204 = vmatpush1.bf16.msra.mxu0 0
        %3205 = vmatprep.subr.bf16.mxu0 0
        %3206 = vmatpush1.bf16.msra.mxu0 0
        %3207 = vmatprep.subr.bf16.mxu0 0
        %3208 = vmatpush1.bf16.msra.mxu0 0
        %3209 = vmatprep.subr.bf16.mxu0 0
        %3210 = vmatpush1.bf16.msra.mxu0 0
        %3211 = vmatprep.subr.bf16.mxu0 0
        %3212 = vmatpush1.bf16.msra.mxu0 0
        %3213 = vmatprep.subr.bf16.mxu0 0
        %3214 = vmatpush1.bf16.msra.mxu0 0
        %3215 = vmatprep.subr.bf16.mxu0 0
        %3216 = vmatpush1.bf16.msra.mxu0 0
        %3217 = vmatprep.subr.bf16.mxu0 0
        %3218 = vmatpush1.bf16.msra.mxu0 0
        %3219 = vmatprep.subr.bf16.mxu0 0
        %3220 = vmatpush1.bf16.msra.mxu0 0
        %3221 = vmatprep.subr.bf16.mxu0 0
        %3222 = vmatpush1.bf16.msra.mxu0 0
        %3223 = vmatprep.subr.bf16.mxu0 0
        %3224 = vmatpush1.bf16.msra.mxu0 0
        %3225 = vmatprep.subr.bf16.mxu0 0
        %3226 = vmatpush1.bf16.msra.mxu0 0
        %3227 = vmatprep.subr.bf16.mxu0 0
        %3228 = vmatpush1.bf16.msra.mxu0 0
        %3229 = vmatprep.subr.bf16.mxu0 0
        %3230 = vmatpush1.bf16.msra.mxu0 0
        %3231 = vmatprep.subr.bf16.mxu0 0
        %3232 = vmatpush1.bf16.msra.mxu0 0
        %3233 = vmatprep.mubr.bf16.mxu0 0
        %3234 = vmatmul.mubr.bf16.gmra.mrb[0].mxu0 %v2931
        %v3235 = vpop.f32.mrb[0].mxu0
        %v3236 = vadd.f32 0.0, %v3235
        %v3237 = vpop.f32.mrb[0].mxu0
        %v3238 = vadd.f32 0.0, %v3237
        %v3239 = vpop.f32.mrb[0].mxu0
        %v3240 = vadd.f32 0.0, %v3239
        %v3241 = vpop.f32.mrb[0].mxu0
        %v3242 = vadd.f32 0.0, %v3241
        %3243 = vmatprep.mubr.bf16.mxu0 0
        %3244 = vmatmul.mubr.bf16.gmra.mrb[0].mxu0 %v2934
        %v3245 = vpop.f32.mrb[0].mxu0
        %v3246 = vadd.f32 0.0, %v3245
        %v3247 = vpop.f32.mrb[0].mxu0
        %v3248 = vadd.f32 0.0, %v3247
        %v3249 = vpop.f32.mrb[0].mxu0
        %v3250 = vadd.f32 0.0, %v3249
        %v3251 = vpop.f32.mrb[0].mxu0
        %v3252 = vadd.f32 0.0, %v3251
        %3253 = vdwg.mxu0
        %3254 = vmatprep.subr.bf16.mxu0 %v595
        %3255 = vmatpush1.bf16.msra.mxu0 %v594
        %3256 = vmatprep.subr.bf16.mxu0 0
        %3257 = vmatpush1.bf16.msra.mxu0 0
        %3258 = vmatprep.subr.bf16.mxu0 0
        %3259 = vmatpush1.bf16.msra.mxu0 0
        %3260 = vmatprep.subr.bf16.mxu0 0
        %3261 = vmatpush1.bf16.msra.mxu0 0
        %3262 = vmatprep.subr.bf16.mxu0 0
        %3263 = vmatpush1.bf16.msra.mxu0 0
        %3264 = vmatprep.subr.bf16.mxu0 0
        %3265 = vmatpush1.bf16.msra.mxu0 0
        %3266 = vmatprep.subr.bf16.mxu0 0
        %3267 = vmatpush1.bf16.msra.mxu0 0
        %3268 = vmatprep.subr.bf16.mxu0 0
        %3269 = vmatpush1.bf16.msra.mxu0 0
        %3270 = vmatprep.subr.bf16.mxu0 0
        %3271 = vmatpush1.bf16.msra.mxu0 0
        %3272 = vmatprep.subr.bf16.mxu0 0
        %3273 = vmatpush1.bf16.msra.mxu0 0
        %3274 = vmatprep.subr.bf16.mxu0 0
        %3275 = vmatpush1.bf16.msra.mxu0 0
        %3276 = vmatprep.subr.bf16.mxu0 0
        %3277 = vmatpush1.bf16.msra.mxu0 0
        %3278 = vmatprep.subr.bf16.mxu0 0
        %3279 = vmatpush1.bf16.msra.mxu0 0
        %3280 = vmatprep.subr.bf16.mxu0 0
        %3281 = vmatpush1.bf16.msra.mxu0 0
        %3282 = vmatprep.subr.bf16.mxu0 0
        %3283 = vmatpush1.bf16.msra.mxu0 0
        %3284 = vmatprep.subr.bf16.mxu0 0
        %3285 = vmatpush1.bf16.msra.mxu0 0
        %3286 = vmatprep.mubr.bf16.mxu0 0
        %3287 = vmatmul.mubr.bf16.gmra.mrb[0].mxu0 %v2931
        %v3288 = vpop.f32.mrb[0].mxu0
        %v3289 = vadd.f32 0.0, %v3288
        %v3290 = vpop.f32.mrb[0].mxu0
        %v3291 = vadd.f32 0.0, %v3290
        %v3292 = vpop.f32.mrb[0].mxu0
        %v3293 = vadd.f32 0.0, %v3292
        %v3294 = vpop.f32.mrb[0].mxu0
        %v3295 = vadd.f32 0.0, %v3294
        %3296 = vmatprep.mubr.bf16.mxu0 0
        %3297 = vmatmul.mubr.bf16.gmra.mrb[0].mxu0 %v2934
        %v3298 = vpop.f32.mrb[0].mxu0
        %v3299 = vadd.f32 0.0, %v3298
        %v3300 = vpop.f32.mrb[0].mxu0
        %v3301 = vadd.f32 0.0, %v3300
        %v3302 = vpop.f32.mrb[0].mxu0
        %v3303 = vadd.f32 0.0, %v3302
        %v3304 = vpop.f32.mrb[0].mxu0
        %v3305 = vadd.f32 0.0, %v3304
        %3306 = vdwg.mxu0
        %3307 = vmatprep.subr.bf16.mxu0 %v597
        %3308 = vmatpush1.bf16.msra.mxu0 %v596
        %3309 = vmatprep.subr.bf16.mxu0 0
        %3310 = vmatpush1.bf16.msra.mxu0 0
        %3311 = vmatprep.subr.bf16.mxu0 0
        %3312 = vmatpush1.bf16.msra.mxu0 0
        %3313 = vmatprep.subr.bf16.mxu0 0
        %3314 = vmatpush1.bf16.msra.mxu0 0
        %3315 = vmatprep.subr.bf16.mxu0 0
        %3316 = vmatpush1.bf16.msra.mxu0 0
        %3317 = vmatprep.subr.bf16.mxu0 0
        %3318 = vmatpush1.bf16.msra.mxu0 0
        %3319 = vmatprep.subr.bf16.mxu0 0
        %3320 = vmatpush1.bf16.msra.mxu0 0
        %3321 = vmatprep.subr.bf16.mxu0 0
        %3322 = vmatpush1.bf16.msra.mxu0 0
        %3323 = vmatprep.subr.bf16.mxu0 0
        %3324 = vmatpush1.bf16.msra.mxu0 0
        %3325 = vmatprep.subr.bf16.mxu0 0
        %3326 = vmatpush1.bf16.msra.mxu0 0
        %3327 = vmatprep.subr.bf16.mxu0 0
        %3328 = vmatpush1.bf16.msra.mxu0 0
        %3329 = vmatprep.subr.bf16.mxu0 0
        %3330 = vmatpush1.bf16.msra.mxu0 0
        %3331 = vmatprep.subr.bf16.mxu0 0
        %3332 = vmatpush1.bf16.msra.mxu0 0
        %3333 = vmatprep.subr.bf16.mxu0 0
        %3334 = vmatpush1.bf16.msra.mxu0 0
        %3335 = vmatprep.subr.bf16.mxu0 0
        %3336 = vmatpush1.bf16.msra.mxu0 0
        %3337 = vmatprep.subr.bf16.mxu0 0
        %3338 = vmatpush1.bf16.msra.mxu0 0
        %3339 = vmatprep.mubr.bf16.mxu0 0
        %3340 = vmatmul.mubr.bf16.gmra.mrb[0].mxu0 %v2931
        %v3341 = vpop.f32.mrb[0].mxu0
        %v3342 = vadd.f32 0.0, %v3341
        %v3343 = vpop.f32.mrb[0].mxu0
        %v3344 = vadd.f32 0.0, %v3343
        %v3345 = vpop.f32.mrb[0].mxu0
        %v3346 = vadd.f32 0.0, %v3345
        %v3347 = vpop.f32.mrb[0].mxu0
        %v3348 = vadd.f32 0.0, %v3347
        %3349 = vmatprep.mubr.bf16.mxu0 0
        %3350 = vmatmul.mubr.bf16.gmra.mrb[0].mxu0 %v2934
        %v3351 = vpop.f32.mrb[0].mxu0
        %v3352 = vadd.f32 0.0, %v3351
        %v3353 = vpop.f32.mrb[0].mxu0
        %v3354 = vadd.f32 0.0, %v3353
        %v3355 = vpop.f32.mrb[0].mxu0
        %v3356 = vadd.f32 0.0, %v3355
        %v3357 = vpop.f32.mrb[0].mxu0
        %v3358 = vadd.f32 0.0, %v3357
        %3359 = vdwg.mxu0
        %v3364 = vunpack.c.l.b16 %v2908
        %v3365 = vunpack.c.l.b16 %v2909
        %v3366 = vunpack.c.l.b16 %v2910
        %v3367 = vunpack.c.l.b16 %v2911
        %v3368 = vpack.c.b16 %v3365, %v3364
        %v3369 = vpack.c.b16 %v3367, %v3366
        %v3371 = vsel %vm1607, %v3368, 0
        %v3374 = vsel %vm1607, %v3369, 0
        %3376 = vmatprep.subr.bf16.mxu0 %v2461
        %3377 = vmatpush1.bf16.msra.mxu0 %v2460
        %3378 = vmatprep.subr.bf16.mxu0 %v2477
        %3379 = vmatpush1.bf16.msra.mxu0 %v2476
        %3380 = vmatprep.subr.bf16.mxu0 %v2493
        %3381 = vmatpush1.bf16.msra.mxu0 %v2492
        %3382 = vmatprep.subr.bf16.mxu0 %v2509
        %3383 = vmatpush1.bf16.msra.mxu0 %v2508
        %3384 = vmatprep.subr.bf16.mxu0 0
        %3385 = vmatpush1.bf16.msra.mxu0 0
        %3386 = vmatprep.subr.bf16.mxu0 0
        %3387 = vmatpush1.bf16.msra.mxu0 0
        %3388 = vmatprep.subr.bf16.mxu0 0
        %3389 = vmatpush1.bf16.msra.mxu0 0
        %3390 = vmatprep.subr.bf16.mxu0 0
        %3391 = vmatpush1.bf16.msra.mxu0 0
        %3392 = vmatprep.subr.bf16.mxu0 0
        %3393 = vmatpush1.bf16.msra.mxu0 0
        %3394 = vmatprep.subr.bf16.mxu0 0
        %3395 = vmatpush1.bf16.msra.mxu0 0
        %3396 = vmatprep.subr.bf16.mxu0 0
        %3397 = vmatpush1.bf16.msra.mxu0 0
        %3398 = vmatprep.subr.bf16.mxu0 0
        %3399 = vmatpush1.bf16.msra.mxu0 0
        %3400 = vmatprep.subr.bf16.mxu0 0
        %3401 = vmatpush1.bf16.msra.mxu0 0
        %3402 = vmatprep.subr.bf16.mxu0 0
        %3403 = vmatpush1.bf16.msra.mxu0 0
        %3404 = vmatprep.subr.bf16.mxu0 0
        %3405 = vmatpush1.bf16.msra.mxu0 0
        %3406 = vmatprep.subr.bf16.mxu0 0
        %3407 = vmatpush1.bf16.msra.mxu0 0
        %3408 = vmatprep.mubr.bf16.mxu0 0
        %3409 = vmatmul.mubr.bf16.gmra.mrb[0].mxu0 %v3371
        %v3410 = vpop.f32.mrb[0].mxu0
        %v3411 = vadd.f32 %v2971, %v3410
        %v3412 = vpop.f32.mrb[0].mxu0
        %v3413 = vadd.f32 %v2973, %v3412
        %v3414 = vpop.f32.mrb[0].mxu0
        %v3415 = vadd.f32 %v2975, %v3414
        %v3416 = vpop.f32.mrb[0].mxu0
        %v3417 = vadd.f32 %v2977, %v3416
        %3418 = vmatprep.mubr.bf16.mxu0 0
        %3419 = vmatmul.mubr.bf16.gmra.mrb[0].mxu0 %v3374
        %v3420 = vpop.f32.mrb[0].mxu0
        %v3421 = vadd.f32 %v2981, %v3420
        %v3422 = vpop.f32.mrb[0].mxu0
        %v3423 = vadd.f32 %v2983, %v3422
        %v3424 = vpop.f32.mrb[0].mxu0
        %v3425 = vadd.f32 %v2985, %v3424
        %v3426 = vpop.f32.mrb[0].mxu0
        %v3427 = vadd.f32 %v2987, %v3426
        %3428 = vdwg.mxu0
        %3429 = vmatprep.subr.bf16.mxu0 %v2463
        %3430 = vmatpush1.bf16.msra.mxu0 %v2462
        %3431 = vmatprep.subr.bf16.mxu0 %v2479
        %3432 = vmatpush1.bf16.msra.mxu0 %v2478
        %3433 = vmatprep.subr.bf16.mxu0 %v2495
        %3434 = vmatpush1.bf16.msra.mxu0 %v2494
        %3435 = vmatprep.subr.bf16.mxu0 %v2511
        %3436 = vmatpush1.bf16.msra.mxu0 %v2510
        %3437 = vmatprep.subr.bf16.mxu0 0
        %3438 = vmatpush1.bf16.msra.mxu0 0
        %3439 = vmatprep.subr.bf16.mxu0 0
        %3440 = vmatpush1.bf16.msra.mxu0 0
        %3441 = vmatprep.subr.bf16.mxu0 0
        %3442 = vmatpush1.bf16.msra.mxu0 0
        %3443 = vmatprep.subr.bf16.mxu0 0
        %3444 = vmatpush1.bf16.msra.mxu0 0
        %3445 = vmatprep.subr.bf16.mxu0 0
        %3446 = vmatpush1.bf16.msra.mxu0 0
        %3447 = vmatprep.subr.bf16.mxu0 0
        %3448 = vmatpush1.bf16.msra.mxu0 0
        %3449 = vmatprep.subr.bf16.mxu0 0
        %3450 = vmatpush1.bf16.msra.mxu0 0
        %3451 = vmatprep.subr.bf16.mxu0 0
        %3452 = vmatpush1.bf16.msra.mxu0 0
        %3453 = vmatprep.subr.bf16.mxu0 0
        %3454 = vmatpush1.bf16.msra.mxu0 0
        %3455 = vmatprep.subr.bf16.mxu0 0
        %3456 = vmatpush1.bf16.msra.mxu0 0
        %3457 = vmatprep.subr.bf16.mxu0 0
        %3458 = vmatpush1.bf16.msra.mxu0 0
        %3459 = vmatprep.subr.bf16.mxu0 0
        %3460 = vmatpush1.bf16.msra.mxu0 0
        %3461 = vmatprep.mubr.bf16.mxu0 0
        %3462 = vmatmul.mubr.bf16.gmra.mrb[0].mxu0 %v3371
        %v3463 = vpop.f32.mrb[0].mxu0
        %v3464 = vadd.f32 %v3024, %v3463
        %v3465 = vpop.f32.mrb[0].mxu0
        %v3466 = vadd.f32 %v3026, %v3465
        %v3467 = vpop.f32.mrb[0].mxu0
        %v3468 = vadd.f32 %v3028, %v3467
        %v3469 = vpop.f32.mrb[0].mxu0
        %v3470 = vadd.f32 %v3030, %v3469
        %3471 = vmatprep.mubr.bf16.mxu0 0
        %3472 = vmatmul.mubr.bf16.gmra.mrb[0].mxu0 %v3374
        %v3473 = vpop.f32.mrb[0].mxu0
        %v3474 = vadd.f32 %v3034, %v3473
        %v3475 = vpop.f32.mrb[0].mxu0
        %v3476 = vadd.f32 %v3036, %v3475
        %v3477 = vpop.f32.mrb[0].mxu0
        %v3478 = vadd.f32 %v3038, %v3477
        %v3479 = vpop.f32.mrb[0].mxu0
        %v3480 = vadd.f32 %v3040, %v3479
        %3481 = vdwg.mxu0
        %3482 = vmatprep.subr.bf16.mxu0 %v2465
        %3483 = vmatpush1.bf16.msra.mxu0 %v2464
        %3484 = vmatprep.subr.bf16.mxu0 %v2481
        %3485 = vmatpush1.bf16.msra.mxu0 %v2480
        %3486 = vmatprep.subr.bf16.mxu0 %v2497
        %3487 = vmatpush1.bf16.msra.mxu0 %v2496
        %3488 = vmatprep.subr.bf16.mxu0 %v2513
        %3489 = vmatpush1.bf16.msra.mxu0 %v2512
        %3490 = vmatprep.subr.bf16.mxu0 0
        %3491 = vmatpush1.bf16.msra.mxu0 0
        %3492 = vmatprep.subr.bf16.mxu0 0
        %3493 = vmatpush1.bf16.msra.mxu0 0
        %3494 = vmatprep.subr.bf16.mxu0 0
        %3495 = vmatpush1.bf16.msra.mxu0 0
        %3496 = vmatprep.subr.bf16.mxu0 0
        %3497 = vmatpush1.bf16.msra.mxu0 0
        %3498 = vmatprep.subr.bf16.mxu0 0
        %3499 = vmatpush1.bf16.msra.mxu0 0
        %3500 = vmatprep.subr.bf16.mxu0 0
        %3501 = vmatpush1.bf16.msra.mxu0 0
        %3502 = vmatprep.subr.bf16.mxu0 0
        %3503 = vmatpush1.bf16.msra.mxu0 0
        %3504 = vmatprep.subr.bf16.mxu0 0
        %3505 = vmatpush1.bf16.msra.mxu0 0
        %3506 = vmatprep.subr.bf16.mxu0 0
        %3507 = vmatpush1.bf16.msra.mxu0 0
        %3508 = vmatprep.subr.bf16.mxu0 0
        %3509 = vmatpush1.bf16.msra.mxu0 0
        %3510 = vmatprep.subr.bf16.mxu0 0
        %3511 = vmatpush1.bf16.msra.mxu0 0
        %3512 = vmatprep.subr.bf16.mxu0 0
        %3513 = vmatpush1.bf16.msra.mxu0 0
        %3514 = vmatprep.mubr.bf16.mxu0 0
        %3515 = vmatmul.mubr.bf16.gmra.mrb[0].mxu0 %v3371
        %v3516 = vpop.f32.mrb[0].mxu0
        %v3517 = vadd.f32 %v3077, %v3516
        %v3518 = vpop.f32.mrb[0].mxu0
        %v3519 = vadd.f32 %v3079, %v3518
        %v3520 = vpop.f32.mrb[0].mxu0
        %v3521 = vadd.f32 %v3081, %v3520
        %v3522 = vpop.f32.mrb[0].mxu0
        %v3523 = vadd.f32 %v3083, %v3522
        %3524 = vmatprep.mubr.bf16.mxu0 0
        %3525 = vmatmul.mubr.bf16.gmra.mrb[0].mxu0 %v3374
        %v3526 = vpop.f32.mrb[0].mxu0
        %v3527 = vadd.f32 %v3087, %v3526
        %v3528 = vpop.f32.mrb[0].mxu0
        %v3529 = vadd.f32 %v3089, %v3528
        %v3530 = vpop.f32.mrb[0].mxu0
        %v3531 = vadd.f32 %v3091, %v3530
        %v3532 = vpop.f32.mrb[0].mxu0
        %v3533 = vadd.f32 %v3093, %v3532
        %3534 = vdwg.mxu0
        %3535 = vmatprep.subr.bf16.mxu0 %v2467
        %3536 = vmatpush1.bf16.msra.mxu0 %v2466
        %3537 = vmatprep.subr.bf16.mxu0 %v2483
        %3538 = vmatpush1.bf16.msra.mxu0 %v2482
        %3539 = vmatprep.subr.bf16.mxu0 %v2499
        %3540 = vmatpush1.bf16.msra.mxu0 %v2498
        %3541 = vmatprep.subr.bf16.mxu0 %v2515
        %3542 = vmatpush1.bf16.msra.mxu0 %v2514
        %3543 = vmatprep.subr.bf16.mxu0 0
        %3544 = vmatpush1.bf16.msra.mxu0 0
        %3545 = vmatprep.subr.bf16.mxu0 0
        %3546 = vmatpush1.bf16.msra.mxu0 0
        %3547 = vmatprep.subr.bf16.mxu0 0
        %3548 = vmatpush1.bf16.msra.mxu0 0
        %3549 = vmatprep.subr.bf16.mxu0 0
        %3550 = vmatpush1.bf16.msra.mxu0 0
        %3551 = vmatprep.subr.bf16.mxu0 0
        %3552 = vmatpush1.bf16.msra.mxu0 0
        %3553 = vmatprep.subr.bf16.mxu0 0
        %3554 = vmatpush1.bf16.msra.mxu0 0
        %3555 = vmatprep.subr.bf16.mxu0 0
        %3556 = vmatpush1.bf16.msra.mxu0 0
        %3557 = vmatprep.subr.bf16.mxu0 0
        %3558 = vmatpush1.bf16.msra.mxu0 0
        %3559 = vmatprep.subr.bf16.mxu0 0
        %3560 = vmatpush1.bf16.msra.mxu0 0
        %3561 = vmatprep.subr.bf16.mxu0 0
        %3562 = vmatpush1.bf16.msra.mxu0 0
        %3563 = vmatprep.subr.bf16.mxu0 0
        %3564 = vmatpush1.bf16.msra.mxu0 0
        %3565 = vmatprep.subr.bf16.mxu0 0
        %3566 = vmatpush1.bf16.msra.mxu0 0
        %3567 = vmatprep.mubr.bf16.mxu0 0
        %3568 = vmatmul.mubr.bf16.gmra.mrb[0].mxu0 %v3371
        %v3569 = vpop.f32.mrb[0].mxu0
        %v3570 = vadd.f32 %v3130, %v3569
        %v3571 = vpop.f32.mrb[0].mxu0
        %v3572 = vadd.f32 %v3132, %v3571
        %v3573 = vpop.f32.mrb[0].mxu0
        %v3574 = vadd.f32 %v3134, %v3573
        %v3575 = vpop.f32.mrb[0].mxu0
        %v3576 = vadd.f32 %v3136, %v3575
        %3577 = vmatprep.mubr.bf16.mxu0 0
        %3578 = vmatmul.mubr.bf16.gmra.mrb[0].mxu0 %v3374
        %v3579 = vpop.f32.mrb[0].mxu0
        %v3580 = vadd.f32 %v3140, %v3579
        %v3581 = vpop.f32.mrb[0].mxu0
        %v3582 = vadd.f32 %v3142, %v3581
        %v3583 = vpop.f32.mrb[0].mxu0
        %v3584 = vadd.f32 %v3144, %v3583
        %v3585 = vpop.f32.mrb[0].mxu0
        %v3586 = vadd.f32 %v3146, %v3585
        %3587 = vdwg.mxu0
        %3588 = vmatprep.subr.bf16.mxu0 %v2469
        %3589 = vmatpush1.bf16.msra.mxu0 %v2468
        %3590 = vmatprep.subr.bf16.mxu0 %v2485
        %3591 = vmatpush1.bf16.msra.mxu0 %v2484
        %3592 = vmatprep.subr.bf16.mxu0 %v2501
        %3593 = vmatpush1.bf16.msra.mxu0 %v2500
        %3594 = vmatprep.subr.bf16.mxu0 %v2517
        %3595 = vmatpush1.bf16.msra.mxu0 %v2516
        %3596 = vmatprep.subr.bf16.mxu0 0
        %3597 = vmatpush1.bf16.msra.mxu0 0
        %3598 = vmatprep.subr.bf16.mxu0 0
        %3599 = vmatpush1.bf16.msra.mxu0 0
        %3600 = vmatprep.subr.bf16.mxu0 0
        %3601 = vmatpush1.bf16.msra.mxu0 0
        %3602 = vmatprep.subr.bf16.mxu0 0
        %3603 = vmatpush1.bf16.msra.mxu0 0
        %3604 = vmatprep.subr.bf16.mxu0 0
        %3605 = vmatpush1.bf16.msra.mxu0 0
        %3606 = vmatprep.subr.bf16.mxu0 0
        %3607 = vmatpush1.bf16.msra.mxu0 0
        %3608 = vmatprep.subr.bf16.mxu0 0
        %3609 = vmatpush1.bf16.msra.mxu0 0
        %3610 = vmatprep.subr.bf16.mxu0 0
        %3611 = vmatpush1.bf16.msra.mxu0 0
        %3612 = vmatprep.subr.bf16.mxu0 0
        %3613 = vmatpush1.bf16.msra.mxu0 0
        %3614 = vmatprep.subr.bf16.mxu0 0
        %3615 = vmatpush1.bf16.msra.mxu0 0
        %3616 = vmatprep.subr.bf16.mxu0 0
        %3617 = vmatpush1.bf16.msra.mxu0 0
        %3618 = vmatprep.subr.bf16.mxu0 0
        %3619 = vmatpush1.bf16.msra.mxu0 0
        %3620 = vmatprep.mubr.bf16.mxu0 0
        %3621 = vmatmul.mubr.bf16.gmra.mrb[0].mxu0 %v3371
        %v3622 = vpop.f32.mrb[0].mxu0
        %v3623 = vadd.f32 %v3183, %v3622
        %v3624 = vpop.f32.mrb[0].mxu0
        %v3625 = vadd.f32 %v3185, %v3624
        %v3626 = vpop.f32.mrb[0].mxu0
        %v3627 = vadd.f32 %v3187, %v3626
        %v3628 = vpop.f32.mrb[0].mxu0
        %v3629 = vadd.f32 %v3189, %v3628
        %3630 = vmatprep.mubr.bf16.mxu0 0
        %3631 = vmatmul.mubr.bf16.gmra.mrb[0].mxu0 %v3374
        %v3632 = vpop.f32.mrb[0].mxu0
        %v3633 = vadd.f32 %v3193, %v3632
        %v3634 = vpop.f32.mrb[0].mxu0
        %v3635 = vadd.f32 %v3195, %v3634
        %v3636 = vpop.f32.mrb[0].mxu0
        %v3637 = vadd.f32 %v3197, %v3636
        %v3638 = vpop.f32.mrb[0].mxu0
        %v3639 = vadd.f32 %v3199, %v3638
        %3640 = vdwg.mxu0
        %3641 = vmatprep.subr.bf16.mxu0 %v2471
        %3642 = vmatpush1.bf16.msra.mxu0 %v2470
        %3643 = vmatprep.subr.bf16.mxu0 %v2487
        %3644 = vmatpush1.bf16.msra.mxu0 %v2486
        %3645 = vmatprep.subr.bf16.mxu0 %v2503
        %3646 = vmatpush1.bf16.msra.mxu0 %v2502
        %3647 = vmatprep.subr.bf16.mxu0 %v2519
        %3648 = vmatpush1.bf16.msra.mxu0 %v2518
        %3649 = vmatprep.subr.bf16.mxu0 0
        %3650 = vmatpush1.bf16.msra.mxu0 0
        %3651 = vmatprep.subr.bf16.mxu0 0
        %3652 = vmatpush1.bf16.msra.mxu0 0
        %3653 = vmatprep.subr.bf16.mxu0 0
        %3654 = vmatpush1.bf16.msra.mxu0 0
        %3655 = vmatprep.subr.bf16.mxu0 0
        %3656 = vmatpush1.bf16.msra.mxu0 0
        %3657 = vmatprep.subr.bf16.mxu0 0
        %3658 = vmatpush1.bf16.msra.mxu0 0
        %3659 = vmatprep.subr.bf16.mxu0 0
        %3660 = vmatpush1.bf16.msra.mxu0 0
        %3661 = vmatprep.subr.bf16.mxu0 0
        %3662 = vmatpush1.bf16.msra.mxu0 0
        %3663 = vmatprep.subr.bf16.mxu0 0
        %3664 = vmatpush1.bf16.msra.mxu0 0
        %3665 = vmatprep.subr.bf16.mxu0 0
        %3666 = vmatpush1.bf16.msra.mxu0 0
        %3667 = vmatprep.subr.bf16.mxu0 0
        %3668 = vmatpush1.bf16.msra.mxu0 0
        %3669 = vmatprep.subr.bf16.mxu0 0
        %3670 = vmatpush1.bf16.msra.mxu0 0
        %3671 = vmatprep.subr.bf16.mxu0 0
        %3672 = vmatpush1.bf16.msra.mxu0 0
        %3673 = vmatprep.mubr.bf16.mxu0 0
        %3674 = vmatmul.mubr.bf16.gmra.mrb[0].mxu0 %v3371
        %v3675 = vpop.f32.mrb[0].mxu0
        %v3676 = vadd.f32 %v3236, %v3675
        %v3677 = vpop.f32.mrb[0].mxu0
        %v3678 = vadd.f32 %v3238, %v3677
        %v3679 = vpop.f32.mrb[0].mxu0
        %v3680 = vadd.f32 %v3240, %v3679
        %v3681 = vpop.f32.mrb[0].mxu0
        %v3682 = vadd.f32 %v3242, %v3681
        %3683 = vmatprep.mubr.bf16.mxu0 0
        %3684 = vmatmul.mubr.bf16.gmra.mrb[0].mxu0 %v3374
        %v3685 = vpop.f32.mrb[0].mxu0
        %v3686 = vadd.f32 %v3246, %v3685
        %v3687 = vpop.f32.mrb[0].mxu0
        %v3688 = vadd.f32 %v3248, %v3687
        %v3689 = vpop.f32.mrb[0].mxu0
        %v3690 = vadd.f32 %v3250, %v3689
        %v3691 = vpop.f32.mrb[0].mxu0
        %v3692 = vadd.f32 %v3252, %v3691
        %3693 = vdwg.mxu0
        %3694 = vmatprep.subr.bf16.mxu0 %v2473
        %3695 = vmatpush1.bf16.msra.mxu0 %v2472
        %3696 = vmatprep.subr.bf16.mxu0 %v2489
        %3697 = vmatpush1.bf16.msra.mxu0 %v2488
        %3698 = vmatprep.subr.bf16.mxu0 %v2505
        %3699 = vmatpush1.bf16.msra.mxu0 %v2504
        %3700 = vmatprep.subr.bf16.mxu0 %v2521
        %3701 = vmatpush1.bf16.msra.mxu0 %v2520
        %3702 = vmatprep.subr.bf16.mxu0 0
        %3703 = vmatpush1.bf16.msra.mxu0 0
        %3704 = vmatprep.subr.bf16.mxu0 0
        %3705 = vmatpush1.bf16.msra.mxu0 0
        %3706 = vmatprep.subr.bf16.mxu0 0
        %3707 = vmatpush1.bf16.msra.mxu0 0
        %3708 = vmatprep.subr.bf16.mxu0 0
        %3709 = vmatpush1.bf16.msra.mxu0 0
        %3710 = vmatprep.subr.bf16.mxu0 0
        %3711 = vmatpush1.bf16.msra.mxu0 0
        %3712 = vmatprep.subr.bf16.mxu0 0
        %3713 = vmatpush1.bf16.msra.mxu0 0
        %3714 = vmatprep.subr.bf16.mxu0 0
        %3715 = vmatpush1.bf16.msra.mxu0 0
        %3716 = vmatprep.subr.bf16.mxu0 0
        %3717 = vmatpush1.bf16.msra.mxu0 0
        %3718 = vmatprep.subr.bf16.mxu0 0
        %3719 = vmatpush1.bf16.msra.mxu0 0
        %3720 = vmatprep.subr.bf16.mxu0 0
        %3721 = vmatpush1.bf16.msra.mxu0 0
        %3722 = vmatprep.subr.bf16.mxu0 0
        %3723 = vmatpush1.bf16.msra.mxu0 0
        %3724 = vmatprep.subr.bf16.mxu0 0
        %3725 = vmatpush1.bf16.msra.mxu0 0
        %3726 = vmatprep.mubr.bf16.mxu0 0
        %3727 = vmatmul.mubr.bf16.gmra.mrb[0].mxu0 %v3371
        %v3728 = vpop.f32.mrb[0].mxu0
        %v3729 = vadd.f32 %v3289, %v3728
        %v3730 = vpop.f32.mrb[0].mxu0
        %v3731 = vadd.f32 %v3291, %v3730
        %v3732 = vpop.f32.mrb[0].mxu0
        %v3733 = vadd.f32 %v3293, %v3732
        %v3734 = vpop.f32.mrb[0].mxu0
        %v3735 = vadd.f32 %v3295, %v3734
        %3736 = vmatprep.mubr.bf16.mxu0 0
        %3737 = vmatmul.mubr.bf16.gmra.mrb[0].mxu0 %v3374
        %v3738 = vpop.f32.mrb[0].mxu0
        %v3739 = vadd.f32 %v3299, %v3738
        %v3740 = vpop.f32.mrb[0].mxu0
        %v3741 = vadd.f32 %v3301, %v3740
        %v3742 = vpop.f32.mrb[0].mxu0
        %v3743 = vadd.f32 %v3303, %v3742
        %v3744 = vpop.f32.mrb[0].mxu0
        %v3745 = vadd.f32 %v3305, %v3744
        %3746 = vdwg.mxu0
        %3747 = vmatprep.subr.bf16.mxu0 %v2475
        %3748 = vmatpush1.bf16.msra.mxu0 %v2474
        %3749 = vmatprep.subr.bf16.mxu0 %v2491
        %3750 = vmatpush1.bf16.msra.mxu0 %v2490
        %3751 = vmatprep.subr.bf16.mxu0 %v2507
        %3752 = vmatpush1.bf16.msra.mxu0 %v2506
        %3753 = vmatprep.subr.bf16.mxu0 %v2523
        %3754 = vmatpush1.bf16.msra.mxu0 %v2522
        %3755 = vmatprep.subr.bf16.mxu0 0
        %3756 = vmatpush1.bf16.msra.mxu0 0
        %3757 = vmatprep.subr.bf16.mxu0 0
        %3758 = vmatpush1.bf16.msra.mxu0 0
        %3759 = vmatprep.subr.bf16.mxu0 0
        %3760 = vmatpush1.bf16.msra.mxu0 0
        %3761 = vmatprep.subr.bf16.mxu0 0
        %3762 = vmatpush1.bf16.msra.mxu0 0
        %3763 = vmatprep.subr.bf16.mxu0 0
        %3764 = vmatpush1.bf16.msra.mxu0 0
        %3765 = vmatprep.subr.bf16.mxu0 0
        %3766 = vmatpush1.bf16.msra.mxu0 0
        %3767 = vmatprep.subr.bf16.mxu0 0
        %3768 = vmatpush1.bf16.msra.mxu0 0
        %3769 = vmatprep.subr.bf16.mxu0 0
        %3770 = vmatpush1.bf16.msra.mxu0 0
        %3771 = vmatprep.subr.bf16.mxu0 0
        %3772 = vmatpush1.bf16.msra.mxu0 0
        %3773 = vmatprep.subr.bf16.mxu0 0
        %3774 = vmatpush1.bf16.msra.mxu0 0
        %3775 = vmatprep.subr.bf16.mxu0 0
        %3776 = vmatpush1.bf16.msra.mxu0 0
        %3777 = vmatprep.subr.bf16.mxu0 0
        %3778 = vmatpush1.bf16.msra.mxu0 0
        %3779 = vmatprep.mubr.bf16.mxu0 0
        %3780 = vmatmul.mubr.bf16.gmra.mrb[0].mxu0 %v3371
        %v3781 = vpop.f32.mrb[0].mxu0
        %v3782 = vadd.f32 %v3342, %v3781
        %v3783 = vpop.f32.mrb[0].mxu0
        %v3784 = vadd.f32 %v3344, %v3783
        %v3785 = vpop.f32.mrb[0].mxu0
        %v3786 = vadd.f32 %v3346, %v3785
        %v3787 = vpop.f32.mrb[0].mxu0
        %v3788 = vadd.f32 %v3348, %v3787
        %3789 = vmatprep.mubr.bf16.mxu0 0
        %3790 = vmatmul.mubr.bf16.gmra.mrb[0].mxu0 %v3374
        %v3791 = vpop.f32.mrb[0].mxu0
        %v3792 = vadd.f32 %v3352, %v3791
        %v3793 = vpop.f32.mrb[0].mxu0
        %v3794 = vadd.f32 %v3354, %v3793
        %v3795 = vpop.f32.mrb[0].mxu0
        %v3796 = vadd.f32 %v3356, %v3795
        %v3797 = vpop.f32.mrb[0].mxu0
        %v3798 = vadd.f32 %v3358, %v3797
        %3799 = vdwg.mxu0
        %3801 = vset.pattern.permute.xlu0 0
        %3802 = vperm.xlu0 %3801, %v2916
        %v3803 = vpop.permute.xlu0 %3802
        %3806 = vset.pattern.permute.xlu0 0
        %3807 = vperm.xlu0 %3806, %v2917
        %v3808 = vpop.permute.xlu0 %3807
        %3811 = vset.pattern.permute.xlu0 0
        %3812 = vperm.xlu0 %3811, %v2918
        %v3813 = vpop.permute.xlu0 %3812
        %3816 = vset.pattern.permute.xlu0 0
        %3817 = vperm.xlu0 %3816, %v2919
        %v3818 = vpop.permute.xlu0 %3817
        %v3820 = vadd.f32 %v3411, %v3803
        %v3821 = vadd.f32 %v3413, %v3803
        %v3822 = vadd.f32 %v3464, %v3803
        %v3823 = vadd.f32 %v3466, %v3803
        %v3824 = vadd.f32 %v3517, %v3803
        %v3825 = vadd.f32 %v3519, %v3803
        %v3826 = vadd.f32 %v3570, %v3803
        %v3827 = vadd.f32 %v3572, %v3803
        %v3828 = vadd.f32 %v3623, %v3803
        %v3829 = vadd.f32 %v3625, %v3803
        %v3830 = vadd.f32 %v3676, %v3803
        %v3831 = vadd.f32 %v3678, %v3803
        %v3832 = vadd.f32 %v3729, %v3803
        %v3833 = vadd.f32 %v3731, %v3803
        %v3834 = vadd.f32 %v3782, %v3803
        %v3835 = vadd.f32 %v3784, %v3803
        %v3836 = vadd.f32 %v3415, %v3808
        %v3837 = vadd.f32 %v3417, %v3808
        %v3838 = vadd.f32 %v3468, %v3808
        %v3839 = vadd.f32 %v3470, %v3808
        %v3840 = vadd.f32 %v3521, %v3808
        %v3841 = vadd.f32 %v3523, %v3808
        %v3842 = vadd.f32 %v3574, %v3808
        %v3843 = vadd.f32 %v3576, %v3808
        %v3844 = vadd.f32 %v3627, %v3808
        %v3845 = vadd.f32 %v3629, %v3808
        %v3846 = vadd.f32 %v3680, %v3808
        %v3847 = vadd.f32 %v3682, %v3808
        %v3848 = vadd.f32 %v3733, %v3808
        %v3849 = vadd.f32 %v3735, %v3808
        %v3850 = vadd.f32 %v3786, %v3808
        %v3851 = vadd.f32 %v3788, %v3808
        %v3852 = vadd.f32 %v3421, %v3813
        %v3853 = vadd.f32 %v3423, %v3813
        %v3854 = vadd.f32 %v3474, %v3813
        %v3855 = vadd.f32 %v3476, %v3813
        %v3856 = vadd.f32 %v3527, %v3813
        %v3857 = vadd.f32 %v3529, %v3813
        %v3858 = vadd.f32 %v3580, %v3813
        %v3859 = vadd.f32 %v3582, %v3813
        %v3860 = vadd.f32 %v3633, %v3813
        %v3861 = vadd.f32 %v3635, %v3813
        %v3862 = vadd.f32 %v3686, %v3813
        %v3863 = vadd.f32 %v3688, %v3813
        %v3864 = vadd.f32 %v3739, %v3813
        %v3865 = vadd.f32 %v3741, %v3813
        %v3866 = vadd.f32 %v3792, %v3813
        %v3867 = vadd.f32 %v3794, %v3813
        %v3868 = vadd.f32 %v3425, %v3818
        %v3869 = vadd.f32 %v3427, %v3818
        %v3870 = vadd.f32 %v3478, %v3818
        %v3871 = vadd.f32 %v3480, %v3818
        %v3872 = vadd.f32 %v3531, %v3818
        %v3873 = vadd.f32 %v3533, %v3818
        %v3874 = vadd.f32 %v3584, %v3818
        %v3875 = vadd.f32 %v3586, %v3818
        %v3876 = vadd.f32 %v3637, %v3818
        %v3877 = vadd.f32 %v3639, %v3818
        %v3878 = vadd.f32 %v3690, %v3818
        %v3879 = vadd.f32 %v3692, %v3818
        %v3880 = vadd.f32 %v3743, %v3818
        %v3881 = vadd.f32 %v3745, %v3818
        %v3882 = vadd.f32 %v3796, %v3818
        %v3883 = vadd.f32 %v3798, %v3818
        %v3884 = vmul.f32 %v3820, 0.01
        %v3885 = vmul.f32 %v3821, 0.01
        %v3886 = vmul.f32 %v3822, 0.01
        %v3887 = vmul.f32 %v3823, 0.01
        %v3888 = vmul.f32 %v3824, 0.01
        %v3889 = vmul.f32 %v3825, 0.01
        %v3890 = vmul.f32 %v3826, 0.01
        %v3891 = vmul.f32 %v3827, 0.01
        %v3892 = vmul.f32 %v3828, 0.01
        %v3893 = vmul.f32 %v3829, 0.01
        %v3894 = vmul.f32 %v3830, 0.01
        %v3895 = vmul.f32 %v3831, 0.01
        %v3896 = vmul.f32 %v3832, 0.01
        %v3897 = vmul.f32 %v3833, 0.01
        %v3898 = vmul.f32 %v3834, 0.01
        %v3899 = vmul.f32 %v3835, 0.01
        %v3900 = vmul.f32 %v3836, 0.01
        %v3901 = vmul.f32 %v3837, 0.01
        %v3902 = vmul.f32 %v3838, 0.01
        %v3903 = vmul.f32 %v3839, 0.01
        %v3904 = vmul.f32 %v3840, 0.01
        %v3905 = vmul.f32 %v3841, 0.01
        %v3906 = vmul.f32 %v3842, 0.01
        %v3907 = vmul.f32 %v3843, 0.01
        %v3908 = vmul.f32 %v3844, 0.01
        %v3909 = vmul.f32 %v3845, 0.01
        %v3910 = vmul.f32 %v3846, 0.01
        %v3911 = vmul.f32 %v3847, 0.01
        %v3912 = vmul.f32 %v3848, 0.01
        %v3913 = vmul.f32 %v3849, 0.01
        %v3914 = vmul.f32 %v3850, 0.01
        %v3915 = vmul.f32 %v3851, 0.01
        %v3916 = vmul.f32 %v3852, 0.01
        %v3917 = vmul.f32 %v3853, 0.01
        %v3918 = vmul.f32 %v3854, 0.01
        %v3919 = vmul.f32 %v3855, 0.01
        %v3920 = vmul.f32 %v3856, 0.01
        %v3921 = vmul.f32 %v3857, 0.01
        %v3922 = vmul.f32 %v3858, 0.01
        %v3923 = vmul.f32 %v3859, 0.01
        %v3924 = vmul.f32 %v3860, 0.01
        %v3925 = vmul.f32 %v3861, 0.01
        %v3926 = vmul.f32 %v3862, 0.01
        %v3927 = vmul.f32 %v3863, 0.01
        %v3928 = vmul.f32 %v3864, 0.01
        %v3929 = vmul.f32 %v3865, 0.01
        %v3930 = vmul.f32 %v3866, 0.01
        %v3931 = vmul.f32 %v3867, 0.01
        %v3932 = vmul.f32 %v3868, 0.01
        %v3933 = vmul.f32 %v3869, 0.01
        %v3934 = vmul.f32 %v3870, 0.01
        %v3935 = vmul.f32 %v3871, 0.01
        %v3936 = vmul.f32 %v3872, 0.01
        %v3937 = vmul.f32 %v3873, 0.01
        %v3938 = vmul.f32 %v3874, 0.01
        %v3939 = vmul.f32 %v3875, 0.01
        %v3940 = vmul.f32 %v3876, 0.01
        %v3941 = vmul.f32 %v3877, 0.01
        %v3942 = vmul.f32 %v3878, 0.01
        %v3943 = vmul.f32 %v3879, 0.01
        %v3944 = vmul.f32 %v3880, 0.01
        %v3945 = vmul.f32 %v3881, 0.01
        %v3946 = vmul.f32 %v3882, 0.01
        %v3947 = vmul.f32 %v3883, 0.01
        %v3948 = vmax.f32 %v3820, %v3884
        %v3949 = vmax.f32 %v3821, %v3885
        %v3950 = vmax.f32 %v3822, %v3886
        %v3951 = vmax.f32 %v3823, %v3887
        %v3952 = vmax.f32 %v3824, %v3888
        %v3953 = vmax.f32 %v3825, %v3889
        %v3954 = vmax.f32 %v3826, %v3890
        %v3955 = vmax.f32 %v3827, %v3891
        %v3956 = vmax.f32 %v3828, %v3892
        %v3957 = vmax.f32 %v3829, %v3893
        %v3958 = vmax.f32 %v3830, %v3894
        %v3959 = vmax.f32 %v3831, %v3895
        %v3960 = vmax.f32 %v3832, %v3896
        %v3961 = vmax.f32 %v3833, %v3897
        %v3962 = vmax.f32 %v3834, %v3898
        %v3963 = vmax.f32 %v3835, %v3899
        %v3964 = vmax.f32 %v3836, %v3900
        %v3965 = vmax.f32 %v3837, %v3901
        %v3966 = vmax.f32 %v3838, %v3902
        %v3967 = vmax.f32 %v3839, %v3903
        %v3968 = vmax.f32 %v3840, %v3904
        %v3969 = vmax.f32 %v3841, %v3905
        %v3970 = vmax.f32 %v3842, %v3906
        %v3971 = vmax.f32 %v3843, %v3907
        %v3972 = vmax.f32 %v3844, %v3908
        %v3973 = vmax.f32 %v3845, %v3909
        %v3974 = vmax.f32 %v3846, %v3910
        %v3975 = vmax.f32 %v3847, %v3911
        %v3976 = vmax.f32 %v3848, %v3912
        %v3977 = vmax.f32 %v3849, %v3913
        %v3978 = vmax.f32 %v3850, %v3914
        %v3979 = vmax.f32 %v3851, %v3915
        %v3980 = vmax.f32 %v3852, %v3916
        %v3981 = vmax.f32 %v3853, %v3917
        %v3982 = vmax.f32 %v3854, %v3918
        %v3983 = vmax.f32 %v3855, %v3919
        %v3984 = vmax.f32 %v3856, %v3920
        %v3985 = vmax.f32 %v3857, %v3921
        %v3986 = vmax.f32 %v3858, %v3922
        %v3987 = vmax.f32 %v3859, %v3923
        %v3988 = vmax.f32 %v3860, %v3924
        %v3989 = vmax.f32 %v3861, %v3925
        %v3990 = vmax.f32 %v3862, %v3926
        %v3991 = vmax.f32 %v3863, %v3927
        %v3992 = vmax.f32 %v3864, %v3928
        %v3993 = vmax.f32 %v3865, %v3929
        %v3994 = vmax.f32 %v3866, %v3930
        %v3995 = vmax.f32 %v3867, %v3931
        %v3996 = vmax.f32 %v3868, %v3932
        %v3997 = vmax.f32 %v3869, %v3933
        %v3998 = vmax.f32 %v3870, %v3934
        %v3999 = vmax.f32 %v3871, %v3935
        %v4000 = vmax.f32 %v3872, %v3936
        %v4001 = vmax.f32 %v3873, %v3937
        %v4002 = vmax.f32 %v3874, %v3938
        %v4003 = vmax.f32 %v3875, %v3939
        %v4004 = vmax.f32 %v3876, %v3940
        %v4005 = vmax.f32 %v3877, %v3941
        %v4006 = vmax.f32 %v3878, %v3942
        %v4007 = vmax.f32 %v3879, %v3943
        %v4008 = vmax.f32 %v3880, %v3944
        %v4009 = vmax.f32 %v3881, %v3945
        %v4010 = vmax.f32 %v3882, %v3946
        %v4011 = vmax.f32 %v3883, %v3947
        %v4012 = vld [vmem:[%s8] sm:$0x1]
        %v4013 = vld [vmem:[#allocation2] sm:$0x1]
        %v4014 = vpack.c.bf16 %v3964, %v3948
        %v4015 = vpack.c.bf16 %v3965, %v3949
        %v4016 = vpack.c.bf16 %v3966, %v3950
        %v4017 = vpack.c.bf16 %v3967, %v3951
        %v4018 = vpack.c.bf16 %v3968, %v3952
        %v4019 = vpack.c.bf16 %v3969, %v3953
        %v4020 = vpack.c.bf16 %v3970, %v3954
        %v4021 = vpack.c.bf16 %v3971, %v3955
        %v4022 = vpack.c.bf16 %v3972, %v3956
        %v4023 = vpack.c.bf16 %v3973, %v3957
        %v4024 = vpack.c.bf16 %v3974, %v3958
        %v4025 = vpack.c.bf16 %v3975, %v3959
        %v4026 = vpack.c.bf16 %v3976, %v3960
        %v4027 = vpack.c.bf16 %v3977, %v3961
        %v4028 = vpack.c.bf16 %v3978, %v3962
        %v4029 = vpack.c.bf16 %v3979, %v3963
        %v4030 = vpack.c.bf16 %v3996, %v3980
        %v4031 = vpack.c.bf16 %v3997, %v3981
        %v4032 = vpack.c.bf16 %v3998, %v3982
        %v4033 = vpack.c.bf16 %v3999, %v3983
        %v4034 = vpack.c.bf16 %v4000, %v3984
        %v4035 = vpack.c.bf16 %v4001, %v3985
        %v4036 = vpack.c.bf16 %v4002, %v3986
        %v4037 = vpack.c.bf16 %v4003, %v3987
        %v4038 = vpack.c.bf16 %v4004, %v3988
        %v4039 = vpack.c.bf16 %v4005, %v3989
        %v4040 = vpack.c.bf16 %v4006, %v3990
        %v4041 = vpack.c.bf16 %v4007, %v3991
        %v4042 = vpack.c.bf16 %v4008, %v3992
        %v4043 = vpack.c.bf16 %v4009, %v3993
        %v4044 = vpack.c.bf16 %v4010, %v3994
        %v4045 = vpack.c.bf16 %v4011, %v3995
        %4047 = vset.pattern.permute.xlu0 0
        %4048 = vperm.xlu0 %4047, %v4013
        %v4049 = vpop.permute.xlu0 %4048
        %v4051 = vlaneseq
        %v4052 = vshrl.u32 %v4051, 7
        %v4053 = vsub.s32 0, %v4052
        %v4054 = vrot.slane %v4049, %v4053
        %vm4055 = vcmask 261120
        %v4057 = vsel %vm4055, %v4012, 0
        %4059 = vmatprep.subr.bf16.mxu0 %v4015
        %4060 = vmatpush1.bf16.msra.mxu0 %v4014
        %4061 = vmatprep.subr.bf16.mxu0 %v4031
        %4062 = vmatpush1.bf16.msra.mxu0 %v4030
        %4063 = vmatprep.subr.bf16.mxu0 0
        %4064 = vmatpush1.bf16.msra.mxu0 0
        %4065 = vmatprep.subr.bf16.mxu0 0
        %4066 = vmatpush1.bf16.msra.mxu0 0
        %4067 = vmatprep.subr.bf16.mxu0 0
        %4068 = vmatpush1.bf16.msra.mxu0 0
        %4069 = vmatprep.subr.bf16.mxu0 0
        %4070 = vmatpush1.bf16.msra.mxu0 0
        %4071 = vmatprep.subr.bf16.mxu0 0
        %4072 = vmatpush1.bf16.msra.mxu0 0
        %4073 = vmatprep.subr.bf16.mxu0 0
        %4074 = vmatpush1.bf16.msra.mxu0 0
        %4075 = vmatprep.subr.bf16.mxu0 0
        %4076 = vmatpush1.bf16.msra.mxu0 0
        %4077 = vmatprep.subr.bf16.mxu0 0
        %4078 = vmatpush1.bf16.msra.mxu0 0
        %4079 = vmatprep.subr.bf16.mxu0 0
        %4080 = vmatpush1.bf16.msra.mxu0 0
        %4081 = vmatprep.subr.bf16.mxu0 0
        %4082 = vmatpush1.bf16.msra.mxu0 0
        %4083 = vmatprep.subr.bf16.mxu0 0
        %4084 = vmatpush1.bf16.msra.mxu0 0
        %4085 = vmatprep.subr.bf16.mxu0 0
        %4086 = vmatpush1.bf16.msra.mxu0 0
        %4087 = vmatprep.subr.bf16.mxu0 0
        %4088 = vmatpush1.bf16.msra.mxu0 0
        %4089 = vmatprep.subr.bf16.mxu0 0
        %4090 = vmatpush1.bf16.msra.mxu0 0
        %4091 = vmatprep.mubr.bf16.mxu0 0
        %4092 = vmatmul.mubr.bf16.gmra.mrb[0].mxu0 %v4057
        %v4093 = vpop.f32.mrb[0].mxu0
        %v4094 = vadd.f32 %v4054, %v4093
        %v4095 = vpop.f32.mrb[0].mxu0
        %v4096 = vadd.f32 %v4054, %v4095
        %v4097 = vpop.f32.mrb[0].mxu0
        %v4098 = vpop.f32.mrb[0].mxu0
        %4099 = vdwg.mxu0
        %4100 = vmatprep.subr.bf16.mxu0 %v4017
        %4101 = vmatpush1.bf16.msra.mxu0 %v4016
        %4102 = vmatprep.subr.bf16.mxu0 %v4033
        %4103 = vmatpush1.bf16.msra.mxu0 %v4032
        %4104 = vmatprep.subr.bf16.mxu0 0
        %4105 = vmatpush1.bf16.msra.mxu0 0
        %4106 = vmatprep.subr.bf16.mxu0 0
        %4107 = vmatpush1.bf16.msra.mxu0 0
        %4108 = vmatprep.subr.bf16.mxu0 0
        %4109 = vmatpush1.bf16.msra.mxu0 0
        %4110 = vmatprep.subr.bf16.mxu0 0
        %4111 = vmatpush1.bf16.msra.mxu0 0
        %4112 = vmatprep.subr.bf16.mxu0 0
        %4113 = vmatpush1.bf16.msra.mxu0 0
        %4114 = vmatprep.subr.bf16.mxu0 0
        %4115 = vmatpush1.bf16.msra.mxu0 0
        %4116 = vmatprep.subr.bf16.mxu0 0
        %4117 = vmatpush1.bf16.msra.mxu0 0
        %4118 = vmatprep.subr.bf16.mxu0 0
        %4119 = vmatpush1.bf16.msra.mxu0 0
        %4120 = vmatprep.subr.bf16.mxu0 0
        %4121 = vmatpush1.bf16.msra.mxu0 0
        %4122 = vmatprep.subr.bf16.mxu0 0
        %4123 = vmatpush1.bf16.msra.mxu0 0
        %4124 = vmatprep.subr.bf16.mxu0 0
        %4125 = vmatpush1.bf16.msra.mxu0 0
        %4126 = vmatprep.subr.bf16.mxu0 0
        %4127 = vmatpush1.bf16.msra.mxu0 0
        %4128 = vmatprep.subr.bf16.mxu0 0
        %4129 = vmatpush1.bf16.msra.mxu0 0
        %4130 = vmatprep.subr.bf16.mxu0 0
        %4131 = vmatpush1.bf16.msra.mxu0 0
        %4132 = vmatprep.mubr.bf16.mxu0 0
        %4133 = vmatmul.mubr.bf16.gmra.mrb[0].mxu0 %v4057
        %v4134 = vpop.f32.mrb[0].mxu0
        %v4135 = vadd.f32 %v4054, %v4134
        %v4136 = vpop.f32.mrb[0].mxu0
        %v4137 = vadd.f32 %v4054, %v4136
        %v4138 = vpop.f32.mrb[0].mxu0
        %v4139 = vpop.f32.mrb[0].mxu0
        %4140 = vdwg.mxu0
        %4141 = vmatprep.subr.bf16.mxu0 %v4019
        %4142 = vmatpush1.bf16.msra.mxu0 %v4018
        %4143 = vmatprep.subr.bf16.mxu0 %v4035
        %4144 = vmatpush1.bf16.msra.mxu0 %v4034
        %4145 = vmatprep.subr.bf16.mxu0 0
        %4146 = vmatpush1.bf16.msra.mxu0 0
        %4147 = vmatprep.subr.bf16.mxu0 0
        %4148 = vmatpush1.bf16.msra.mxu0 0
        %4149 = vmatprep.subr.bf16.mxu0 0
        %4150 = vmatpush1.bf16.msra.mxu0 0
        %4151 = vmatprep.subr.bf16.mxu0 0
        %4152 = vmatpush1.bf16.msra.mxu0 0
        %4153 = vmatprep.subr.bf16.mxu0 0
        %4154 = vmatpush1.bf16.msra.mxu0 0
        %4155 = vmatprep.subr.bf16.mxu0 0
        %4156 = vmatpush1.bf16.msra.mxu0 0
        %4157 = vmatprep.subr.bf16.mxu0 0
        %4158 = vmatpush1.bf16.msra.mxu0 0
        %4159 = vmatprep.subr.bf16.mxu0 0
        %4160 = vmatpush1.bf16.msra.mxu0 0
        %4161 = vmatprep.subr.bf16.mxu0 0
        %4162 = vmatpush1.bf16.msra.mxu0 0
        %4163 = vmatprep.subr.bf16.mxu0 0
        %4164 = vmatpush1.bf16.msra.mxu0 0
        %4165 = vmatprep.subr.bf16.mxu0 0
        %4166 = vmatpush1.bf16.msra.mxu0 0
        %4167 = vmatprep.subr.bf16.mxu0 0
        %4168 = vmatpush1.bf16.msra.mxu0 0
        %4169 = vmatprep.subr.bf16.mxu0 0
        %4170 = vmatpush1.bf16.msra.mxu0 0
        %4171 = vmatprep.subr.bf16.mxu0 0
        %4172 = vmatpush1.bf16.msra.mxu0 0
        %4173 = vmatprep.mubr.bf16.mxu0 0
        %4174 = vmatmul.mubr.bf16.gmra.mrb[0].mxu0 %v4057
        %v4175 = vpop.f32.mrb[0].mxu0
        %v4176 = vadd.f32 %v4054, %v4175
        %v4177 = vpop.f32.mrb[0].mxu0
        %v4178 = vadd.f32 %v4054, %v4177
        %v4179 = vpop.f32.mrb[0].mxu0
        %v4180 = vpop.f32.mrb[0].mxu0
        %4181 = vdwg.mxu0
        %4182 = vmatprep.subr.bf16.mxu0 %v4021
        %4183 = vmatpush1.bf16.msra.mxu0 %v4020
        %4184 = vmatprep.subr.bf16.mxu0 %v4037
        %4185 = vmatpush1.bf16.msra.mxu0 %v4036
        %4186 = vmatprep.subr.bf16.mxu0 0
        %4187 = vmatpush1.bf16.msra.mxu0 0
        %4188 = vmatprep.subr.bf16.mxu0 0
        %4189 = vmatpush1.bf16.msra.mxu0 0
        %4190 = vmatprep.subr.bf16.mxu0 0
        %4191 = vmatpush1.bf16.msra.mxu0 0
        %4192 = vmatprep.subr.bf16.mxu0 0
        %4193 = vmatpush1.bf16.msra.mxu0 0
        %4194 = vmatprep.subr.bf16.mxu0 0
        %4195 = vmatpush1.bf16.msra.mxu0 0
        %4196 = vmatprep.subr.bf16.mxu0 0
        %4197 = vmatpush1.bf16.msra.mxu0 0
        %4198 = vmatprep.subr.bf16.mxu0 0
        %4199 = vmatpush1.bf16.msra.mxu0 0
        %4200 = vmatprep.subr.bf16.mxu0 0
        %4201 = vmatpush1.bf16.msra.mxu0 0
        %4202 = vmatprep.subr.bf16.mxu0 0
        %4203 = vmatpush1.bf16.msra.mxu0 0
        %4204 = vmatprep.subr.bf16.mxu0 0
        %4205 = vmatpush1.bf16.msra.mxu0 0
        %4206 = vmatprep.subr.bf16.mxu0 0
        %4207 = vmatpush1.bf16.msra.mxu0 0
        %4208 = vmatprep.subr.bf16.mxu0 0
        %4209 = vmatpush1.bf16.msra.mxu0 0
        %4210 = vmatprep.subr.bf16.mxu0 0
        %4211 = vmatpush1.bf16.msra.mxu0 0
        %4212 = vmatprep.subr.bf16.mxu0 0
        %4213 = vmatpush1.bf16.msra.mxu0 0
        %4214 = vmatprep.mubr.bf16.mxu0 0
        %4215 = vmatmul.mubr.bf16.gmra.mrb[0].mxu0 %v4057
        %v4216 = vpop.f32.mrb[0].mxu0
        %v4217 = vadd.f32 %v4054, %v4216
        %v4218 = vpop.f32.mrb[0].mxu0
        %v4219 = vadd.f32 %v4054, %v4218
        %v4220 = vpop.f32.mrb[0].mxu0
        %v4221 = vpop.f32.mrb[0].mxu0
        %4222 = vdwg.mxu0
        %4223 = vmatprep.subr.bf16.mxu0 %v4023
        %4224 = vmatpush1.bf16.msra.mxu0 %v4022
        %4225 = vmatprep.subr.bf16.mxu0 %v4039
        %4226 = vmatpush1.bf16.msra.mxu0 %v4038
        %4227 = vmatprep.subr.bf16.mxu0 0
        %4228 = vmatpush1.bf16.msra.mxu0 0
        %4229 = vmatprep.subr.bf16.mxu0 0
        %4230 = vmatpush1.bf16.msra.mxu0 0
        %4231 = vmatprep.subr.bf16.mxu0 0
        %4232 = vmatpush1.bf16.msra.mxu0 0
        %4233 = vmatprep.subr.bf16.mxu0 0
        %4234 = vmatpush1.bf16.msra.mxu0 0
        %4235 = vmatprep.subr.bf16.mxu0 0
        %4236 = vmatpush1.bf16.msra.mxu0 0
        %4237 = vmatprep.subr.bf16.mxu0 0
        %4238 = vmatpush1.bf16.msra.mxu0 0
        %4239 = vmatprep.subr.bf16.mxu0 0
        %4240 = vmatpush1.bf16.msra.mxu0 0
        %4241 = vmatprep.subr.bf16.mxu0 0
        %4242 = vmatpush1.bf16.msra.mxu0 0
        %4243 = vmatprep.subr.bf16.mxu0 0
        %4244 = vmatpush1.bf16.msra.mxu0 0
        %4245 = vmatprep.subr.bf16.mxu0 0
        %4246 = vmatpush1.bf16.msra.mxu0 0
        %4247 = vmatprep.subr.bf16.mxu0 0
        %4248 = vmatpush1.bf16.msra.mxu0 0
        %4249 = vmatprep.subr.bf16.mxu0 0
        %4250 = vmatpush1.bf16.msra.mxu0 0
        %4251 = vmatprep.subr.bf16.mxu0 0
        %4252 = vmatpush1.bf16.msra.mxu0 0
        %4253 = vmatprep.subr.bf16.mxu0 0
        %4254 = vmatpush1.bf16.msra.mxu0 0
        %4255 = vmatprep.mubr.bf16.mxu0 0
        %4256 = vmatmul.mubr.bf16.gmra.mrb[0].mxu0 %v4057
        %v4257 = vpop.f32.mrb[0].mxu0
        %v4258 = vadd.f32 %v4054, %v4257
        %v4259 = vpop.f32.mrb[0].mxu0
        %v4260 = vadd.f32 %v4054, %v4259
        %v4261 = vpop.f32.mrb[0].mxu0
        %v4262 = vpop.f32.mrb[0].mxu0
        %4263 = vdwg.mxu0
        %4264 = vmatprep.subr.bf16.mxu0 %v4025
        %4265 = vmatpush1.bf16.msra.mxu0 %v4024
        %4266 = vmatprep.subr.bf16.mxu0 %v4041
        %4267 = vmatpush1.bf16.msra.mxu0 %v4040
        %4268 = vmatprep.subr.bf16.mxu0 0
        %4269 = vmatpush1.bf16.msra.mxu0 0
        %4270 = vmatprep.subr.bf16.mxu0 0
        %4271 = vmatpush1.bf16.msra.mxu0 0
        %4272 = vmatprep.subr.bf16.mxu0 0
        %4273 = vmatpush1.bf16.msra.mxu0 0
        %4274 = vmatprep.subr.bf16.mxu0 0
        %4275 = vmatpush1.bf16.msra.mxu0 0
        %4276 = vmatprep.subr.bf16.mxu0 0
        %4277 = vmatpush1.bf16.msra.mxu0 0
        %4278 = vmatprep.subr.bf16.mxu0 0
        %4279 = vmatpush1.bf16.msra.mxu0 0
        %4280 = vmatprep.subr.bf16.mxu0 0
        %4281 = vmatpush1.bf16.msra.mxu0 0
        %4282 = vmatprep.subr.bf16.mxu0 0
        %4283 = vmatpush1.bf16.msra.mxu0 0
        %4284 = vmatprep.subr.bf16.mxu0 0
        %4285 = vmatpush1.bf16.msra.mxu0 0
        %4286 = vmatprep.subr.bf16.mxu0 0
        %4287 = vmatpush1.bf16.msra.mxu0 0
        %4288 = vmatprep.subr.bf16.mxu0 0
        %4289 = vmatpush1.bf16.msra.mxu0 0
        %4290 = vmatprep.subr.bf16.mxu0 0
        %4291 = vmatpush1.bf16.msra.mxu0 0
        %4292 = vmatprep.subr.bf16.mxu0 0
        %4293 = vmatpush1.bf16.msra.mxu0 0
        %4294 = vmatprep.subr.bf16.mxu0 0
        %4295 = vmatpush1.bf16.msra.mxu0 0
        %4296 = vmatprep.mubr.bf16.mxu0 0
        %4297 = vmatmul.mubr.bf16.gmra.mrb[0].mxu0 %v4057
        %v4298 = vpop.f32.mrb[0].mxu0
        %v4299 = vadd.f32 %v4054, %v4298
        %v4300 = vpop.f32.mrb[0].mxu0
        %v4301 = vadd.f32 %v4054, %v4300
        %v4302 = vpop.f32.mrb[0].mxu0
        %v4303 = vpop.f32.mrb[0].mxu0
        %4304 = vdwg.mxu0
        %4305 = vmatprep.subr.bf16.mxu0 %v4027
        %4306 = vmatpush1.bf16.msra.mxu0 %v4026
        %4307 = vmatprep.subr.bf16.mxu0 %v4043
        %4308 = vmatpush1.bf16.msra.mxu0 %v4042
        %4309 = vmatprep.subr.bf16.mxu0 0
        %4310 = vmatpush1.bf16.msra.mxu0 0
        %4311 = vmatprep.subr.bf16.mxu0 0
        %4312 = vmatpush1.bf16.msra.mxu0 0
        %4313 = vmatprep.subr.bf16.mxu0 0
        %4314 = vmatpush1.bf16.msra.mxu0 0
        %4315 = vmatprep.subr.bf16.mxu0 0
        %4316 = vmatpush1.bf16.msra.mxu0 0
        %4317 = vmatprep.subr.bf16.mxu0 0
        %4318 = vmatpush1.bf16.msra.mxu0 0
        %4319 = vmatprep.subr.bf16.mxu0 0
        %4320 = vmatpush1.bf16.msra.mxu0 0
        %4321 = vmatprep.subr.bf16.mxu0 0
        %4322 = vmatpush1.bf16.msra.mxu0 0
        %4323 = vmatprep.subr.bf16.mxu0 0
        %4324 = vmatpush1.bf16.msra.mxu0 0
        %4325 = vmatprep.subr.bf16.mxu0 0
        %4326 = vmatpush1.bf16.msra.mxu0 0
        %4327 = vmatprep.subr.bf16.mxu0 0
        %4328 = vmatpush1.bf16.msra.mxu0 0
        %4329 = vmatprep.subr.bf16.mxu0 0
        %4330 = vmatpush1.bf16.msra.mxu0 0
        %4331 = vmatprep.subr.bf16.mxu0 0
        %4332 = vmatpush1.bf16.msra.mxu0 0
        %4333 = vmatprep.subr.bf16.mxu0 0
        %4334 = vmatpush1.bf16.msra.mxu0 0
        %4335 = vmatprep.subr.bf16.mxu0 0
        %4336 = vmatpush1.bf16.msra.mxu0 0
        %4337 = vmatprep.mubr.bf16.mxu0 0
        %4338 = vmatmul.mubr.bf16.gmra.mrb[0].mxu0 %v4057
        %v4339 = vpop.f32.mrb[0].mxu0
        %v4340 = vadd.f32 %v4054, %v4339
        %v4341 = vpop.f32.mrb[0].mxu0
        %v4342 = vadd.f32 %v4054, %v4341
        %v4343 = vpop.f32.mrb[0].mxu0
        %v4344 = vpop.f32.mrb[0].mxu0
        %4345 = vdwg.mxu0
        %4346 = vmatprep.subr.bf16.mxu0 %v4029
        %4347 = vmatpush1.bf16.msra.mxu0 %v4028
        %4348 = vmatprep.subr.bf16.mxu0 %v4045
        %4349 = vmatpush1.bf16.msra.mxu0 %v4044
        %4350 = vmatprep.subr.bf16.mxu0 0
        %4351 = vmatpush1.bf16.msra.mxu0 0
        %4352 = vmatprep.subr.bf16.mxu0 0
        %4353 = vmatpush1.bf16.msra.mxu0 0
        %4354 = vmatprep.subr.bf16.mxu0 0
        %4355 = vmatpush1.bf16.msra.mxu0 0
        %4356 = vmatprep.subr.bf16.mxu0 0
        %4357 = vmatpush1.bf16.msra.mxu0 0
        %4358 = vmatprep.subr.bf16.mxu0 0
        %4359 = vmatpush1.bf16.msra.mxu0 0
        %4360 = vmatprep.subr.bf16.mxu0 0
        %4361 = vmatpush1.bf16.msra.mxu0 0
        %4362 = vmatprep.subr.bf16.mxu0 0
        %4363 = vmatpush1.bf16.msra.mxu0 0
        %4364 = vmatprep.subr.bf16.mxu0 0
        %4365 = vmatpush1.bf16.msra.mxu0 0
        %4366 = vmatprep.subr.bf16.mxu0 0
        %4367 = vmatpush1.bf16.msra.mxu0 0
        %4368 = vmatprep.subr.bf16.mxu0 0
        %4369 = vmatpush1.bf16.msra.mxu0 0
        %4370 = vmatprep.subr.bf16.mxu0 0
        %4371 = vmatpush1.bf16.msra.mxu0 0
        %4372 = vmatprep.subr.bf16.mxu0 0
        %4373 = vmatpush1.bf16.msra.mxu0 0
        %4374 = vmatprep.subr.bf16.mxu0 0
        %4375 = vmatpush1.bf16.msra.mxu0 0
        %4376 = vmatprep.subr.bf16.mxu0 0
        %4377 = vmatpush1.bf16.msra.mxu0 0
        %4378 = vmatprep.mubr.bf16.mxu0 0
        %4379 = vmatmul.mubr.bf16.gmra.mrb[0].mxu0 %v4057
        %v4380 = vpop.f32.mrb[0].mxu0
        %v4381 = vadd.f32 %v4054, %v4380
        %v4382 = vpop.f32.mrb[0].mxu0
        %v4383 = vadd.f32 %v4054, %v4382
        %v4384 = vpop.f32.mrb[0].mxu0
        %v4385 = vpop.f32.mrb[0].mxu0
        %4386 = vdwg.mxu0
        %v4403 = vcombine.low %v4094, %v4096
        %v4404 = vcombine.low %v4135, %v4137
        %v4405 = vcombine.low %v4176, %v4178
        %v4406 = vcombine.low %v4217, %v4219
        %v4408 = vunpack.c.l.s4 1966171168
        %v4409 = vunpack.c.0.s8 %v4408
        %v4410 = vlaneseq
        %v4411 = vshrl.u32 %v4410, 7
        %v4412 = vsub.s32 %v4409, %v4411
        %v4413 = vrot.slane %v4403, %v4412
        %v4415 = vunpack.c.l.s4 1966171168
        %v4416 = vunpack.c.0.s8 %v4415
        %v4417 = vlaneseq
        %v4418 = vshrl.u32 %v4417, 7
        %v4419 = vsub.s32 %v4416, %v4418
        %v4420 = vrot.slane %v4404, %v4419
        %v4422 = vunpack.c.l.s4 1966171168
        %v4423 = vunpack.c.0.s8 %v4422
        %v4424 = vlaneseq
        %v4425 = vshrl.u32 %v4424, 7
        %v4426 = vsub.s32 %v4423, %v4425
        %v4427 = vrot.slane %v4405, %v4426
        %v4429 = vunpack.c.l.s4 1966171168
        %v4430 = vunpack.c.0.s8 %v4429
        %v4431 = vlaneseq
        %v4432 = vshrl.u32 %v4431, 7
        %v4433 = vsub.s32 %v4430, %v4432
        %v4434 = vrot.slane %v4406, %v4433
        %v4435 = vcombine.low %v4413, %v4420
        %v4436 = vcombine.low %v4427, %v4434
        %v4438 = vunpack.c.l.s4 1966171168
        %v4439 = vunpack.c.0.s8 %v4438
        %v4440 = vlaneseq
        %v4441 = vshrl.u32 %v4440, 7
        %v4442 = vsub.s32 %v4439, %v4441
        %v4443 = vrot.slane %v4435, %v4442
        %v4445 = vunpack.c.l.s4 1966171168
        %v4446 = vunpack.c.0.s8 %v4445
        %v4447 = vlaneseq
        %v4448 = vshrl.u32 %v4447, 7
        %v4449 = vsub.s32 %v4446, %v4448
        %v4450 = vrot.slane %v4436, %v4449
        %v4451 = vcombine.low %v4443, %v4450
        %v4452 = vcombine.low %v4258, %v4260
        %v4453 = vcombine.low %v4299, %v4301
        %v4454 = vcombine.low %v4340, %v4342
        %v4455 = vcombine.low %v4381, %v4383
        %v4457 = vunpack.c.l.s4 1966171168
        %v4458 = vunpack.c.0.s8 %v4457
        %v4459 = vlaneseq
        %v4460 = vshrl.u32 %v4459, 7
        %v4461 = vsub.s32 %v4458, %v4460
        %v4462 = vrot.slane %v4452, %v4461
        %v4464 = vunpack.c.l.s4 1966171168
        %v4465 = vunpack.c.0.s8 %v4464
        %v4466 = vlaneseq
        %v4467 = vshrl.u32 %v4466, 7
        %v4468 = vsub.s32 %v4465, %v4467
        %v4469 = vrot.slane %v4453, %v4468
        %v4471 = vunpack.c.l.s4 1966171168
        %v4472 = vunpack.c.0.s8 %v4471
        %v4473 = vlaneseq
        %v4474 = vshrl.u32 %v4473, 7
        %v4475 = vsub.s32 %v4472, %v4474
        %v4476 = vrot.slane %v4454, %v4475
        %v4478 = vunpack.c.l.s4 1966171168
        %v4479 = vunpack.c.0.s8 %v4478
        %v4480 = vlaneseq
        %v4481 = vshrl.u32 %v4480, 7
        %v4482 = vsub.s32 %v4479, %v4481
        %v4483 = vrot.slane %v4455, %v4482
        %v4484 = vcombine.low %v4462, %v4469
        %v4485 = vcombine.low %v4476, %v4483
        %v4487 = vunpack.c.l.s4 1966171168
        %v4488 = vunpack.c.0.s8 %v4487
        %v4489 = vlaneseq
        %v4490 = vshrl.u32 %v4489, 7
        %v4491 = vsub.s32 %v4488, %v4490
        %v4492 = vrot.slane %v4484, %v4491
        %v4494 = vunpack.c.l.s4 1966171168
        %v4495 = vunpack.c.0.s8 %v4494
        %v4496 = vlaneseq
        %v4497 = vshrl.u32 %v4496, 7
        %v4498 = vsub.s32 %v4495, %v4497
        %v4499 = vrot.slane %v4485, %v4498
        %v4500 = vcombine.low %v4492, %v4499
        %4503 = vst [vmem:[%s430] sm:$0xff] %v4451
        %4504 = vst [vmem:[%s430 + $0x8] sm:$0xff] %v4500
        %s4505 = sand.u32 %s273, 1
        %s4506 = scalar_lea.sflag [#allocation5], %s4505
        %s4507 = sand.u32 %s273, 1
        %s4508 = smul.addr %s4507, 16
        %s4509 = scalar_lea.vmem [#allocation6], %s4508
        %s4510 = sand.u32 %s301, 1
        %s4511 = scalar_lea.sflag [#allocation8], %s4510
        %s4512 = sand.u32 %s301, 1
        %s4513 = smul.addr %s4512, 512
        %s4514 = scalar_lea.vmem [#allocation7], %s4513
        // Predicated region
        $region65: #{tpu_custom_call.1} parent=59 // pred_check
          %p4515 = pneg %p283
        $region66: #{tpu_custom_call.1} parent=59 // pred_check_branch
          %4517 = sbr.rel (%p4515) target = $region68
        $region67: #{tpu_custom_call.1} parent=59 // pred_region
          %s4518 = smul.u32 16, %s39
          %s4520 = ssub.s32 256, 256
          %4521 = vsyncadd %s4506, %s4520
          %s4522 = smul.addr %s38, 32
          %s4523 = sadd.s32 %s4518, %s4522
          %s4524 = smul.addr %s4523, 16
          %s4525 = scalar_lea.hbm %s10, %s4524
          %s4527 = sshll.u32 %s4509, 4
          %s4528 = int_to_ptr.vmem [resolvable:$true] %s4527
          %4530 = dma.vmem_to_hbm [thread:$0]  %s4528, 256, %s4525, %s4506
        $region68: #{tpu_custom_call.1} parent=59 // pred_fallthru
          _
        // Predicated region
        $region69: #{tpu_custom_call.1} parent=59 // pred_check
          %p4531 = pneg %p311
        $region70: #{tpu_custom_call.1} parent=59 // pred_check_branch
          %4533 = sbr.rel (%p4531) target = $region72
        $region71: #{tpu_custom_call.1} parent=59 // pred_region
          %s4534 = smul.u32 16, %s39
          %s4536 = ssub.s32 8192, 8192
          %4537 = vsyncadd %s4511, %s4536
          %s4538 = smul.addr %s38, 256
          %s4539 = sadd.s32 %s4534, %s4538
          %s4540 = smul.addr %s4539, 64
          %s4541 = scalar_lea.hbm %s11, %s4540
          %s4542 = sshll.u32 %s4514, 4
          %s4543 = int_to_ptr.vmem [resolvable:$true] %s4542
          %4548 = dma.vmem_to_hbm [thread:$0]  %s4543, 8192, %s4541, %s4511, 1024, 2048, 64
        $region72: #{tpu_custom_call.1} parent=59 // pred_fallthru
          _
      $region60: #{tpu_custom_call.1} parent=5 // pred_fallthru
        _
      %p4549 = scmp.le.s32.totalorder 2, %s29
      // Predicated region
      $region73: #{tpu_custom_call.1} parent=5 // pred_check
        %p4550 = pneg %p4549
      $region74: #{tpu_custom_call.1} parent=5 // pred_check_branch
        %4552 = sbr.rel (%p4550) target = $region76
      $region75: #{tpu_custom_call.1} parent=5 // pred_region
        %s4553 = ssub.s32 %s29, 2
        // Predicated region
        $region77: #{tpu_custom_call.1} parent=75 // pred_check
          %p4554 = pneg %p289
        $region78: #{tpu_custom_call.1} parent=75 // pred_check_branch
          %4556 = sbr.rel (%p4554) target = $region80
        $region79: #{tpu_custom_call.1} parent=75 // pred_region
          %s4557 = sand.u32 %s274, 1
          %s4558 = scalar_lea.sflag [#allocation5], %s4557
          %s4559 = sand.u32 %s274, 1
          %s4560 = smul.addr %s4559, 16
          %s4561 = scalar_lea.vmem [#allocation6], %s4560
          %4562 = dma.done %s4558, 256
        $region80: #{tpu_custom_call.1} parent=75 // pred_fallthru
          _
        // Predicated region
        $region81: #{tpu_custom_call.1} parent=75 // pred_check
          %p4563 = pneg %p317
        $region82: #{tpu_custom_call.1} parent=75 // pred_check_branch
          %4565 = sbr.rel (%p4563) target = $region84
        $region83: #{tpu_custom_call.1} parent=75 // pred_region
          %s4566 = sand.u32 %s302, 1
          %s4567 = scalar_lea.sflag [#allocation8], %s4566
          %s4568 = sand.u32 %s302, 1
          %s4569 = smul.addr %s4568, 512
          %s4570 = scalar_lea.vmem [#allocation7], %s4569
          %4571 = dma.done %s4567, 8192
        $region84: #{tpu_custom_call.1} parent=75 // pred_fallthru
          _
      $region76: #{tpu_custom_call.1} parent=5 // pred_fallthru
        _
    $region6: #{tpu_custom_call.1} parent=1 // loop_footer
      %s33 = sadd.s32 1, %s29
    $region7: #{tpu_custom_call.1} parent=1 // loop_footer_branch
      %28 = sbr.rel target = $region3
    $region8: #{tpu_custom_call.1} parent=1 // loop_exit
      _
    %4572 = vsyncpa [#allocation4], 1
    %s4573 = scalar_lea.sflag [#allocation4], 1
    %4574 = vsyncpa %s4573, 1
    %4575 = vsyncpa [#allocation5], 1
    %s4576 = scalar_lea.sflag [#allocation5], 1
    %4577 = vsyncpa %s4576, 1
    %4578 = vsyncpa [#allocation8], 1
    %s4579 = scalar_lea.sflag [#allocation8], 1
    %4580 = vsyncpa %s4579, 1

</llo_original>
